<compile_context>
chip_gen: v6e
topology: v6e:2x2x1
jax: 0.10.0
libtpu: 0.0.40
codegen_flags: <defaults>
</compile_context>

<pallas_src>
import functools

import jax
import jax.numpy as jnp
from jax.experimental import pallas as pl
from jax.experimental.pallas import tpu as pltpu

NEG_SLOPE = 0.01   # nn.LeakyReLU default
IN_EPS = 1e-5      # nn.InstanceNorm2d default


# ---------------------------------------------------------------------------
# Trace-time constant builders (tiny; computed once per call)
# ---------------------------------------------------------------------------
def upsample_matrix(n_in, n_out):
    """(n_out, n_in) interpolation matrix: bilinear, align_corners=True."""
    if n_in == 1:
        return jnp.ones((n_out, 1), jnp.float32)
    s = jnp.arange(n_out, dtype=jnp.float32) * (n_in - 1) / (n_out - 1)
    i0 = jnp.clip(jnp.floor(s).astype(jnp.int32), 0, n_in - 2)
    frac = s - i0.astype(jnp.float32)
    rows = jnp.arange(n_out)
    A = jnp.zeros((n_out, n_in), jnp.float32)
    A = A.at[rows, i0].add(1.0 - frac)
    A = A.at[rows, i0 + 1].add(frac)
    return A


def conv_border_masks(H, W):
    """(9, H*W) f32 validity masks for the 9 taps of a 3x3 conv, padding=1."""
    yy, xx = jnp.meshgrid(jnp.arange(H), jnp.arange(W), indexing="ij")
    rows = []
    for dy in (-1, 0, 1):
        for dx in (-1, 0, 1):
            valid = ((yy + dy >= 0) & (yy + dy < H) &
                     (xx + dx >= 0) & (xx + dx < W))
            rows.append(valid.reshape(H * W))
    return jnp.stack(rows, axis=0).astype(jnp.float32)


def weights_to_mat(w):
    """PyTorch conv weight (O, I, 3, 3) -> (O, 9*I), tap-major / channel-minor."""
    O, I = w.shape[0], w.shape[1]
    return jnp.transpose(w, (0, 2, 3, 1)).reshape(O, 9 * I).astype(jnp.float32)


# ---------------------------------------------------------------------------
# In-kernel helpers (operate on VMEM-resident values)
# ---------------------------------------------------------------------------
def _conv3x3_im2col(x, w_ref, mask_ref, W, S):
    """3x3 conv, padding=1, on a (Cin, S=H*W) tile via one im2col matmul.

    Shifted images via pltpu.roll (XLU); a SINGLE full-patch mask multiply
    (mask pre-broadcast to (9*Cin, S) in the wrapper) zeros the wrapped
    borders; bf16 MXU operands, f32 accumulation.
    """
    taps = []
    for dy in (-1, 0, 1):
        for dx in (-1, 0, 1):
            d = dy * W + dx
            taps.append(x if d == 0 else pltpu.roll(x, (-d) % S, 1))
    patches = jnp.concatenate(taps, axis=0) * mask_ref[...]      # (9*Cin, S)
    return jnp.dot(w_ref[...], patches.astype(jnp.bfloat16),
                   preferred_element_type=jnp.float32)


def _conv3x3_tap_accum(x, w_ref, mask_ref, W, S, Cin):
    """3x3 conv, padding=1, on (Cin, S) accumulating 9 per-tap matmuls.

    Avoids materialising the (9*Cin, S) patch matrix (would exceed the vreg
    file at S=1024); per-tap live set is ~3 tap-sized tiles.  w_ref is
    (9, Cout, Cin) bf16, mask_ref is (9*Cin, S) f32 (pre-broadcast).
    """
    acc = None
    t = 0
    for dy in (-1, 0, 1):
        for dx in (-1, 0, 1):
            d = dy * W + dx
            if d == 0:
                masked = x                                        # center tap: mask == 1
            else:
                shifted = pltpu.roll(x, (-d) % S, 1)
                masked = shifted * mask_ref[t * Cin:(t + 1) * Cin, :]
            part = jnp.dot(w_ref[t], masked.astype(jnp.bfloat16),
                           preferred_element_type=jnp.float32)
            acc = part if acc is None else acc + part
            t += 1
    return acc


def _instnorm_leakyrelu(y):
    """InstanceNorm2d(affine=False) + LeakyReLU(0.01) on (C, H*W), f32.

    Fused single-pass reduction: sum and sum(y^2) together,
    var = E[y^2] - mean^2 (clamped >= 0).
    """
    inv_n = 1.0 / y.shape[1]
    s = jnp.sum(y, axis=1, keepdims=True)
    s2 = jnp.sum(y * y, axis=1, keepdims=True)
    mean = s * inv_n
    var = jnp.maximum(s2 * inv_n - mean * mean, 0.0)
    y = (y - mean) * jax.lax.rsqrt(var + IN_EPS)
    return jnp.where(y >= 0, y, NEG_SLOPE * y)


# ---------------------------------------------------------------------------
# Fused Up kernel: one grid step = one batch element, everything in VMEM
# ---------------------------------------------------------------------------
def _up_fused_kernel(x1_ref, x2_ref, w1_ref, w2_ref, w3_ref, b3_ref,
                     u_ref, m1_ref, m2_ref, m3_ref, o_ref, *, H, W):
    S1 = H * W
    S2 = 4 * H * W
    W2 = 2 * W
    x2c = x2_ref.shape[1]
    C2 = w3_ref.shape[1]
    C1 = w3_ref.shape[2]

    # x2 channel passthrough: issued first so the store can retire while the
    # conv pipeline is still running (lane-dense, S2 = 4*H*W).
    o_ref[0, 0:x2c, :] = x2_ref[0]

    # DoubleConv (conv biases omitted: exactly cancelled by InstanceNorm)
    x1 = x1_ref[0]                                                # (Cpad, S1)
    y = _instnorm_leakyrelu(_conv3x3_im2col(x1, w1_ref, m1_ref, W, S1))
    y = _instnorm_leakyrelu(_conv3x3_im2col(y, w2_ref, m2_ref, W, S1))

    # bilinear 2x upsample, align_corners=True: one dense matmul with the
    # precomputed separable-product matrix U = kron(A_h, A_w)^T (bf16).
    up = jnp.dot(y.astype(jnp.bfloat16), u_ref[...],
                 preferred_element_type=jnp.float32)              # (C1, S2)

    # final 3x3 conv (bias kept; no norm / activation), per-tap accumulation
    y3 = _conv3x3_tap_accum(up, w3_ref, m3_ref, W2, S2, C1) + b3_ref[...]

    o_ref[0, x2c:x2c + C2, :] = y3


# ---------------------------------------------------------------------------
# Parameters (deterministic synthetic init, PyTorch conv weight layout)
# ---------------------------------------------------------------------------
def init_params(key, in_ch, out_ch1, out_ch2):
    keys = jax.random.split(key, 6)

    def conv_init(kw, kb, cin, cout):
        w = 0.1 * jax.random.normal(kw, (cout, cin, 3, 3), jnp.float32)
        b = 0.1 * jax.random.normal(kb, (cout,), jnp.float32)
        return w, b

    w1, b1 = conv_init(keys[0], keys[1], in_ch, out_ch1)     # DoubleConv conv1
    w2, b2 = conv_init(keys[2], keys[3], out_ch1, out_ch1)   # DoubleConv conv2
    w3, b3 = conv_init(keys[4], keys[5], out_ch1, out_ch2)   # conv after upsample
    return dict(w1=w1, b1=b1, w2=w2, b2=b2, w3=w3, b3=b3)


# ---------------------------------------------------------------------------
# Up.forward(x1, x2) — x1, x2 given in NCHW like the PyTorch module
# ---------------------------------------------------------------------------
def up_forward(params, x1_nchw, x2_nchw):
    B, Cin, H, W = x1_nchw.shape
    _, x2c, H2, W2 = x2_nchw.shape
    assert H2 == 2 * H and W2 == 2 * W, "x2 must have 2x the spatial size of x1"
    C1 = params["w1"].shape[0]
    C2 = params["w3"].shape[0]
    S1, S2 = H * W, H2 * W2
    Cpad = -(-Cin // 8) * 8     # pad conv1 input channels to a full sublane group

    # NCHW -> (B, C, H*W): pure reshape; flat spatial lands on the lane axis.
    x1f = x1_nchw.reshape(B, Cin, S1).astype(jnp.float32)
    if Cpad != Cin:
        x1f = jnp.pad(x1f, ((0, 0), (0, Cpad - Cin), (0, 0)))
    x2f = x2_nchw.reshape(B, x2c, S2).astype(jnp.float32)

    # weight repacking (bf16 MXU operands) + trace-time constants
    w1 = params["w1"]
    if Cpad != Cin:
        w1 = jnp.pad(w1, ((0, 0), (0, Cpad - Cin), (0, 0), (0, 0)))
    w1m = weights_to_mat(w1).astype(jnp.bfloat16)                 # (C1, 9*Cpad)
    w2m = weights_to_mat(params["w2"]).astype(jnp.bfloat16)       # (C1, 9*C1)
    # conv3 weights tap-major 3-D: (9, C2, C1), one aligned (C2, C1) slab per tap
    w3t = jnp.transpose(params["w3"], (2, 3, 0, 1)).reshape(9, C2, C1)
    w3t = w3t.astype(jnp.bfloat16)
    b3 = params["b3"].reshape(C2, 1).astype(jnp.float32)

    A_h = upsample_matrix(H, H2)                                  # (2H, H)
    A_w = upsample_matrix(W, W2)                                  # (2W, W)
    U = jnp.kron(A_h, A_w).T.astype(jnp.bfloat16)                 # (S1, S2)

    # pre-broadcast border masks: one full-patch multiply per conv in-kernel
    m1 = conv_border_masks(H, W)                                  # (9, S1)
    m3 = conv_border_masks(H2, W2)                                # (9, S2)
    m1_full = jnp.repeat(m1, Cpad, axis=0)                        # (9*Cpad, S1)
    m2_full = jnp.repeat(m1, C1, axis=0)                          # (9*C1, S1)
    m3_full = jnp.repeat(m3, C1, axis=0)                          # (9*C1, S2)

    kernel = functools.partial(_up_fused_kernel, H=H, W=W)
    out_flat = pl.pallas_call(
        kernel,
        out_shape=jax.ShapeDtypeStruct((B, x2c + C2, S2), jnp.float32),
        grid=(B,),
        in_specs=[
            pl.BlockSpec((1, Cpad, S1), lambda b: (b, 0, 0)),
            pl.BlockSpec((1, x2c, S2), lambda b: (b, 0, 0)),
            pl.BlockSpec((C1, 9 * Cpad), lambda b: (0, 0)),
            pl.BlockSpec((C1, 9 * C1), lambda b: (0, 0)),
            pl.BlockSpec((9, C2, C1), lambda b: (0, 0, 0)),
            pl.BlockSpec((C2, 1), lambda b: (0, 0)),
            pl.BlockSpec((S1, S2), lambda b: (0, 0)),
            pl.BlockSpec((9 * Cpad, S1), lambda b: (0, 0)),
            pl.BlockSpec((9 * C1, S1), lambda b: (0, 0)),
            pl.BlockSpec((9 * C1, S2), lambda b: (0, 0)),
        ],
        out_specs=pl.BlockSpec((1, x2c + C2, S2), lambda b: (b, 0, 0)),
        compiler_params=pltpu.CompilerParams(
            dimension_semantics=("parallel",)),
    )(x1f, x2f, w1m, w2m, w3t, b3, U, m1_full, m2_full, m3_full)

    # (B, C, 4*H*W) -> NCHW: pure reshape again.
    return out_flat.reshape(B, x2c + C2, H2, W2)


# ---------------------------------------------------------------------------
# Pure-JAX (XLA, full f32) reference of the PyTorch module
# ---------------------------------------------------------------------------
def up_reference(params, x1_nchw, x2_nchw):
    def conv(x, w, b):
        y = jax.lax.conv_general_dilated(
            x, w, window_strides=(1, 1), padding=((1, 1), (1, 1)),
            dimension_numbers=("NCHW", "OIHW", "NCHW"),
            precision=jax.lax.Precision.HIGHEST)
        return y + b[None, :, None, None]

    def in_act(y):
        mean = jnp.mean(y, axis=(2, 3), keepdims=True)
        var = jnp.mean((y - mean) ** 2, axis=(2, 3), keepdims=True)
        y = (y - mean) * jax.lax.rsqrt(var + IN_EPS)
        return jnp.where(y >= 0, y, NEG_SLOPE * y)

    H, W = x1_nchw.shape[2], x1_nchw.shape[3]
    y = in_act(conv(x1_nchw.astype(jnp.float32), params["w1"], params["b1"]))
    y = in_act(conv(y, params["w2"], params["b2"]))
    A_h = upsample_matrix(H, 2 * H)
    A_w = upsample_matrix(W, 2 * W)
    y = jnp.einsum("ih,bchw->bciw", A_h, y, precision=jax.lax.Precision.HIGHEST)
    y = jnp.einsum("jw,bciw->bcij", A_w, y, precision=jax.lax.Precision.HIGHEST)
    y = conv(y, params["w3"], params["b3"])
    return jnp.concatenate([x2_nchw.astype(jnp.float32), y], axis=1)


if __name__ == "__main__":
    B = 2
    in_ch, out_ch1, out_ch2 = 4, 8, 8
    H = W = 16
    x2_ch = 4

    key = jax.random.PRNGKey(0)
    k_p, k_x1, k_x2 = jax.random.split(key, 3)
    params = init_params(k_p, in_ch, out_ch1, out_ch2)
    x1 = jax.random.normal(k_x1, (B, in_ch, H, W), jnp.float32)
    x2 = jax.random.normal(k_x2, (B, x2_ch, 2 * H, 2 * W), jnp.float32)

    out = jax.block_until_ready(jax.jit(up_forward)(params, x1, x2))
    assert out.shape == (B, x2_ch + out_ch2, 2 * H, 2 * W), out.shape
    assert bool(jnp.all(jnp.isfinite(out)))

    # Correctness check against the full-f32 XLA reference.  The kernel uses
    # bf16 MXU operands (per perf review), so ~1e-2-scale deviations are
    # expected; 1e-1 still catches any tap / shift / weight-ordering mistake
    # (those produce O(1) errors).
    ref = jax.block_until_ready(jax.jit(up_reference)(params, x1, x2))
    err = float(jnp.max(jnp.abs(out - ref)))
    assert err < 1e-1, f"max abs error vs reference: {err}"

    print("KERNEL_OK")
</pallas_src>

<mosaic_0001>
module attributes {stable_mosaic.version = 11 : i64} {
  func.func private @main(%arg0: i32) attributes {dimension_semantics = [#tpu.dimension_semantics<core_parallel>], iteration_bounds = array<i64: 2>, tpu.core_type = #tpu.core_type<sc_scalar_subcore>, window_params = []} {
    return
  }
}

module attributes {stable_mosaic.version = 11 : i64} {
  func.func private @main(%arg0: i32) attributes {dimension_semantics = [#tpu.dimension_semantics<core_parallel>], iteration_bounds = array<i64: 2>, tpu.core_type = #tpu.core_type<sc_scalar_subcore>, window_params = []} {
    return
  }
}

module attributes {stable_mosaic.version = 11 : i64} {
  func.func @_up_fused_kernel(%arg0: i32, %arg1: memref<1x8x256xf32, #tpu.memory_space<vmem>>, %arg2: memref<1x4x1024xf32, #tpu.memory_space<vmem>>, %arg3: memref<8x72xbf16, #tpu.memory_space<vmem>>, %arg4: memref<8x72xbf16, #tpu.memory_space<vmem>>, %arg5: memref<9x8x8xbf16, #tpu.memory_space<vmem>>, %arg6: memref<8x1xf32, #tpu.memory_space<vmem>>, %arg7: memref<256x1024xbf16, #tpu.memory_space<vmem>>, %arg8: memref<72x256xf32, #tpu.memory_space<vmem>>, %arg9: memref<72x256xf32, #tpu.memory_space<vmem>>, %arg10: memref<72x1024xf32, #tpu.memory_space<vmem>>, %arg11: memref<1x12x1024xf32, #tpu.memory_space<vmem>>) attributes {dimension_semantics = [#tpu.dimension_semantics<parallel>], iteration_bounds = array<i64: 2>, scalar_prefetch = 0 : i64, scratch_operands = 0 : i64, tpu.core_type = #tpu.core_type<tc>, window_params = [{transform_indices = @transform_0, window_bounds = array<i64: 1, 8, 256>}, {transform_indices = @transform_1, window_bounds = array<i64: 1, 4, 1024>}, {pipeline_mode = #tpu.pipeline_mode<synchronous>, transform_indices = @transform_2, window_bounds = array<i64: 8, 72>}, {pipeline_mode = #tpu.pipeline_mode<synchronous>, transform_indices = @transform_3, window_bounds = array<i64: 8, 72>}, {pipeline_mode = #tpu.pipeline_mode<synchronous>, transform_indices = @transform_4, window_bounds = array<i64: 9, 8, 8>}, {pipeline_mode = #tpu.pipeline_mode<synchronous>, transform_indices = @transform_5, window_bounds = array<i64: 8, 1>}, {pipeline_mode = #tpu.pipeline_mode<synchronous>, transform_indices = @transform_6, window_bounds = array<i64: 256, 1024>}, {pipeline_mode = #tpu.pipeline_mode<synchronous>, transform_indices = @transform_7, window_bounds = array<i64: 72, 256>}, {pipeline_mode = #tpu.pipeline_mode<synchronous>, transform_indices = @transform_8, window_bounds = array<i64: 72, 256>}, {pipeline_mode = #tpu.pipeline_mode<synchronous>, transform_indices = @transform_9, window_bounds = array<i64: 72, 1024>}, {transform_indices = @transform_10, window_bounds = array<i64: 1, 12, 1024>}]} {
    %c0 = arith.constant 0 : index
    %c0_0 = arith.constant 0 : index
    %c0_1 = arith.constant 0 : index
    %0 = vector.load %arg2[%c0, %c0_0, %c0_1] : memref<1x4x1024xf32, #tpu.memory_space<vmem>>, vector<1x4x1024xf32>
    %1 = vector.shape_cast %0 : vector<1x4x1024xf32> to vector<4x1024xf32>
    %c0_2 = arith.constant 0 : index
    %c0_3 = arith.constant 0 : index
    %c0_4 = arith.constant 0 : index
    %2 = vector.load %arg11[%c0_2, %c0_3, %c0_4] : memref<1x12x1024xf32, #tpu.memory_space<vmem>>, vector<1x4x1024xf32>
    %3 = vector.shape_cast %2 : vector<1x4x1024xf32> to vector<4x1024xf32>
    %4 = vector.shape_cast %1 : vector<4x1024xf32> to vector<1x4x1024xf32>
    tpu.vector_store %arg11[%c0_2, %c0_3, %c0_4], %4 {strides = array<i32>} : memref<1x12x1024xf32, #tpu.memory_space<vmem>>, vector<1x4x1024xf32>,
    %c0_5 = arith.constant 0 : index
    %c0_6 = arith.constant 0 : index
    %c0_7 = arith.constant 0 : index
    %5 = vector.load %arg1[%c0_5, %c0_6, %c0_7] : memref<1x8x256xf32, #tpu.memory_space<vmem>>, vector<1x8x256xf32>
    %6 = vector.shape_cast %5 : vector<1x8x256xf32> to vector<8x256xf32>
    %c17_i32 = arith.constant 17 : i32
    %7 = tpu.dynamic_rotate %6 by %c17_i32 dim 1 : vector<8x256xf32>, i32 -> vector<8x256xf32>
    %c16_i32 = arith.constant 16 : i32
    %8 = tpu.dynamic_rotate %6 by %c16_i32 dim 1 : vector<8x256xf32>, i32 -> vector<8x256xf32>
    %c15_i32 = arith.constant 15 : i32
    %9 = tpu.dynamic_rotate %6 by %c15_i32 dim 1 : vector<8x256xf32>, i32 -> vector<8x256xf32>
    %c1_i32 = arith.constant 1 : i32
    %10 = tpu.dynamic_rotate %6 by %c1_i32 dim 1 : vector<8x256xf32>, i32 -> vector<8x256xf32>
    %c255_i32 = arith.constant 255 : i32
    %11 = tpu.dynamic_rotate %6 by %c255_i32 dim 1 : vector<8x256xf32>, i32 -> vector<8x256xf32>
    %c241_i32 = arith.constant 241 : i32
    %12 = tpu.dynamic_rotate %6 by %c241_i32 dim 1 : vector<8x256xf32>, i32 -> vector<8x256xf32>
    %c240_i32 = arith.constant 240 : i32
    %13 = tpu.dynamic_rotate %6 by %c240_i32 dim 1 : vector<8x256xf32>, i32 -> vector<8x256xf32>
    %c239_i32 = arith.constant 239 : i32
    %14 = tpu.dynamic_rotate %6 by %c239_i32 dim 1 : vector<8x256xf32>, i32 -> vector<8x256xf32>
    %15 = tpu.concatenate %7, %8, %9, %10, %6, %11, %12, %13, %14 in 0 : vector<8x256xf32>, vector<8x256xf32>, vector<8x256xf32>, vector<8x256xf32>, vector<8x256xf32>, vector<8x256xf32>, vector<8x256xf32>, vector<8x256xf32>, vector<8x256xf32> -> vector<72x256xf32>
    %c0_8 = arith.constant 0 : index
    %c0_9 = arith.constant 0 : index
    %16 = vector.load %arg8[%c0_8, %c0_9] : memref<72x256xf32, #tpu.memory_space<vmem>>, vector<72x256xf32>
    %17 = arith.mulf %15, %16 : vector<72x256xf32>
    %c0_10 = arith.constant 0 : index
    %c0_11 = arith.constant 0 : index
    %18 = vector.load %arg3[%c0_10, %c0_11] : memref<8x72xbf16, #tpu.memory_space<vmem>>, vector<8x72xbf16>
    %19 = arith.truncf %17 : vector<72x256xf32> to vector<72x256xbf16>
    %cst = arith.constant dense<0.000000e+00> : vector<8x256xf32>
    %20 = tpu.matmul %18, %19, %cst {dimension_numbers = #tpu.dot_dimension_numbers<[1], [0], [0], [1], [0, 0, 1, 1], [], []>} : vector<8x72xbf16>, vector<72x256xbf16>, vector<8x256xf32> -> vector<8x256xf32>
    %cst_12 = arith.constant dense<0.000000e+00> : vector<8xf32>
    %21 = vector.multi_reduction <add>, %20, %cst_12 [1] : vector<8x256xf32> to vector<8xf32>
    %22 = vector.shape_cast %21 : vector<8xf32> to vector<8x1xf32>
    %23 = arith.mulf %20, %20 : vector<8x256xf32>
    %cst_13 = arith.constant dense<0.000000e+00> : vector<8xf32>
    %24 = vector.multi_reduction <add>, %23, %cst_13 [1] : vector<8x256xf32> to vector<8xf32>
    %25 = vector.shape_cast %24 : vector<8xf32> to vector<8x1xf32>
    %cst_14 = arith.constant 3.906250e-03 : f32
    %26 = vector.broadcast %cst_14 : f32 to vector<8x1xf32>
    %27 = arith.mulf %22, %26 : vector<8x1xf32>
    %cst_15 = arith.constant 3.906250e-03 : f32
    %28 = vector.broadcast %cst_15 : f32 to vector<8x1xf32>
    %29 = arith.mulf %25, %28 : vector<8x1xf32>
    %30 = arith.mulf %27, %27 : vector<8x1xf32>
    %31 = arith.subf %29, %30 : vector<8x1xf32>
    %cst_16 = arith.constant 0.000000e+00 : f32
    %32 = vector.broadcast %cst_16 : f32 to vector<8x1xf32>
    %33 = arith.maximumf %31, %32 : vector<8x1xf32>
    %34 = vector.broadcast %27 : vector<8x1xf32> to vector<8x256xf32>
    %35 = arith.subf %20, %34 : vector<8x256xf32>
    %cst_17 = arith.constant 9.99999974E-6 : f32
    %36 = vector.broadcast %cst_17 : f32 to vector<8x1xf32>
    %37 = arith.addf %33, %36 : vector<8x1xf32>
    %38 = math.rsqrt %37 : vector<8x1xf32>
    %39 = vector.broadcast %38 : vector<8x1xf32> to vector<8x256xf32>
    %40 = arith.mulf %35, %39 : vector<8x256xf32>
    %cst_18 = arith.constant 0.000000e+00 : f32
    %41 = vector.broadcast %cst_18 : f32 to vector<8x256xf32>
    %42 = arith.cmpf oge, %40, %41 : vector<8x256xf32>
    %cst_19 = arith.constant 0.00999999977 : f32
    %43 = vector.broadcast %cst_19 : f32 to vector<8x256xf32>
    %44 = arith.mulf %43, %40 : vector<8x256xf32>
    %45 = arith.select %42, %40, %44 : vector<8x256xi1>, vector<8x256xf32>
    %c17_i32_20 = arith.constant 17 : i32
    %46 = tpu.dynamic_rotate %45 by %c17_i32_20 dim 1 : vector<8x256xf32>, i32 -> vector<8x256xf32>
    %c16_i32_21 = arith.constant 16 : i32
    %47 = tpu.dynamic_rotate %45 by %c16_i32_21 dim 1 : vector<8x256xf32>, i32 -> vector<8x256xf32>
    %c15_i32_22 = arith.constant 15 : i32
    %48 = tpu.dynamic_rotate %45 by %c15_i32_22 dim 1 : vector<8x256xf32>, i32 -> vector<8x256xf32>
    %c1_i32_23 = arith.constant 1 : i32
    %49 = tpu.dynamic_rotate %45 by %c1_i32_23 dim 1 : vector<8x256xf32>, i32 -> vector<8x256xf32>
    %c255_i32_24 = arith.constant 255 : i32
    %50 = tpu.dynamic_rotate %45 by %c255_i32_24 dim 1 : vector<8x256xf32>, i32 -> vector<8x256xf32>
    %c241_i32_25 = arith.constant 241 : i32
    %51 = tpu.dynamic_rotate %45 by %c241_i32_25 dim 1 : vector<8x256xf32>, i32 -> vector<8x256xf32>
    %c240_i32_26 = arith.constant 240 : i32
    %52 = tpu.dynamic_rotate %45 by %c240_i32_26 dim 1 : vector<8x256xf32>, i32 -> vector<8x256xf32>
    %c239_i32_27 = arith.constant 239 : i32
    %53 = tpu.dynamic_rotate %45 by %c239_i32_27 dim 1 : vector<8x256xf32>, i32 -> vector<8x256xf32>
    %54 = tpu.concatenate %46, %47, %48, %49, %45, %50, %51, %52, %53 in 0 : vector<8x256xf32>, vector<8x256xf32>, vector<8x256xf32>, vector<8x256xf32>, vector<8x256xf32>, vector<8x256xf32>, vector<8x256xf32>, vector<8x256xf32>, vector<8x256xf32> -> vector<72x256xf32>
    %c0_28 = arith.constant 0 : index
    %c0_29 = arith.constant 0 : index
    %55 = vector.load %arg9[%c0_28, %c0_29] : memref<72x256xf32, #tpu.memory_space<vmem>>, vector<72x256xf32>
    %56 = arith.mulf %54, %55 : vector<72x256xf32>
    %c0_30 = arith.constant 0 : index
    %c0_31 = arith.constant 0 : index
    %57 = vector.load %arg4[%c0_30, %c0_31] : memref<8x72xbf16, #tpu.memory_space<vmem>>, vector<8x72xbf16>
    %58 = arith.truncf %56 : vector<72x256xf32> to vector<72x256xbf16>
    %cst_32 = arith.constant dense<0.000000e+00> : vector<8x256xf32>
    %59 = tpu.matmul %57, %58, %cst_32 {dimension_numbers = #tpu.dot_dimension_numbers<[1], [0], [0], [1], [0, 0, 1, 1], [], []>} : vector<8x72xbf16>, vector<72x256xbf16>, vector<8x256xf32> -> vector<8x256xf32>
    %cst_33 = arith.constant dense<0.000000e+00> : vector<8xf32>
    %60 = vector.multi_reduction <add>, %59, %cst_33 [1] : vector<8x256xf32> to vector<8xf32>
    %61 = vector.shape_cast %60 : vector<8xf32> to vector<8x1xf32>
    %62 = arith.mulf %59, %59 : vector<8x256xf32>
    %cst_34 = arith.constant dense<0.000000e+00> : vector<8xf32>
    %63 = vector.multi_reduction <add>, %62, %cst_34 [1] : vector<8x256xf32> to vector<8xf32>
    %64 = vector.shape_cast %63 : vector<8xf32> to vector<8x1xf32>
    %cst_35 = arith.constant 3.906250e-03 : f32
    %65 = vector.broadcast %cst_35 : f32 to vector<8x1xf32>
    %66 = arith.mulf %61, %65 : vector<8x1xf32>
    %cst_36 = arith.constant 3.906250e-03 : f32
    %67 = vector.broadcast %cst_36 : f32 to vector<8x1xf32>
    %68 = arith.mulf %64, %67 : vector<8x1xf32>
    %69 = arith.mulf %66, %66 : vector<8x1xf32>
    %70 = arith.subf %68, %69 : vector<8x1xf32>
    %cst_37 = arith.constant 0.000000e+00 : f32
    %71 = vector.broadcast %cst_37 : f32 to vector<8x1xf32>
    %72 = arith.maximumf %70, %71 : vector<8x1xf32>
    %73 = vector.broadcast %66 : vector<8x1xf32> to vector<8x256xf32>
    %74 = arith.subf %59, %73 : vector<8x256xf32>
    %cst_38 = arith.constant 9.99999974E-6 : f32
    %75 = vector.broadcast %cst_38 : f32 to vector<8x1xf32>
    %76 = arith.addf %72, %75 : vector<8x1xf32>
    %77 = math.rsqrt %76 : vector<8x1xf32>
    %78 = vector.broadcast %77 : vector<8x1xf32> to vector<8x256xf32>
    %79 = arith.mulf %74, %78 : vector<8x256xf32>
    %cst_39 = arith.constant 0.000000e+00 : f32
    %80 = vector.broadcast %cst_39 : f32 to vector<8x256xf32>
    %81 = arith.cmpf oge, %79, %80 : vector<8x256xf32>
    %cst_40 = arith.constant 0.00999999977 : f32
    %82 = vector.broadcast %cst_40 : f32 to vector<8x256xf32>
    %83 = arith.mulf %82, %79 : vector<8x256xf32>
    %84 = arith.select %81, %79, %83 : vector<8x256xi1>, vector<8x256xf32>
    %85 = arith.truncf %84 : vector<8x256xf32> to vector<8x256xbf16>
    %c0_41 = arith.constant 0 : index
    %c0_42 = arith.constant 0 : index
    %86 = vector.load %arg7[%c0_41, %c0_42] : memref<256x1024xbf16, #tpu.memory_space<vmem>>, vector<256x1024xbf16>
    %cst_43 = arith.constant dense<0.000000e+00> : vector<8x1024xf32>
    %87 = tpu.matmul %85, %86, %cst_43 {dimension_numbers = #tpu.dot_dimension_numbers<[1], [0], [0], [1], [0, 0, 1, 1], [], []>} : vector<8x256xbf16>, vector<256x1024xbf16>, vector<8x1024xf32> -> vector<8x1024xf32>
    %c33_i32 = arith.constant 33 : i32
    %88 = tpu.dynamic_rotate %87 by %c33_i32 dim 1 : vector<8x1024xf32>, i32 -> vector<8x1024xf32>
    %c0_44 = arith.constant 0 : index
    %c0_45 = arith.constant 0 : index
    %89 = vector.load %arg10[%c0_44, %c0_45] : memref<72x1024xf32, #tpu.memory_space<vmem>>, vector<8x1024xf32>
    %90 = arith.mulf %88, %89 : vector<8x1024xf32>
    %c0_46 = arith.constant 0 : index
    %c0_47 = arith.constant 0 : index
    %c0_48 = arith.constant 0 : index
    %91 = vector.load %arg5[%c0_46, %c0_47, %c0_48] : memref<9x8x8xbf16, #tpu.memory_space<vmem>>, vector<1x8x8xbf16>
    %92 = vector.shape_cast %91 : vector<1x8x8xbf16> to vector<8x8xbf16>
    %93 = arith.truncf %90 : vector<8x1024xf32> to vector<8x1024xbf16>
    %cst_49 = arith.constant dense<0.000000e+00> : vector<8x1024xf32>
    %94 = tpu.matmul %92, %93, %cst_49 {dimension_numbers = #tpu.dot_dimension_numbers<[1], [0], [0], [1], [0, 0, 1, 1], [], []>} : vector<8x8xbf16>, vector<8x1024xbf16>, vector<8x1024xf32> -> vector<8x1024xf32>
    %c32_i32 = arith.constant 32 : i32
    %95 = tpu.dynamic_rotate %87 by %c32_i32 dim 1 : vector<8x1024xf32>, i32 -> vector<8x1024xf32>
    %c8 = arith.constant 8 : index
    %c0_50 = arith.constant 0 : index
    %96 = vector.load %arg10[%c8, %c0_50] : memref<72x1024xf32, #tpu.memory_space<vmem>>, vector<8x1024xf32>
    %97 = arith.mulf %95, %96 : vector<8x1024xf32>
    %c1 = arith.constant 1 : index
    %c0_51 = arith.constant 0 : index
    %c0_52 = arith.constant 0 : index
    %98 = vector.load %arg5[%c1, %c0_51, %c0_52] : memref<9x8x8xbf16, #tpu.memory_space<vmem>>, vector<1x8x8xbf16>
    %99 = vector.shape_cast %98 : vector<1x8x8xbf16> to vector<8x8xbf16>
    %100 = arith.truncf %97 : vector<8x1024xf32> to vector<8x1024xbf16>
    %cst_53 = arith.constant dense<0.000000e+00> : vector<8x1024xf32>
    %101 = tpu.matmul %99, %100, %cst_53 {dimension_numbers = #tpu.dot_dimension_numbers<[1], [0], [0], [1], [0, 0, 1, 1], [], []>} : vector<8x8xbf16>, vector<8x1024xbf16>, vector<8x1024xf32> -> vector<8x1024xf32>
    %102 = arith.addf %94, %101 : vector<8x1024xf32>
    %c31_i32 = arith.constant 31 : i32
    %103 = tpu.dynamic_rotate %87 by %c31_i32 dim 1 : vector<8x1024xf32>, i32 -> vector<8x1024xf32>
    %c16 = arith.constant 16 : index
    %c0_54 = arith.constant 0 : index
    %104 = vector.load %arg10[%c16, %c0_54] : memref<72x1024xf32, #tpu.memory_space<vmem>>, vector<8x1024xf32>
    %105 = arith.mulf %103, %104 : vector<8x1024xf32>
    %c2 = arith.constant 2 : index
    %c0_55 = arith.constant 0 : index
    %c0_56 = arith.constant 0 : index
    %106 = vector.load %arg5[%c2, %c0_55, %c0_56] : memref<9x8x8xbf16, #tpu.memory_space<vmem>>, vector<1x8x8xbf16>
    %107 = vector.shape_cast %106 : vector<1x8x8xbf16> to vector<8x8xbf16>
    %108 = arith.truncf %105 : vector<8x1024xf32> to vector<8x1024xbf16>
    %cst_57 = arith.constant dense<0.000000e+00> : vector<8x1024xf32>
    %109 = tpu.matmul %107, %108, %cst_57 {dimension_numbers = #tpu.dot_dimension_numbers<[1], [0], [0], [1], [0, 0, 1, 1], [], []>} : vector<8x8xbf16>, vector<8x1024xbf16>, vector<8x1024xf32> -> vector<8x1024xf32>
    %110 = arith.addf %102, %109 : vector<8x1024xf32>
    %c1_i32_58 = arith.constant 1 : i32
    %111 = tpu.dynamic_rotate %87 by %c1_i32_58 dim 1 : vector<8x1024xf32>, i32 -> vector<8x1024xf32>
    %c24 = arith.constant 24 : index
    %c0_59 = arith.constant 0 : index
    %112 = vector.load %arg10[%c24, %c0_59] : memref<72x1024xf32, #tpu.memory_space<vmem>>, vector<8x1024xf32>
    %113 = arith.mulf %111, %112 : vector<8x1024xf32>
    %c3 = arith.constant 3 : index
    %c0_60 = arith.constant 0 : index
    %c0_61 = arith.constant 0 : index
    %114 = vector.load %arg5[%c3, %c0_60, %c0_61] : memref<9x8x8xbf16, #tpu.memory_space<vmem>>, vector<1x8x8xbf16>
    %115 = vector.shape_cast %114 : vector<1x8x8xbf16> to vector<8x8xbf16>
    %116 = arith.truncf %113 : vector<8x1024xf32> to vector<8x1024xbf16>
    %cst_62 = arith.constant dense<0.000000e+00> : vector<8x1024xf32>
    %117 = tpu.matmul %115, %116, %cst_62 {dimension_numbers = #tpu.dot_dimension_numbers<[1], [0], [0], [1], [0, 0, 1, 1], [], []>} : vector<8x8xbf16>, vector<8x1024xbf16>, vector<8x1024xf32> -> vector<8x1024xf32>
    %118 = arith.addf %110, %117 : vector<8x1024xf32>
    %c4 = arith.constant 4 : index
    %c0_63 = arith.constant 0 : index
    %c0_64 = arith.constant 0 : index
    %119 = vector.load %arg5[%c4, %c0_63, %c0_64] : memref<9x8x8xbf16, #tpu.memory_space<vmem>>, vector<1x8x8xbf16>
    %120 = vector.shape_cast %119 : vector<1x8x8xbf16> to vector<8x8xbf16>
    %121 = arith.truncf %87 : vector<8x1024xf32> to vector<8x1024xbf16>
    %cst_65 = arith.constant dense<0.000000e+00> : vector<8x1024xf32>
    %122 = tpu.matmul %120, %121, %cst_65 {dimension_numbers = #tpu.dot_dimension_numbers<[1], [0], [0], [1], [0, 0, 1, 1], [], []>} : vector<8x8xbf16>, vector<8x1024xbf16>, vector<8x1024xf32> -> vector<8x1024xf32>
    %123 = arith.addf %118, %122 : vector<8x1024xf32>
    %c1023_i32 = arith.constant 1023 : i32
    %124 = tpu.dynamic_rotate %87 by %c1023_i32 dim 1 : vector<8x1024xf32>, i32 -> vector<8x1024xf32>
    %c40 = arith.constant 40 : index
    %c0_66 = arith.constant 0 : index
    %125 = vector.load %arg10[%c40, %c0_66] : memref<72x1024xf32, #tpu.memory_space<vmem>>, vector<8x1024xf32>
    %126 = arith.mulf %124, %125 : vector<8x1024xf32>
    %c5 = arith.constant 5 : index
    %c0_67 = arith.constant 0 : index
    %c0_68 = arith.constant 0 : index
    %127 = vector.load %arg5[%c5, %c0_67, %c0_68] : memref<9x8x8xbf16, #tpu.memory_space<vmem>>, vector<1x8x8xbf16>
    %128 = vector.shape_cast %127 : vector<1x8x8xbf16> to vector<8x8xbf16>
    %129 = arith.truncf %126 : vector<8x1024xf32> to vector<8x1024xbf16>
    %cst_69 = arith.constant dense<0.000000e+00> : vector<8x1024xf32>
    %130 = tpu.matmul %128, %129, %cst_69 {dimension_numbers = #tpu.dot_dimension_numbers<[1], [0], [0], [1], [0, 0, 1, 1], [], []>} : vector<8x8xbf16>, vector<8x1024xbf16>, vector<8x1024xf32> -> vector<8x1024xf32>
    %131 = arith.addf %123, %130 : vector<8x1024xf32>
    %c993_i32 = arith.constant 993 : i32
    %132 = tpu.dynamic_rotate %87 by %c993_i32 dim 1 : vector<8x1024xf32>, i32 -> vector<8x1024xf32>
    %c48 = arith.constant 48 : index
    %c0_70 = arith.constant 0 : index
    %133 = vector.load %arg10[%c48, %c0_70] : memref<72x1024xf32, #tpu.memory_space<vmem>>, vector<8x1024xf32>
    %134 = arith.mulf %132, %133 : vector<8x1024xf32>
    %c6 = arith.constant 6 : index
    %c0_71 = arith.constant 0 : index
    %c0_72 = arith.constant 0 : index
    %135 = vector.load %arg5[%c6, %c0_71, %c0_72] : memref<9x8x8xbf16, #tpu.memory_space<vmem>>, vector<1x8x8xbf16>
    %136 = vector.shape_cast %135 : vector<1x8x8xbf16> to vector<8x8xbf16>
    %137 = arith.truncf %134 : vector<8x1024xf32> to vector<8x1024xbf16>
    %cst_73 = arith.constant dense<0.000000e+00> : vector<8x1024xf32>
    %138 = tpu.matmul %136, %137, %cst_73 {dimension_numbers = #tpu.dot_dimension_numbers<[1], [0], [0], [1], [0, 0, 1, 1], [], []>} : vector<8x8xbf16>, vector<8x1024xbf16>, vector<8x1024xf32> -> vector<8x1024xf32>
    %139 = arith.addf %131, %138 : vector<8x1024xf32>
    %c992_i32 = arith.constant 992 : i32
    %140 = tpu.dynamic_rotate %87 by %c992_i32 dim 1 : vector<8x1024xf32>, i32 -> vector<8x1024xf32>
    %c56 = arith.constant 56 : index
    %c0_74 = arith.constant 0 : index
    %141 = vector.load %arg10[%c56, %c0_74] : memref<72x1024xf32, #tpu.memory_space<vmem>>, vector<8x1024xf32>
    %142 = arith.mulf %140, %141 : vector<8x1024xf32>
    %c7 = arith.constant 7 : index
    %c0_75 = arith.constant 0 : index
    %c0_76 = arith.constant 0 : index
    %143 = vector.load %arg5[%c7, %c0_75, %c0_76] : memref<9x8x8xbf16, #tpu.memory_space<vmem>>, vector<1x8x8xbf16>
    %144 = vector.shape_cast %143 : vector<1x8x8xbf16> to vector<8x8xbf16>
    %145 = arith.truncf %142 : vector<8x1024xf32> to vector<8x1024xbf16>
    %cst_77 = arith.constant dense<0.000000e+00> : vector<8x1024xf32>
    %146 = tpu.matmul %144, %145, %cst_77 {dimension_numbers = #tpu.dot_dimension_numbers<[1], [0], [0], [1], [0, 0, 1, 1], [], []>} : vector<8x8xbf16>, vector<8x1024xbf16>, vector<8x1024xf32> -> vector<8x1024xf32>
    %147 = arith.addf %139, %146 : vector<8x1024xf32>
    %c991_i32 = arith.constant 991 : i32
    %148 = tpu.dynamic_rotate %87 by %c991_i32 dim 1 : vector<8x1024xf32>, i32 -> vector<8x1024xf32>
    %c64 = arith.constant 64 : index
    %c0_78 = arith.constant 0 : index
    %149 = vector.load %arg10[%c64, %c0_78] : memref<72x1024xf32, #tpu.memory_space<vmem>>, vector<8x1024xf32>
    %150 = arith.mulf %148, %149 : vector<8x1024xf32>
    %c8_79 = arith.constant 8 : index
    %c0_80 = arith.constant 0 : index
    %c0_81 = arith.constant 0 : index
    %151 = vector.load %arg5[%c8_79, %c0_80, %c0_81] : memref<9x8x8xbf16, #tpu.memory_space<vmem>>, vector<1x8x8xbf16>
    %152 = vector.shape_cast %151 : vector<1x8x8xbf16> to vector<8x8xbf16>
    %153 = arith.truncf %150 : vector<8x1024xf32> to vector<8x1024xbf16>
    %cst_82 = arith.constant dense<0.000000e+00> : vector<8x1024xf32>
    %154 = tpu.matmul %152, %153, %cst_82 {dimension_numbers = #tpu.dot_dimension_numbers<[1], [0], [0], [1], [0, 0, 1, 1], [], []>} : vector<8x8xbf16>, vector<8x1024xbf16>, vector<8x1024xf32> -> vector<8x1024xf32>
    %155 = arith.addf %147, %154 : vector<8x1024xf32>
    %c0_83 = arith.constant 0 : index
    %c0_84 = arith.constant 0 : index
    %156 = vector.load %arg6[%c0_83, %c0_84] : memref<8x1xf32, #tpu.memory_space<vmem>>, vector<8x1xf32>
    %157 = vector.broadcast %156 : vector<8x1xf32> to vector<8x1024xf32>
    %158 = arith.addf %155, %157 : vector<8x1024xf32>
    %c0_85 = arith.constant 0 : index
    %c4_86 = arith.constant 4 : index
    %c0_87 = arith.constant 0 : index
    %159 = vector.load %arg11[%c0_85, %c4_86, %c0_87] : memref<1x12x1024xf32, #tpu.memory_space<vmem>>, vector<1x8x1024xf32>
    %160 = vector.shape_cast %159 : vector<1x8x1024xf32> to vector<8x1024xf32>
    %161 = vector.shape_cast %158 : vector<8x1024xf32> to vector<1x8x1024xf32>
    tpu.vector_store %arg11[%c0_85, %c4_86, %c0_87], %161 {strides = array<i32>} : memref<1x12x1024xf32, #tpu.memory_space<vmem>>, vector<1x8x1024xf32>,
    return
  }
  func.func @transform_0(%arg0: i32) -> (i32, i32, i32) {
    %c0_i32 = arith.constant 0 : i32
    %c0_i32_0 = arith.constant 0 : i32
    %c0_i32_1 = arith.constant 0 : i32
    return %arg0, %c0_i32, %c0_i32_0 : i32, i32, i32
  }
  func.func @transform_1(%arg0: i32) -> (i32, i32, i32) {
    %c0_i32 = arith.constant 0 : i32
    %c0_i32_0 = arith.constant 0 : i32
    %c0_i32_1 = arith.constant 0 : i32
    return %arg0, %c0_i32, %c0_i32_0 : i32, i32, i32
  }
  func.func @transform_2(%arg0: i32) -> (i32, i32) {
    %c0_i32 = arith.constant 0 : i32
    %c0_i32_0 = arith.constant 0 : i32
    %c0_i32_1 = arith.constant 0 : i32
    return %c0_i32, %c0_i32_0 : i32, i32
  }
  func.func @transform_3(%arg0: i32) -> (i32, i32) {
    %c0_i32 = arith.constant 0 : i32
    %c0_i32_0 = arith.constant 0 : i32
    %c0_i32_1 = arith.constant 0 : i32
    return %c0_i32, %c0_i32_0 : i32, i32
  }
  func.func @transform_4(%arg0: i32) -> (i32, i32, i32) {
    %c0_i32 = arith.constant 0 : i32
    %c0_i32_0 = arith.constant 0 : i32
    %c0_i32_1 = arith.constant 0 : i32
    %c0_i32_2 = arith.constant 0 : i32
    return %c0_i32, %c0_i32_0, %c0_i32_1 : i32, i32, i32
  }
  func.func @transform_5(%arg0: i32) -> (i32, i32) {
    %c0_i32 = arith.constant 0 : i32
    %c0_i32_0 = arith.constant 0 : i32
    %c0_i32_1 = arith.constant 0 : i32
    return %c0_i32, %c0_i32_0 : i32, i32
  }
  func.func @transform_6(%arg0: i32) -> (i32, i32) {
    %c0_i32 = arith.constant 0 : i32
    %c0_i32_0 = arith.constant 0 : i32
    %c0_i32_1 = arith.constant 0 : i32
    return %c0_i32, %c0_i32_0 : i32, i32
  }
  func.func @transform_7(%arg0: i32) -> (i32, i32) {
    %c0_i32 = arith.constant 0 : i32
    %c0_i32_0 = arith.constant 0 : i32
    %c0_i32_1 = arith.constant 0 : i32
    return %c0_i32, %c0_i32_0 : i32, i32
  }
  func.func @transform_8(%arg0: i32) -> (i32, i32) {
    %c0_i32 = arith.constant 0 : i32
    %c0_i32_0 = arith.constant 0 : i32
    %c0_i32_1 = arith.constant 0 : i32
    return %c0_i32, %c0_i32_0 : i32, i32
  }
  func.func @transform_9(%arg0: i32) -> (i32, i32) {
    %c0_i32 = arith.constant 0 : i32
    %c0_i32_0 = arith.constant 0 : i32
    %c0_i32_1 = arith.constant 0 : i32
    return %c0_i32, %c0_i32_0 : i32, i32
  }
  func.func @transform_10(%arg0: i32) -> (i32, i32, i32) {
    %c0_i32 = arith.constant 0 : i32
    %c0_i32_0 = arith.constant 0 : i32
    %c0_i32_1 = arith.constant 0 : i32
    return %arg0, %c0_i32, %c0_i32_0 : i32, i32, i32
  }
}

</mosaic_0001>

<llo_original>
// kernel: up_forward.1
$region0: #{up_forward.1}
  #allocation0 [shape = 'u32[]', space=smem, size = 0x4, offset = 0x4, fixed_abs, tag = 'smem constant byte address 0x4 - core index']
  #allocation1 [shape = 'u32[144,128]{1,0:T(1,128)}', space=vmem, size = 0x12000, scoped, tag = 'internal scratch']
  %s0 = inlined_call_operand.vmem [shape: f32[2,8,256], index: 0, kind: input, shape index: {}]
  %s1 = inlined_call_operand.vmem [shape: f32[2,4,1024], index: 1, kind: input, shape index: {}]
  %s2 = inlined_call_operand.vmem [shape: bf16[8,72], index: 2, kind: input, shape index: {}]
  %s3 = inlined_call_operand.vmem [shape: bf16[8,72], index: 3, kind: input, shape index: {}]
  %s4 = inlined_call_operand.vmem [shape: bf16[9,8,8], index: 4, kind: input, shape index: {}]
  %s5 = inlined_call_operand.vmem [shape: f32[8,1], index: 5, kind: input, shape index: {}]
  %s6 = inlined_call_operand.vmem [shape: bf16[256,1024], index: 6, kind: input, shape index: {}]
  %s7 = inlined_call_operand.vmem [shape: f32[72,256], index: 7, kind: input, shape index: {}, may-alias: {7,8}]
  %s8 = inlined_call_operand.vmem [shape: f32[72,256], index: 8, kind: input, shape index: {}, may-alias: {7,8}]
  %s9 = inlined_call_operand.vmem [shape: f32[72,1024], index: 9, kind: input, shape index: {}]
  %s10 = inlined_call_operand.vmem [shape: f32[2,12,1024], index: 10, kind: output, shape index: {}]
  %s11 = sld [smem:[#allocation0]]
  $region73: #{up_forward.1} parent=0
    _
  %s13 = ssub.s32 1, %s11
  %s14 = scalar_select 0, %s13, %s11
  loop: start=0, step=1, limit=4
  $region2: #{up_forward.1} parent=0 // loop_pre_header
    _
  $region3: #{up_forward.1} parent=0 // loop_header
    %s16 = sphi 0, %s20
    %p17 = scmp.ge.s32.totalorder %s16, 4
    %s26 = sphi 0, %s28
    %s29 = sphi 0, %s26
    %s30 = sphi 0, %s29
    %s46 = sphi 0, %s30
    %s52 = sphi 0, %s54
    %s55 = sphi 0, %s52
    %s56 = sphi 0, %s55
    %s72 = sphi 0, %s56
    %s76 = sphi 0, %s76
    %s78 = sphi 0, %s76
    %s79 = sphi 0, %s78
    %s93 = sphi 0, %s79
    %s97 = sphi 0, %s97
    %s99 = sphi 0, %s97
    %s100 = sphi 0, %s99
    %s114 = sphi 0, %s100
    %s118 = sphi 0, %s118
    %s120 = sphi 0, %s118
    %s121 = sphi 0, %s120
    %s135 = sphi 0, %s121
    %s139 = sphi 0, %s139
    %s141 = sphi 0, %s139
    %s142 = sphi 0, %s141
    %s156 = sphi 0, %s142
    %s160 = sphi 0, %s160
    %s162 = sphi 0, %s160
    %s163 = sphi 0, %s162
    %s177 = sphi 0, %s163
    %s181 = sphi 0, %s181
    %s183 = sphi 0, %s181
    %s184 = sphi 0, %s183
    %s198 = sphi 0, %s184
    %s202 = sphi 0, %s202
    %s204 = sphi 0, %s202
    %s205 = sphi 0, %s204
    %s219 = sphi 0, %s205
    %s223 = sphi 0, %s223
    %s225 = sphi 0, %s223
    %s226 = sphi 0, %s225
    %s240 = sphi 0, %s226
    %s246 = sphi 0, %s248
    %s249 = sphi 0, %s246
    %s250 = sphi 0, %s249
    %s266 = sphi 0, %s250
  $region4: #{up_forward.1} parent=0 // loop_header_branch
    %19 = sbr.rel (%p17) target = $region8
  $region5: #{up_forward.1} parent=0 // loop_body
    %s21 = ssub.s32 %s16, 1
    %s22 = ssub.s32 %s16, 2
    %s23 = sadd.s32 %s16, 1
    %s24 = ssub.s32 %s16, %s23
    %p25 = scmp.eq.s32.totalorder %s24, 0
    %s27 = sadd.s32 %s26, 1
    %s28 = scalar_select %p25, %s26, %s27
    %p31 = pneg %p25
    %p32 = scmp.eq.s32.totalorder %s16, 1
    %p33 = por %p31, %p32
    %p34 = scmp.ne.s32.totalorder %s26, %s29
    %p35 = scmp.eq.s32.totalorder %s16, 0
    %p36 = por %p34, %p35
    %p37 = scmp.ne.s32.totalorder %s26, %s29
    %p38 = scmp.eq.s32.totalorder %s21, 1
    %p39 = por %p37, %p38
    %p40 = scmp.ne.s32.totalorder %s29, %s30
    %p41 = scmp.eq.s32.totalorder %s21, 0
    %p42 = por %p40, %p41
    %p43 = scmp.ne.s32.totalorder %s29, %s30
    %p44 = scmp.eq.s32.totalorder %s22, 1
    %p45 = por %p43, %p44
    %p47 = scmp.ne.s32.totalorder %s30, %s46
    %p48 = scmp.eq.s32.totalorder %s22, 0
    %p49 = por %p47, %p48
    %s50 = ssub.s32 %s16, %s23
    %p51 = scmp.eq.s32.totalorder %s50, 0
    %s53 = sadd.s32 %s52, 1
    %s54 = scalar_select %p51, %s52, %s53
    %p57 = pneg %p51
    %p58 = scmp.eq.s32.totalorder %s16, 1
    %p59 = por %p57, %p58
    %p60 = scmp.ne.s32.totalorder %s52, %s55
    %p61 = scmp.eq.s32.totalorder %s16, 0
    %p62 = por %p60, %p61
    %p63 = scmp.ne.s32.totalorder %s52, %s55
    %p64 = scmp.eq.s32.totalorder %s21, 1
    %p65 = por %p63, %p64
    %p66 = scmp.ne.s32.totalorder %s55, %s56
    %p67 = scmp.eq.s32.totalorder %s21, 0
    %p68 = por %p66, %p67
    %p69 = scmp.ne.s32.totalorder %s55, %s56
    %p70 = scmp.eq.s32.totalorder %s22, 1
    %p71 = por %p69, %p70
    %p73 = scmp.ne.s32.totalorder %s56, %s72
    %p74 = scmp.eq.s32.totalorder %s22, 0
    %p75 = por %p73, %p74
    %s77 = sadd.s32 %s76, 1
    %p80 = scmp.eq.s32.totalorder %s16, 1
    %p81 = scmp.ne.s32.totalorder %s76, %s78
    %p82 = scmp.eq.s32.totalorder %s16, 0
    %p83 = por %p81, %p82
    %p84 = scmp.ne.s32.totalorder %s76, %s78
    %p85 = scmp.eq.s32.totalorder %s21, 1
    %p86 = por %p84, %p85
    %p87 = scmp.ne.s32.totalorder %s78, %s79
    %p88 = scmp.eq.s32.totalorder %s21, 0
    %p89 = por %p87, %p88
    %p90 = scmp.ne.s32.totalorder %s78, %s79
    %p91 = scmp.eq.s32.totalorder %s22, 1
    %p92 = por %p90, %p91
    %p94 = scmp.ne.s32.totalorder %s79, %s93
    %p95 = scmp.eq.s32.totalorder %s22, 0
    %p96 = por %p94, %p95
    %s98 = sadd.s32 %s97, 1
    %p101 = scmp.eq.s32.totalorder %s16, 1
    %p102 = scmp.ne.s32.totalorder %s97, %s99
    %p103 = scmp.eq.s32.totalorder %s16, 0
    %p104 = por %p102, %p103
    %p105 = scmp.ne.s32.totalorder %s97, %s99
    %p106 = scmp.eq.s32.totalorder %s21, 1
    %p107 = por %p105, %p106
    %p108 = scmp.ne.s32.totalorder %s99, %s100
    %p109 = scmp.eq.s32.totalorder %s21, 0
    %p110 = por %p108, %p109
    %p111 = scmp.ne.s32.totalorder %s99, %s100
    %p112 = scmp.eq.s32.totalorder %s22, 1
    %p113 = por %p111, %p112
    %p115 = scmp.ne.s32.totalorder %s100, %s114
    %p116 = scmp.eq.s32.totalorder %s22, 0
    %p117 = por %p115, %p116
    %s119 = sadd.s32 %s118, 1
    %p122 = scmp.eq.s32.totalorder %s16, 1
    %p123 = scmp.ne.s32.totalorder %s118, %s120
    %p124 = scmp.eq.s32.totalorder %s16, 0
    %p125 = por %p123, %p124
    %p126 = scmp.ne.s32.totalorder %s118, %s120
    %p127 = scmp.eq.s32.totalorder %s21, 1
    %p128 = por %p126, %p127
    %p129 = scmp.ne.s32.totalorder %s120, %s121
    %p130 = scmp.eq.s32.totalorder %s21, 0
    %p131 = por %p129, %p130
    %p132 = scmp.ne.s32.totalorder %s120, %s121
    %p133 = scmp.eq.s32.totalorder %s22, 1
    %p134 = por %p132, %p133
    %p136 = scmp.ne.s32.totalorder %s121, %s135
    %p137 = scmp.eq.s32.totalorder %s22, 0
    %p138 = por %p136, %p137
    %s140 = sadd.s32 %s139, 1
    %p143 = scmp.eq.s32.totalorder %s16, 1
    %p144 = scmp.ne.s32.totalorder %s139, %s141
    %p145 = scmp.eq.s32.totalorder %s16, 0
    %p146 = por %p144, %p145
    %p147 = scmp.ne.s32.totalorder %s139, %s141
    %p148 = scmp.eq.s32.totalorder %s21, 1
    %p149 = por %p147, %p148
    %p150 = scmp.ne.s32.totalorder %s141, %s142
    %p151 = scmp.eq.s32.totalorder %s21, 0
    %p152 = por %p150, %p151
    %p153 = scmp.ne.s32.totalorder %s141, %s142
    %p154 = scmp.eq.s32.totalorder %s22, 1
    %p155 = por %p153, %p154
    %p157 = scmp.ne.s32.totalorder %s142, %s156
    %p158 = scmp.eq.s32.totalorder %s22, 0
    %p159 = por %p157, %p158
    %s161 = sadd.s32 %s160, 1
    %p164 = scmp.eq.s32.totalorder %s16, 1
    %p165 = scmp.ne.s32.totalorder %s160, %s162
    %p166 = scmp.eq.s32.totalorder %s16, 0
    %p167 = por %p165, %p166
    %p168 = scmp.ne.s32.totalorder %s160, %s162
    %p169 = scmp.eq.s32.totalorder %s21, 1
    %p170 = por %p168, %p169
    %p171 = scmp.ne.s32.totalorder %s162, %s163
    %p172 = scmp.eq.s32.totalorder %s21, 0
    %p173 = por %p171, %p172
    %p174 = scmp.ne.s32.totalorder %s162, %s163
    %p175 = scmp.eq.s32.totalorder %s22, 1
    %p176 = por %p174, %p175
    %p178 = scmp.ne.s32.totalorder %s163, %s177
    %p179 = scmp.eq.s32.totalorder %s22, 0
    %p180 = por %p178, %p179
    %s182 = sadd.s32 %s181, 1
    %p185 = scmp.eq.s32.totalorder %s16, 1
    %p186 = scmp.ne.s32.totalorder %s181, %s183
    %p187 = scmp.eq.s32.totalorder %s16, 0
    %p188 = por %p186, %p187
    %p189 = scmp.ne.s32.totalorder %s181, %s183
    %p190 = scmp.eq.s32.totalorder %s21, 1
    %p191 = por %p189, %p190
    %p192 = scmp.ne.s32.totalorder %s183, %s184
    %p193 = scmp.eq.s32.totalorder %s21, 0
    %p194 = por %p192, %p193
    %p195 = scmp.ne.s32.totalorder %s183, %s184
    %p196 = scmp.eq.s32.totalorder %s22, 1
    %p197 = por %p195, %p196
    %p199 = scmp.ne.s32.totalorder %s184, %s198
    %p200 = scmp.eq.s32.totalorder %s22, 0
    %p201 = por %p199, %p200
    %s203 = sadd.s32 %s202, 1
    %p206 = scmp.eq.s32.totalorder %s16, 1
    %p207 = scmp.ne.s32.totalorder %s202, %s204
    %p208 = scmp.eq.s32.totalorder %s16, 0
    %p209 = por %p207, %p208
    %p210 = scmp.ne.s32.totalorder %s202, %s204
    %p211 = scmp.eq.s32.totalorder %s21, 1
    %p212 = por %p210, %p211
    %p213 = scmp.ne.s32.totalorder %s204, %s205
    %p214 = scmp.eq.s32.totalorder %s21, 0
    %p215 = por %p213, %p214
    %p216 = scmp.ne.s32.totalorder %s204, %s205
    %p217 = scmp.eq.s32.totalorder %s22, 1
    %p218 = por %p216, %p217
    %p220 = scmp.ne.s32.totalorder %s205, %s219
    %p221 = scmp.eq.s32.totalorder %s22, 0
    %p222 = por %p220, %p221
    %s224 = sadd.s32 %s223, 1
    %p227 = scmp.eq.s32.totalorder %s16, 1
    %p228 = scmp.ne.s32.totalorder %s223, %s225
    %p229 = scmp.eq.s32.totalorder %s16, 0
    %p230 = por %p228, %p229
    %p231 = scmp.ne.s32.totalorder %s223, %s225
    %p232 = scmp.eq.s32.totalorder %s21, 1
    %p233 = por %p231, %p232
    %p234 = scmp.ne.s32.totalorder %s225, %s226
    %p235 = scmp.eq.s32.totalorder %s21, 0
    %p236 = por %p234, %p235
    %p237 = scmp.ne.s32.totalorder %s225, %s226
    %p238 = scmp.eq.s32.totalorder %s22, 1
    %p239 = por %p237, %p238
    %p241 = scmp.ne.s32.totalorder %s226, %s240
    %p242 = scmp.eq.s32.totalorder %s22, 0
    %p243 = por %p241, %p242
    %s244 = ssub.s32 %s16, %s23
    %p245 = scmp.eq.s32.totalorder %s244, 0
    %s247 = sadd.s32 %s246, 1
    %s248 = scalar_select %p245, %s246, %s247
    %p251 = pneg %p245
    %p252 = scmp.eq.s32.totalorder %s16, 1
    %p253 = por %p251, %p252
    %p254 = scmp.ne.s32.totalorder %s246, %s249
    %p255 = scmp.eq.s32.totalorder %s16, 0
    %p256 = por %p254, %p255
    %p257 = scmp.ne.s32.totalorder %s246, %s249
    %p258 = scmp.eq.s32.totalorder %s21, 1
    %p259 = por %p257, %p258
    %p260 = scmp.ne.s32.totalorder %s249, %s250
    %p261 = scmp.eq.s32.totalorder %s21, 0
    %p262 = por %p260, %p261
    %p263 = scmp.ne.s32.totalorder %s249, %s250
    %p264 = scmp.eq.s32.totalorder %s22, 1
    %p265 = por %p263, %p264
    %p267 = scmp.ne.s32.totalorder %s250, %s266
    %p268 = scmp.eq.s32.totalorder %s22, 0
    %p269 = por %p267, %p268
    %p270 = scmp.le.s32.totalorder 1, %s16
    %p271 = scmp.lt.s32.totalorder %s16, 3
    %p272 = pnand %p270, %p271
    %p273 = pneg %p272
    // Predicated region
    $region9: #{up_forward.1} parent=5 // pred_check
      _
    $region10: #{up_forward.1} parent=5 // pred_check_branch
      %275 = sbr.rel (%p272) target = $region12
    $region11: #{up_forward.1} parent=5 // pred_region
      %s276 = ssub.s32 %s16, 1
      // Predicated region
      $region13: #{up_forward.1} parent=11 // pred_check
        %p277 = pneg %p89
      $region14: #{up_forward.1} parent=11 // pred_check_branch
        %279 = sbr.rel (%p277) target = $region16
      $region15: #{up_forward.1} parent=11 // pred_region
        _
      $region16: #{up_forward.1} parent=11 // pred_fallthru
        _
      // Predicated region
      $region17: #{up_forward.1} parent=11 // pred_check
        %p280 = pneg %p110
      $region18: #{up_forward.1} parent=11 // pred_check_branch
        %282 = sbr.rel (%p280) target = $region20
      $region19: #{up_forward.1} parent=11 // pred_region
        _
      $region20: #{up_forward.1} parent=11 // pred_fallthru
        _
      // Predicated region
      $region21: #{up_forward.1} parent=11 // pred_check
        %p283 = pneg %p131
      $region22: #{up_forward.1} parent=11 // pred_check_branch
        %285 = sbr.rel (%p283) target = $region24
      $region23: #{up_forward.1} parent=11 // pred_region
        _
      $region24: #{up_forward.1} parent=11 // pred_fallthru
        _
      // Predicated region
      $region25: #{up_forward.1} parent=11 // pred_check
        %p286 = pneg %p152
      $region26: #{up_forward.1} parent=11 // pred_check_branch
        %288 = sbr.rel (%p286) target = $region28
      $region27: #{up_forward.1} parent=11 // pred_region
        _
      $region28: #{up_forward.1} parent=11 // pred_fallthru
        _
      // Predicated region
      $region29: #{up_forward.1} parent=11 // pred_check
        %p289 = pneg %p173
      $region30: #{up_forward.1} parent=11 // pred_check_branch
        %291 = sbr.rel (%p289) target = $region32
      $region31: #{up_forward.1} parent=11 // pred_region
        _
      $region32: #{up_forward.1} parent=11 // pred_fallthru
        _
      // Predicated region
      $region33: #{up_forward.1} parent=11 // pred_check
        %p292 = pneg %p194
      $region34: #{up_forward.1} parent=11 // pred_check_branch
        %294 = sbr.rel (%p292) target = $region36
      $region35: #{up_forward.1} parent=11 // pred_region
        _
      $region36: #{up_forward.1} parent=11 // pred_fallthru
        _
      // Predicated region
      $region37: #{up_forward.1} parent=11 // pred_check
        %p295 = pneg %p215
      $region38: #{up_forward.1} parent=11 // pred_check_branch
        %297 = sbr.rel (%p295) target = $region40
      $region39: #{up_forward.1} parent=11 // pred_region
        _
      $region40: #{up_forward.1} parent=11 // pred_fallthru
        _
      // Predicated region
      $region41: #{up_forward.1} parent=11 // pred_check
        %p298 = pneg %p236
      $region42: #{up_forward.1} parent=11 // pred_check_branch
        %300 = sbr.rel (%p298) target = $region44
      $region43: #{up_forward.1} parent=11 // pred_region
        _
      $region44: #{up_forward.1} parent=11 // pred_fallthru
        _
    $region12: #{up_forward.1} parent=5 // pred_fallthru
      _
    %p301 = scmp.lt.s32.totalorder %s16, 2
    // Predicated region
    $region45: #{up_forward.1} parent=5 // pred_check
      %p302 = pneg %p301
    $region46: #{up_forward.1} parent=5 // pred_check_branch
      %304 = sbr.rel (%p302) target = $region48
    $region47: #{up_forward.1} parent=5 // pred_region
      // Predicated region
      $region49: #{up_forward.1} parent=47 // pred_check
        %p305 = pneg %p36
      $region50: #{up_forward.1} parent=47 // pred_check_branch
        %307 = sbr.rel (%p305) target = $region52
      $region51: #{up_forward.1} parent=47 // pred_region
        %p308 = scmp.lt.s32.totalorder %s16, 1
        %s309 = scalar_select %p308, %s16, 1
        %s310 = smul.addr %s309, 2
        %s311 = smul.addr %s310, 8
        %s312 = scalar_lea.vmem %s0, %s311
      $region52: #{up_forward.1} parent=47 // pred_fallthru
        _
      // Predicated region
      $region53: #{up_forward.1} parent=47 // pred_check
        %p313 = pneg %p62
      $region54: #{up_forward.1} parent=47 // pred_check_branch
        %315 = sbr.rel (%p313) target = $region56
      $region55: #{up_forward.1} parent=47 // pred_region
        %p316 = scmp.lt.s32.totalorder %s16, 1
        %s317 = scalar_select %p316, %s16, 1
        %s318 = smul.addr %s317, 8
        %s319 = smul.addr %s318, 4
        %s320 = scalar_lea.vmem %s1, %s319
      $region56: #{up_forward.1} parent=47 // pred_fallthru
        _
    $region48: #{up_forward.1} parent=5 // pred_fallthru
      _
    %p321 = scmp.le.s32.totalorder 1, %s16
    %p322 = scmp.lt.s32.totalorder %s16, 3
    %p323 = pnand %p321, %p322
    %p324 = pneg %p323
    // Predicated region
    $region57: #{up_forward.1} parent=5 // pred_check
      _
    $region58: #{up_forward.1} parent=5 // pred_check_branch
      %326 = sbr.rel (%p323) target = $region60
    $region59: #{up_forward.1} parent=5 // pred_region
      %s327 = ssub.s32 %s16, 1
      %p328 = scmp.lt.s32.totalorder %s21, 1
      %s329 = scalar_select %p328, %s21, 1
      %s330 = smul.addr %s329, 2
      %s331 = smul.addr %s330, 8
      %s332 = scalar_lea.vmem %s0, %s331
      %p333 = pneg %p42
      %p334 = pneg %p39
      %p335 = scmp.lt.s32.totalorder %s21, 1
      %s336 = scalar_select %p335, %s21, 1
      %s337 = smul.addr %s336, 8
      %s338 = smul.addr %s337, 4
      %s339 = scalar_lea.vmem %s1, %s338
      %p340 = pneg %p68
      %p341 = pneg %p65
      %p342 = pneg %p89
      %p343 = pneg %p86
      %p344 = pneg %p110
      %p345 = pneg %p107
      %p346 = pneg %p131
      %p347 = pneg %p128
      %p348 = pneg %p152
      %p349 = pneg %p149
      %p350 = pneg %p173
      %p351 = pneg %p170
      %p352 = pneg %p194
      %p353 = pneg %p191
      %p354 = pneg %p215
      %p355 = pneg %p212
      %p356 = pneg %p236
      %p357 = pneg %p233
      %p358 = pneg %p262
      %p359 = pneg %p259
      %p360 = scmp.lt.s32.totalorder %s21, 1
      %s361 = scalar_select %p360, %s21, 1
      %s362 = smul.addr %s361, 16
      %s363 = smul.addr %s362, 8
      %s364 = scalar_lea.vmem %s10, %s363
      %p365 = scmp.lt.s32.totalorder %s21, 1
      %s366 = scalar_select %p365, %s21, 1
      %s367 = smul.addr %s366, 2
      %s368 = smul.addr %s367, 8
      %s369 = scalar_lea.vmem %s0, %s368
      %p370 = scmp.lt.s32.totalorder %s21, 1
      %s371 = scalar_select %p370, %s21, 1
      %s372 = smul.addr %s371, 8
      %s373 = smul.addr %s372, 4
      %s374 = scalar_lea.vmem %s1, %s373
      %p375 = scmp.lt.s32.totalorder %s21, 1
      %s376 = scalar_select %p375, %s21, 1
      %s377 = smul.addr %s376, 16
      %s378 = smul.addr %s377, 8
      %s379 = scalar_lea.vmem %s10, %s378
      %v381 = vld [vmem:[%s374] sm:$0xff]
      %v382 = vld [vmem:[%s374 + $0x8] sm:$0xff]
      %v383 = vld [vmem:[%s374 + $0x10] sm:$0xff]
      %v384 = vld [vmem:[%s374 + $0x18] sm:$0xff]
      %v389 = vcombine.high %v381, %v381
      %v390 = vcombine.high %v382, %v382
      %v391 = vcombine.high %v383, %v383
      %v392 = vcombine.high %v384, %v384
      %397 = vst [vmem:[%s379] sm:$0xf] %v381
      %398 = vst [vmem:[%s379 + $0x8] sm:$0xf] %v389
      %399 = vst [vmem:[%s379 + $0x10] sm:$0xf] %v382
      %400 = vst [vmem:[%s379 + $0x18] sm:$0xf] %v390
      %401 = vst [vmem:[%s379 + $0x20] sm:$0xf] %v383
      %402 = vst [vmem:[%s379 + $0x28] sm:$0xf] %v391
      %403 = vst [vmem:[%s379 + $0x30] sm:$0xf] %v384
      %404 = vst [vmem:[%s379 + $0x38] sm:$0xf] %v392
      %v405 = vld [vmem:[%s369] sm:$0xff]
      %v406 = vld [vmem:[%s369 + $0x8] sm:$0xff]
      %407 = vrot.lane.b32.xlu0 %v405, 17
      %v408 = vpop.permute.xlu0 %407
      %409 = vrot.lane.b32.xlu0 %v406, 17
      %v410 = vpop.permute.xlu0 %409
      %v411 = vlaneseq
      %v412 = vand.u32 %v411, 127
      %vm413 = vcmp.lt.s32.totalorder %v412, 17
      %v414 = vsel %vm413, %v408, %v410
      %v415 = vsel %vm413, %v410, %v408
      %416 = vrot.lane.b32.xlu0 %v405, 16
      %v417 = vpop.permute.xlu0 %416
      %418 = vrot.lane.b32.xlu0 %v406, 16
      %v419 = vpop.permute.xlu0 %418
      %vm420 = vcmp.lt.s32.totalorder %v412, 16
      %v421 = vsel %vm420, %v417, %v419
      %v422 = vsel %vm420, %v419, %v417
      %423 = vrot.lane.b32.xlu0 %v405, 15
      %v424 = vpop.permute.xlu0 %423
      %425 = vrot.lane.b32.xlu0 %v406, 15
      %v426 = vpop.permute.xlu0 %425
      %vm427 = vcmp.lt.s32.totalorder %v412, 15
      %v428 = vsel %vm427, %v424, %v426
      %v429 = vsel %vm427, %v426, %v424
      %430 = vrot.lane.b32.xlu0 %v405, 1
      %v431 = vpop.permute.xlu0 %430
      %432 = vrot.lane.b32.xlu0 %v406, 1
      %v433 = vpop.permute.xlu0 %432
      %vm434 = vcmp.lt.s32.totalorder %v412, 1
      %v435 = vsel %vm434, %v431, %v433
      %v436 = vsel %vm434, %v433, %v431
      %437 = vrot.lane.b32.xlu0 %v405, 127
      %v438 = vpop.permute.xlu0 %437
      %439 = vrot.lane.b32.xlu0 %v406, 127
      %v440 = vpop.permute.xlu0 %439
      %vm441 = vcmp.lt.s32.totalorder %v412, 127
      %v442 = vsel %vm441, %v438, %v440
      %v443 = vsel %vm441, %v440, %v438
      %444 = vrot.lane.b32.xlu0 %v405, 113
      %v445 = vpop.permute.xlu0 %444
      %446 = vrot.lane.b32.xlu0 %v406, 113
      %v447 = vpop.permute.xlu0 %446
      %vm448 = vcmp.lt.s32.totalorder %v412, 113
      %v449 = vsel %vm448, %v445, %v447
      %v450 = vsel %vm448, %v447, %v445
      %451 = vrot.lane.b32.xlu0 %v405, 112
      %v452 = vpop.permute.xlu0 %451
      %453 = vrot.lane.b32.xlu0 %v406, 112
      %v454 = vpop.permute.xlu0 %453
      %vm455 = vcmp.lt.s32.totalorder %v412, 112
      %v456 = vsel %vm455, %v452, %v454
      %v457 = vsel %vm455, %v454, %v452
      %458 = vrot.lane.b32.xlu0 %v405, 111
      %v459 = vpop.permute.xlu0 %458
      %460 = vrot.lane.b32.xlu0 %v406, 111
      %v461 = vpop.permute.xlu0 %460
      %vm462 = vcmp.lt.s32.totalorder %v412, 111
      %v463 = vsel %vm462, %v459, %v461
      %v464 = vsel %vm462, %v461, %v459
      %v465 = vld [vmem:[%s7] sm:$0xff]
      %v466 = vld [vmem:[%s7 + $0x8] sm:$0xff]
      %v467 = vld [vmem:[%s7 + $0x10] sm:$0xff]
      %v468 = vld [vmem:[%s7 + $0x18] sm:$0xff]
      %v469 = vld [vmem:[%s7 + $0x20] sm:$0xff]
      %v470 = vld [vmem:[%s7 + $0x28] sm:$0xff]
      %v471 = vld [vmem:[%s7 + $0x30] sm:$0xff]
      %v472 = vld [vmem:[%s7 + $0x38] sm:$0xff]
      %v473 = vld [vmem:[%s7 + $0x40] sm:$0xff]
      %v474 = vld [vmem:[%s7 + $0x48] sm:$0xff]
      %v475 = vld [vmem:[%s7 + $0x50] sm:$0xff]
      %v476 = vld [vmem:[%s7 + $0x58] sm:$0xff]
      %v477 = vld [vmem:[%s7 + $0x60] sm:$0xff]
      %v478 = vld [vmem:[%s7 + $0x68] sm:$0xff]
      %v479 = vld [vmem:[%s7 + $0x70] sm:$0xff]
      %v480 = vld [vmem:[%s7 + $0x78] sm:$0xff]
      %v481 = vld [vmem:[%s7 + $0x80] sm:$0xff]
      %v482 = vld [vmem:[%s7 + $0x88] sm:$0xff]
      %v483 = vmul.f32 %v415, %v465
      %v484 = vmul.f32 %v414, %v466
      %v485 = vmul.f32 %v422, %v467
      %v486 = vmul.f32 %v421, %v468
      %v487 = vmul.f32 %v429, %v469
      %v488 = vmul.f32 %v428, %v470
      %v489 = vmul.f32 %v436, %v471
      %v490 = vmul.f32 %v435, %v472
      %v491 = vmul.f32 %v405, %v473
      %v492 = vmul.f32 %v406, %v474
      %v493 = vmul.f32 %v442, %v475
      %v494 = vmul.f32 %v443, %v476
      %v495 = vmul.f32 %v449, %v477
      %v496 = vmul.f32 %v450, %v478
      %v497 = vmul.f32 %v456, %v479
      %v498 = vmul.f32 %v457, %v480
      %v499 = vmul.f32 %v463, %v481
      %v500 = vmul.f32 %v464, %v482
      %v501 = vld [vmem:[%s2] sm:$0xf]
      %v502 = vpack.c.bf16 %v485, %v483
      %v503 = vpack.c.bf16 %v486, %v484
      %v504 = vpack.c.bf16 %v489, %v487
      %v505 = vpack.c.bf16 %v490, %v488
      %v506 = vpack.c.bf16 %v493, %v491
      %v507 = vpack.c.bf16 %v494, %v492
      %v508 = vpack.c.bf16 %v497, %v495
      %v509 = vpack.c.bf16 %v498, %v496
      %v510 = vpack.c.bf16 %v499, %v499
      %v511 = vpack.c.bf16 %v500, %v500
      %vm512 = vcmask 588800
      %v514 = vsel %vm512, %v501, 0
      %vm516 = vcmask 1043456
      %v518 = vsel %vm516, %v510, 0
      %v521 = vsel %vm516, %v511, 0
      %523 = vmatprep.subr.bf16.mxu0 0
      %524 = vmatpush1.bf16.msra.mxu0 0
      %525 = vmatprep.subr.bf16.mxu0 0
      %526 = vmatpush1.bf16.msra.mxu0 0
      %527 = vmatprep.subr.bf16.mxu0 0
      %528 = vmatpush1.bf16.msra.mxu0 0
      %529 = vmatprep.subr.bf16.mxu0 %v521
      %530 = vmatpush1.bf16.msra.mxu0 %v518
      %531 = vmatprep.subr.bf16.mxu0 %v509
      %532 = vmatpush1.bf16.msra.mxu0 %v508
      %533 = vmatprep.subr.bf16.mxu0 %v507
      %534 = vmatpush1.bf16.msra.mxu0 %v506
      %535 = vmatprep.subr.bf16.mxu0 %v505
      %536 = vmatpush1.bf16.msra.mxu0 %v504
      %537 = vmatprep.subr.bf16.mxu0 %v503
      %538 = vmatpush1.bf16.msra.mxu0 %v502
      %539 = vmatprep.subr.bf16.mxu0 0
      %540 = vmatpush2.bf16.msra.mxu0 0
      %541 = vmatprep.subr.bf16.mxu0 0
      %542 = vmatpush2.bf16.msra.mxu0 0
      %543 = vmatprep.subr.bf16.mxu0 0
      %544 = vmatpush2.bf16.msra.mxu0 0
      %545 = vmatprep.subr.bf16.mxu0 0
      %546 = vmatpush2.bf16.msra.mxu0 0
      %547 = vmatprep.subr.bf16.mxu0 0
      %548 = vmatpush2.bf16.msra.mxu0 0
      %549 = vmatprep.subr.bf16.mxu0 0
      %550 = vmatpush2.bf16.msra.mxu0 0
      %551 = vmatprep.subr.bf16.mxu0 0
      %552 = vmatpush2.bf16.msra.mxu0 0
      %553 = vmatprep.subr.bf16.mxu0 0
      %554 = vmatpush2.bf16.msra.mxu0 0
      %555 = vmatprep.mubr.bf16.mxu0 0
      %556 = vmatmul.mubr.bf16.gmra.mxu0 %v514
      %v557 = vpop.f32.mrf.mxu0
      %v558 = vadd.f32 0.0, %v557
      %v559 = vpop.f32.mrf.mxu0
      %v560 = vadd.f32 0.0, %v559
      %v561 = vpop.f32.mrf.mxu0
      %v562 = vpop.f32.mrf.mxu0
      %563 = vdwg.mxu0
      %v564 = vadd.f32 %v558, %v560
      %565 = vadd.xlane.f32.xlu0 %v564
      %v566 = vpop.xlane.xlu0 %565
      %v567 = vmul.f32 %v558, %v558
      %v568 = vmul.f32 %v560, %v560
      %v569 = vadd.f32 %v567, %v568
      %570 = vadd.xlane.f32.xlu0 %v569
      %v571 = vpop.xlane.xlu0 %570
      %v572 = vmul.f32 %v566, 0.00390625
      %v573 = vmul.f32 %v571, 0.00390625
      %v574 = vmul.f32 %v572, %v572
      %v575 = vsub.f32 %v573, %v574
      %v576 = vmax.f32 %v575, 0.0
      %v577 = vsub.f32 %v558, %v572
      %v578 = vsub.f32 %v560, %v572
      %v579 = vadd.f32 %v576, 1e-05
      %v580 = vrsqrt.pop %v579
      %v581 = vmul.f32 %v577, %v580
      %v582 = vmul.f32 %v578, %v580
      %vm583 = vcmp.ge.f32.partialorder %v581, 0.0
      %vm584 = vcmp.ge.f32.partialorder %v582, 0.0
      %v585 = vmul.f32 %v581, 0.01
      %v586 = vmul.f32 %v582, 0.01
      %v587 = vsel %vm583, %v581, %v585
      %v588 = vsel %vm584, %v582, %v586
      %589 = vrot.lane.b32.xlu0 %v587, 17
      %v590 = vpop.permute.xlu0 %589
      %591 = vrot.lane.b32.xlu0 %v588, 17
      %v592 = vpop.permute.xlu0 %591
      %v593 = vsel %vm413, %v590, %v592
      %v594 = vsel %vm413, %v592, %v590
      %595 = vrot.lane.b32.xlu0 %v587, 16
      %v596 = vpop.permute.xlu0 %595
      %597 = vrot.lane.b32.xlu0 %v588, 16
      %v598 = vpop.permute.xlu0 %597
      %v599 = vsel %vm420, %v596, %v598
      %v600 = vsel %vm420, %v598, %v596
      %601 = vrot.lane.b32.xlu0 %v587, 15
      %v602 = vpop.permute.xlu0 %601
      %603 = vrot.lane.b32.xlu0 %v588, 15
      %v604 = vpop.permute.xlu0 %603
      %v605 = vsel %vm427, %v602, %v604
      %v606 = vsel %vm427, %v604, %v602
      %607 = vrot.lane.b32.xlu0 %v587, 1
      %v608 = vpop.permute.xlu0 %607
      %609 = vrot.lane.b32.xlu0 %v588, 1
      %v610 = vpop.permute.xlu0 %609
      %v611 = vsel %vm434, %v608, %v610
      %v612 = vsel %vm434, %v610, %v608
      %613 = vrot.lane.b32.xlu0 %v587, 127
      %v614 = vpop.permute.xlu0 %613
      %615 = vrot.lane.b32.xlu0 %v588, 127
      %v616 = vpop.permute.xlu0 %615
      %v617 = vsel %vm441, %v614, %v616
      %v618 = vsel %vm441, %v616, %v614
      %619 = vrot.lane.b32.xlu0 %v587, 113
      %v620 = vpop.permute.xlu0 %619
      %621 = vrot.lane.b32.xlu0 %v588, 113
      %v622 = vpop.permute.xlu0 %621
      %v623 = vsel %vm448, %v620, %v622
      %v624 = vsel %vm448, %v622, %v620
      %625 = vrot.lane.b32.xlu0 %v587, 112
      %v626 = vpop.permute.xlu0 %625
      %627 = vrot.lane.b32.xlu0 %v588, 112
      %v628 = vpop.permute.xlu0 %627
      %v629 = vsel %vm455, %v626, %v628
      %v630 = vsel %vm455, %v628, %v626
      %631 = vrot.lane.b32.xlu0 %v587, 111
      %v632 = vpop.permute.xlu0 %631
      %633 = vrot.lane.b32.xlu0 %v588, 111
      %v634 = vpop.permute.xlu0 %633
      %v635 = vsel %vm462, %v632, %v634
      %v636 = vsel %vm462, %v634, %v632
      %v637 = vld [vmem:[%s8] sm:$0xff]
      %v638 = vld [vmem:[%s8 + $0x8] sm:$0xff]
      %v639 = vld [vmem:[%s8 + $0x10] sm:$0xff]
      %v640 = vld [vmem:[%s8 + $0x18] sm:$0xff]
      %v641 = vld [vmem:[%s8 + $0x20] sm:$0xff]
      %v642 = vld [vmem:[%s8 + $0x28] sm:$0xff]
      %v643 = vld [vmem:[%s8 + $0x30] sm:$0xff]
      %v644 = vld [vmem:[%s8 + $0x38] sm:$0xff]
      %v645 = vld [vmem:[%s8 + $0x40] sm:$0xff]
      %v646 = vld [vmem:[%s8 + $0x48] sm:$0xff]
      %v647 = vld [vmem:[%s8 + $0x50] sm:$0xff]
      %v648 = vld [vmem:[%s8 + $0x58] sm:$0xff]
      %v649 = vld [vmem:[%s8 + $0x60] sm:$0xff]
      %v650 = vld [vmem:[%s8 + $0x68] sm:$0xff]
      %v651 = vld [vmem:[%s8 + $0x70] sm:$0xff]
      %v652 = vld [vmem:[%s8 + $0x78] sm:$0xff]
      %v653 = vld [vmem:[%s8 + $0x80] sm:$0xff]
      %v654 = vld [vmem:[%s8 + $0x88] sm:$0xff]
      %v655 = vmul.f32 %v594, %v637
      %v656 = vmul.f32 %v593, %v638
      %v657 = vmul.f32 %v600, %v639
      %v658 = vmul.f32 %v599, %v640
      %v659 = vmul.f32 %v606, %v641
      %v660 = vmul.f32 %v605, %v642
      %v661 = vmul.f32 %v612, %v643
      %v662 = vmul.f32 %v611, %v644
      %v663 = vmul.f32 %v587, %v645
      %v664 = vmul.f32 %v588, %v646
      %v665 = vmul.f32 %v617, %v647
      %v666 = vmul.f32 %v618, %v648
      %v667 = vmul.f32 %v623, %v649
      %v668 = vmul.f32 %v624, %v650
      %v669 = vmul.f32 %v629, %v651
      %v670 = vmul.f32 %v630, %v652
      %v671 = vmul.f32 %v635, %v653
      %v672 = vmul.f32 %v636, %v654
      %v673 = vld [vmem:[%s3] sm:$0xf]
      %v674 = vpack.c.bf16 %v657, %v655
      %v675 = vpack.c.bf16 %v658, %v656
      %v676 = vpack.c.bf16 %v661, %v659
      %v677 = vpack.c.bf16 %v662, %v660
      %v678 = vpack.c.bf16 %v665, %v663
      %v679 = vpack.c.bf16 %v666, %v664
      %v680 = vpack.c.bf16 %v669, %v667
      %v681 = vpack.c.bf16 %v670, %v668
      %v682 = vpack.c.bf16 %v671, %v671
      %v683 = vpack.c.bf16 %v672, %v672
      %v685 = vsel %vm512, %v673, 0
      %v688 = vsel %vm516, %v682, 0
      %v691 = vsel %vm516, %v683, 0
      %693 = vmatprep.subr.bf16.mxu0 0
      %694 = vmatpush1.bf16.msra.mxu0 0
      %695 = vmatprep.subr.bf16.mxu0 0
      %696 = vmatpush1.bf16.msra.mxu0 0
      %697 = vmatprep.subr.bf16.mxu0 0
      %698 = vmatpush1.bf16.msra.mxu0 0
      %699 = vmatprep.subr.bf16.mxu0 %v691
      %700 = vmatpush1.bf16.msra.mxu0 %v688
      %701 = vmatprep.subr.bf16.mxu0 %v681
      %702 = vmatpush1.bf16.msra.mxu0 %v680
      %703 = vmatprep.subr.bf16.mxu0 %v679
      %704 = vmatpush1.bf16.msra.mxu0 %v678
      %705 = vmatprep.subr.bf16.mxu0 %v677
      %706 = vmatpush1.bf16.msra.mxu0 %v676
      %707 = vmatprep.subr.bf16.mxu0 %v675
      %708 = vmatpush1.bf16.msra.mxu0 %v674
      %709 = vmatprep.subr.bf16.mxu0 0
      %710 = vmatpush2.bf16.msra.mxu0 0
      %711 = vmatprep.subr.bf16.mxu0 0
      %712 = vmatpush2.bf16.msra.mxu0 0
      %713 = vmatprep.subr.bf16.mxu0 0
      %714 = vmatpush2.bf16.msra.mxu0 0
      %715 = vmatprep.subr.bf16.mxu0 0
      %716 = vmatpush2.bf16.msra.mxu0 0
      %717 = vmatprep.subr.bf16.mxu0 0
      %718 = vmatpush2.bf16.msra.mxu0 0
      %719 = vmatprep.subr.bf16.mxu0 0
      %720 = vmatpush2.bf16.msra.mxu0 0
      %721 = vmatprep.subr.bf16.mxu0 0
      %722 = vmatpush2.bf16.msra.mxu0 0
      %723 = vmatprep.subr.bf16.mxu0 0
      %724 = vmatpush2.bf16.msra.mxu0 0
      %725 = vmatprep.mubr.bf16.mxu0 0
      %726 = vmatmul.mubr.bf16.gmra.mxu0 %v685
      %v727 = vpop.f32.mrf.mxu0
      %v728 = vadd.f32 0.0, %v727
      %v729 = vpop.f32.mrf.mxu0
      %v730 = vadd.f32 0.0, %v729
      %v731 = vpop.f32.mrf.mxu0
      %v732 = vpop.f32.mrf.mxu0
      %733 = vdwg.mxu0
      %v734 = vadd.f32 %v728, %v730
      %735 = vadd.xlane.f32.xlu0 %v734
      %v736 = vpop.xlane.xlu0 %735
      %v737 = vmul.f32 %v728, %v728
      %v738 = vmul.f32 %v730, %v730
      %v739 = vadd.f32 %v737, %v738
      %740 = vadd.xlane.f32.xlu0 %v739
      %v741 = vpop.xlane.xlu0 %740
      %v742 = vmul.f32 %v736, 0.00390625
      %v743 = vmul.f32 %v741, 0.00390625
      %v744 = vmul.f32 %v742, %v742
      %v745 = vsub.f32 %v743, %v744
      %v746 = vmax.f32 %v745, 0.0
      %v747 = vsub.f32 %v728, %v742
      %v748 = vsub.f32 %v730, %v742
      %v749 = vadd.f32 %v746, 1e-05
      %v750 = vrsqrt.pop %v749
      %v751 = vmul.f32 %v747, %v750
      %v752 = vmul.f32 %v748, %v750
      %vm753 = vcmp.ge.f32.partialorder %v751, 0.0
      %vm754 = vcmp.ge.f32.partialorder %v752, 0.0
      %v755 = vmul.f32 %v751, 0.01
      %v756 = vmul.f32 %v752, 0.01
      %v757 = vsel %vm753, %v751, %v755
      %v758 = vsel %vm754, %v752, %v756
      %v759 = vpack.c.bf16 %v757, %v757
      %v760 = vpack.c.bf16 %v758, %v758
      %v761 = vld [vmem:[%s6] sm:$0xff]
      %v762 = vld [vmem:[%s6 + $0x8] sm:$0xff]
      %v763 = vld [vmem:[%s6 + $0x10] sm:$0xff]
      %v764 = vld [vmem:[%s6 + $0x18] sm:$0xff]
      %v765 = vld [vmem:[%s6 + $0x20] sm:$0xff]
      %v766 = vld [vmem:[%s6 + $0x28] sm:$0xff]
      %v767 = vld [vmem:[%s6 + $0x30] sm:$0xff]
      %v768 = vld [vmem:[%s6 + $0x38] sm:$0xff]
      %v769 = vld [vmem:[%s6 + $0x40] sm:$0xff]
      %v770 = vld [vmem:[%s6 + $0x48] sm:$0xff]
      %v771 = vld [vmem:[%s6 + $0x50] sm:$0xff]
      %v772 = vld [vmem:[%s6 + $0x58] sm:$0xff]
      %v773 = vld [vmem:[%s6 + $0x60] sm:$0xff]
      %v774 = vld [vmem:[%s6 + $0x68] sm:$0xff]
      %v775 = vld [vmem:[%s6 + $0x70] sm:$0xff]
      %v776 = vld [vmem:[%s6 + $0x78] sm:$0xff]
      %v777 = vld [vmem:[%s6 + $0x80] sm:$0xff]
      %v778 = vld [vmem:[%s6 + $0x88] sm:$0xff]
      %v779 = vld [vmem:[%s6 + $0x90] sm:$0xff]
      %v780 = vld [vmem:[%s6 + $0x98] sm:$0xff]
      %v781 = vld [vmem:[%s6 + $0xa0] sm:$0xff]
      %v782 = vld [vmem:[%s6 + $0xa8] sm:$0xff]
      %v783 = vld [vmem:[%s6 + $0xb0] sm:$0xff]
      %v784 = vld [vmem:[%s6 + $0xb8] sm:$0xff]
      %v785 = vld [vmem:[%s6 + $0xc0] sm:$0xff]
      %v786 = vld [vmem:[%s6 + $0xc8] sm:$0xff]
      %v787 = vld [vmem:[%s6 + $0xd0] sm:$0xff]
      %v788 = vld [vmem:[%s6 + $0xd8] sm:$0xff]
      %v789 = vld [vmem:[%s6 + $0xe0] sm:$0xff]
      %v790 = vld [vmem:[%s6 + $0xe8] sm:$0xff]
      %v791 = vld [vmem:[%s6 + $0xf0] sm:$0xff]
      %v792 = vld [vmem:[%s6 + $0xf8] sm:$0xff]
      %v793 = vld [vmem:[%s6 + $0x100] sm:$0xff]
      %v794 = vld [vmem:[%s6 + $0x108] sm:$0xff]
      %v795 = vld [vmem:[%s6 + $0x110] sm:$0xff]
      %v796 = vld [vmem:[%s6 + $0x118] sm:$0xff]
      %v797 = vld [vmem:[%s6 + $0x120] sm:$0xff]
      %v798 = vld [vmem:[%s6 + $0x128] sm:$0xff]
      %v799 = vld [vmem:[%s6 + $0x130] sm:$0xff]
      %v800 = vld [vmem:[%s6 + $0x138] sm:$0xff]
      %v801 = vld [vmem:[%s6 + $0x140] sm:$0xff]
      %v802 = vld [vmem:[%s6 + $0x148] sm:$0xff]
      %v803 = vld [vmem:[%s6 + $0x150] sm:$0xff]
      %v804 = vld [vmem:[%s6 + $0x158] sm:$0xff]
      %v805 = vld [vmem:[%s6 + $0x160] sm:$0xff]
      %v806 = vld [vmem:[%s6 + $0x168] sm:$0xff]
      %v807 = vld [vmem:[%s6 + $0x170] sm:$0xff]
      %v808 = vld [vmem:[%s6 + $0x178] sm:$0xff]
      %v809 = vld [vmem:[%s6 + $0x180] sm:$0xff]
      %v810 = vld [vmem:[%s6 + $0x188] sm:$0xff]
      %v811 = vld [vmem:[%s6 + $0x190] sm:$0xff]
      %v812 = vld [vmem:[%s6 + $0x198] sm:$0xff]
      %v813 = vld [vmem:[%s6 + $0x1a0] sm:$0xff]
      %v814 = vld [vmem:[%s6 + $0x1a8] sm:$0xff]
      %v815 = vld [vmem:[%s6 + $0x1b0] sm:$0xff]
      %v816 = vld [vmem:[%s6 + $0x1b8] sm:$0xff]
      %v817 = vld [vmem:[%s6 + $0x1c0] sm:$0xff]
      %v818 = vld [vmem:[%s6 + $0x1c8] sm:$0xff]
      %v819 = vld [vmem:[%s6 + $0x1d0] sm:$0xff]
      %v820 = vld [vmem:[%s6 + $0x1d8] sm:$0xff]
      %v821 = vld [vmem:[%s6 + $0x1e0] sm:$0xff]
      %v822 = vld [vmem:[%s6 + $0x1e8] sm:$0xff]
      %v823 = vld [vmem:[%s6 + $0x1f0] sm:$0xff]
      %v824 = vld [vmem:[%s6 + $0x1f8] sm:$0xff]
      %v825 = vld [vmem:[%s6 + $0x200] sm:$0xff]
      %v826 = vld [vmem:[%s6 + $0x208] sm:$0xff]
      %v827 = vld [vmem:[%s6 + $0x210] sm:$0xff]
      %v828 = vld [vmem:[%s6 + $0x218] sm:$0xff]
      %v829 = vld [vmem:[%s6 + $0x220] sm:$0xff]
      %v830 = vld [vmem:[%s6 + $0x228] sm:$0xff]
      %v831 = vld [vmem:[%s6 + $0x230] sm:$0xff]
      %v832 = vld [vmem:[%s6 + $0x238] sm:$0xff]
      %v833 = vld [vmem:[%s6 + $0x240] sm:$0xff]
      %v834 = vld [vmem:[%s6 + $0x248] sm:$0xff]
      %v835 = vld [vmem:[%s6 + $0x250] sm:$0xff]
      %v836 = vld [vmem:[%s6 + $0x258] sm:$0xff]
      %v837 = vld [vmem:[%s6 + $0x260] sm:$0xff]
      %v838 = vld [vmem:[%s6 + $0x268] sm:$0xff]
      %v839 = vld [vmem:[%s6 + $0x270] sm:$0xff]
      %v840 = vld [vmem:[%s6 + $0x278] sm:$0xff]
      %v841 = vld [vmem:[%s6 + $0x280] sm:$0xff]
      %v842 = vld [vmem:[%s6 + $0x288] sm:$0xff]
      %v843 = vld [vmem:[%s6 + $0x290] sm:$0xff]
      %v844 = vld [vmem:[%s6 + $0x298] sm:$0xff]
      %v845 = vld [vmem:[%s6 + $0x2a0] sm:$0xff]
      %v846 = vld [vmem:[%s6 + $0x2a8] sm:$0xff]
      %v847 = vld [vmem:[%s6 + $0x2b0] sm:$0xff]
      %v848 = vld [vmem:[%s6 + $0x2b8] sm:$0xff]
      %v849 = vld [vmem:[%s6 + $0x2c0] sm:$0xff]
      %v850 = vld [vmem:[%s6 + $0x2c8] sm:$0xff]
      %v851 = vld [vmem:[%s6 + $0x2d0] sm:$0xff]
      %v852 = vld [vmem:[%s6 + $0x2d8] sm:$0xff]
      %v853 = vld [vmem:[%s6 + $0x2e0] sm:$0xff]
      %v854 = vld [vmem:[%s6 + $0x2e8] sm:$0xff]
      %v855 = vld [vmem:[%s6 + $0x2f0] sm:$0xff]
      %v856 = vld [vmem:[%s6 + $0x2f8] sm:$0xff]
      %v857 = vld [vmem:[%s6 + $0x300] sm:$0xff]
      %v858 = vld [vmem:[%s6 + $0x308] sm:$0xff]
      %v859 = vld [vmem:[%s6 + $0x310] sm:$0xff]
      %v860 = vld [vmem:[%s6 + $0x318] sm:$0xff]
      %v861 = vld [vmem:[%s6 + $0x320] sm:$0xff]
      %v862 = vld [vmem:[%s6 + $0x328] sm:$0xff]
      %v863 = vld [vmem:[%s6 + $0x330] sm:$0xff]
      %v864 = vld [vmem:[%s6 + $0x338] sm:$0xff]
      %v865 = vld [vmem:[%s6 + $0x340] sm:$0xff]
      %v866 = vld [vmem:[%s6 + $0x348] sm:$0xff]
      %v867 = vld [vmem:[%s6 + $0x350] sm:$0xff]
      %v868 = vld [vmem:[%s6 + $0x358] sm:$0xff]
      %v869 = vld [vmem:[%s6 + $0x360] sm:$0xff]
      %v870 = vld [vmem:[%s6 + $0x368] sm:$0xff]
      %v871 = vld [vmem:[%s6 + $0x370] sm:$0xff]
      %v872 = vld [vmem:[%s6 + $0x378] sm:$0xff]
      %v873 = vld [vmem:[%s6 + $0x380] sm:$0xff]
      %v874 = vld [vmem:[%s6 + $0x388] sm:$0xff]
      %v875 = vld [vmem:[%s6 + $0x390] sm:$0xff]
      %v876 = vld [vmem:[%s6 + $0x398] sm:$0xff]
      %v877 = vld [vmem:[%s6 + $0x3a0] sm:$0xff]
      %v878 = vld [vmem:[%s6 + $0x3a8] sm:$0xff]
      %v879 = vld [vmem:[%s6 + $0x3b0] sm:$0xff]
      %v880 = vld [vmem:[%s6 + $0x3b8] sm:$0xff]
      %v881 = vld [vmem:[%s6 + $0x3c0] sm:$0xff]
      %v882 = vld [vmem:[%s6 + $0x3c8] sm:$0xff]
      %v883 = vld [vmem:[%s6 + $0x3d0] sm:$0xff]
      %v884 = vld [vmem:[%s6 + $0x3d8] sm:$0xff]
      %v885 = vld [vmem:[%s6 + $0x3e0] sm:$0xff]
      %v886 = vld [vmem:[%s6 + $0x3e8] sm:$0xff]
      %v887 = vld [vmem:[%s6 + $0x3f0] sm:$0xff]
      %v888 = vld [vmem:[%s6 + $0x3f8] sm:$0xff]
      %v1017 = vunpack.c.l.b16 %v761
      %v1018 = vunpack.c.h.b16 %v761
      %v1019 = vunpack.c.l.b16 %v762
      %v1020 = vunpack.c.h.b16 %v762
      %v1021 = vunpack.c.l.b16 %v763
      %v1022 = vunpack.c.h.b16 %v763
      %v1023 = vunpack.c.l.b16 %v764
      %v1024 = vunpack.c.h.b16 %v764
      %v1025 = vunpack.c.l.b16 %v765
      %v1026 = vunpack.c.h.b16 %v765
      %v1027 = vunpack.c.l.b16 %v766
      %v1028 = vunpack.c.h.b16 %v766
      %v1029 = vunpack.c.l.b16 %v767
      %v1030 = vunpack.c.h.b16 %v767
      %v1031 = vunpack.c.l.b16 %v768
      %v1032 = vunpack.c.h.b16 %v768
      %v1033 = vunpack.c.l.b16 %v769
      %v1034 = vunpack.c.h.b16 %v769
      %v1035 = vunpack.c.l.b16 %v770
      %v1036 = vunpack.c.h.b16 %v770
      %v1037 = vunpack.c.l.b16 %v771
      %v1038 = vunpack.c.h.b16 %v771
      %v1039 = vunpack.c.l.b16 %v772
      %v1040 = vunpack.c.h.b16 %v772
      %v1041 = vunpack.c.l.b16 %v773
      %v1042 = vunpack.c.h.b16 %v773
      %v1043 = vunpack.c.l.b16 %v774
      %v1044 = vunpack.c.h.b16 %v774
      %v1045 = vunpack.c.l.b16 %v775
      %v1046 = vunpack.c.h.b16 %v775
      %v1047 = vunpack.c.l.b16 %v776
      %v1048 = vunpack.c.h.b16 %v776
      %v1049 = vunpack.c.l.b16 %v777
      %v1050 = vunpack.c.h.b16 %v777
      %v1051 = vunpack.c.l.b16 %v778
      %v1052 = vunpack.c.h.b16 %v778
      %v1053 = vunpack.c.l.b16 %v779
      %v1054 = vunpack.c.h.b16 %v779
      %v1055 = vunpack.c.l.b16 %v780
      %v1056 = vunpack.c.h.b16 %v780
      %v1057 = vunpack.c.l.b16 %v781
      %v1058 = vunpack.c.h.b16 %v781
      %v1059 = vunpack.c.l.b16 %v782
      %v1060 = vunpack.c.h.b16 %v782
      %v1061 = vunpack.c.l.b16 %v783
      %v1062 = vunpack.c.h.b16 %v783
      %v1063 = vunpack.c.l.b16 %v784
      %v1064 = vunpack.c.h.b16 %v784
      %v1065 = vunpack.c.l.b16 %v785
      %v1066 = vunpack.c.h.b16 %v785
      %v1067 = vunpack.c.l.b16 %v786
      %v1068 = vunpack.c.h.b16 %v786
      %v1069 = vunpack.c.l.b16 %v787
      %v1070 = vunpack.c.h.b16 %v787
      %v1071 = vunpack.c.l.b16 %v788
      %v1072 = vunpack.c.h.b16 %v788
      %v1073 = vunpack.c.l.b16 %v789
      %v1074 = vunpack.c.h.b16 %v789
      %v1075 = vunpack.c.l.b16 %v790
      %v1076 = vunpack.c.h.b16 %v790
      %v1077 = vunpack.c.l.b16 %v791
      %v1078 = vunpack.c.h.b16 %v791
      %v1079 = vunpack.c.l.b16 %v792
      %v1080 = vunpack.c.h.b16 %v792
      %v1081 = vunpack.c.l.b16 %v793
      %v1082 = vunpack.c.h.b16 %v793
      %v1083 = vunpack.c.l.b16 %v794
      %v1084 = vunpack.c.h.b16 %v794
      %v1085 = vunpack.c.l.b16 %v795
      %v1086 = vunpack.c.h.b16 %v795
      %v1087 = vunpack.c.l.b16 %v796
      %v1088 = vunpack.c.h.b16 %v796
      %v1089 = vunpack.c.l.b16 %v797
      %v1090 = vunpack.c.h.b16 %v797
      %v1091 = vunpack.c.l.b16 %v798
      %v1092 = vunpack.c.h.b16 %v798
      %v1093 = vunpack.c.l.b16 %v799
      %v1094 = vunpack.c.h.b16 %v799
      %v1095 = vunpack.c.l.b16 %v800
      %v1096 = vunpack.c.h.b16 %v800
      %v1097 = vunpack.c.l.b16 %v801
      %v1098 = vunpack.c.h.b16 %v801
      %v1099 = vunpack.c.l.b16 %v802
      %v1100 = vunpack.c.h.b16 %v802
      %v1101 = vunpack.c.l.b16 %v803
      %v1102 = vunpack.c.h.b16 %v803
      %v1103 = vunpack.c.l.b16 %v804
      %v1104 = vunpack.c.h.b16 %v804
      %v1105 = vunpack.c.l.b16 %v805
      %v1106 = vunpack.c.h.b16 %v805
      %v1107 = vunpack.c.l.b16 %v806
      %v1108 = vunpack.c.h.b16 %v806
      %v1109 = vunpack.c.l.b16 %v807
      %v1110 = vunpack.c.h.b16 %v807
      %v1111 = vunpack.c.l.b16 %v808
      %v1112 = vunpack.c.h.b16 %v808
      %v1113 = vunpack.c.l.b16 %v809
      %v1114 = vunpack.c.h.b16 %v809
      %v1115 = vunpack.c.l.b16 %v810
      %v1116 = vunpack.c.h.b16 %v810
      %v1117 = vunpack.c.l.b16 %v811
      %v1118 = vunpack.c.h.b16 %v811
      %v1119 = vunpack.c.l.b16 %v812
      %v1120 = vunpack.c.h.b16 %v812
      %v1121 = vunpack.c.l.b16 %v813
      %v1122 = vunpack.c.h.b16 %v813
      %v1123 = vunpack.c.l.b16 %v814
      %v1124 = vunpack.c.h.b16 %v814
      %v1125 = vunpack.c.l.b16 %v815
      %v1126 = vunpack.c.h.b16 %v815
      %v1127 = vunpack.c.l.b16 %v816
      %v1128 = vunpack.c.h.b16 %v816
      %v1129 = vunpack.c.l.b16 %v817
      %v1130 = vunpack.c.h.b16 %v817
      %v1131 = vunpack.c.l.b16 %v818
      %v1132 = vunpack.c.h.b16 %v818
      %v1133 = vunpack.c.l.b16 %v819
      %v1134 = vunpack.c.h.b16 %v819
      %v1135 = vunpack.c.l.b16 %v820
      %v1136 = vunpack.c.h.b16 %v820
      %v1137 = vunpack.c.l.b16 %v821
      %v1138 = vunpack.c.h.b16 %v821
      %v1139 = vunpack.c.l.b16 %v822
      %v1140 = vunpack.c.h.b16 %v822
      %v1141 = vunpack.c.l.b16 %v823
      %v1142 = vunpack.c.h.b16 %v823
      %v1143 = vunpack.c.l.b16 %v824
      %v1144 = vunpack.c.h.b16 %v824
      %v1145 = vunpack.c.l.b16 %v825
      %v1146 = vunpack.c.h.b16 %v825
      %v1147 = vunpack.c.l.b16 %v826
      %v1148 = vunpack.c.h.b16 %v826
      %v1149 = vunpack.c.l.b16 %v827
      %v1150 = vunpack.c.h.b16 %v827
      %v1151 = vunpack.c.l.b16 %v828
      %v1152 = vunpack.c.h.b16 %v828
      %v1153 = vunpack.c.l.b16 %v829
      %v1154 = vunpack.c.h.b16 %v829
      %v1155 = vunpack.c.l.b16 %v830
      %v1156 = vunpack.c.h.b16 %v830
      %v1157 = vunpack.c.l.b16 %v831
      %v1158 = vunpack.c.h.b16 %v831
      %v1159 = vunpack.c.l.b16 %v832
      %v1160 = vunpack.c.h.b16 %v832
      %v1161 = vunpack.c.l.b16 %v833
      %v1162 = vunpack.c.h.b16 %v833
      %v1163 = vunpack.c.l.b16 %v834
      %v1164 = vunpack.c.h.b16 %v834
      %v1165 = vunpack.c.l.b16 %v835
      %v1166 = vunpack.c.h.b16 %v835
      %v1167 = vunpack.c.l.b16 %v836
      %v1168 = vunpack.c.h.b16 %v836
      %v1169 = vunpack.c.l.b16 %v837
      %v1170 = vunpack.c.h.b16 %v837
      %v1171 = vunpack.c.l.b16 %v838
      %v1172 = vunpack.c.h.b16 %v838
      %v1173 = vunpack.c.l.b16 %v839
      %v1174 = vunpack.c.h.b16 %v839
      %v1175 = vunpack.c.l.b16 %v840
      %v1176 = vunpack.c.h.b16 %v840
      %v1177 = vunpack.c.l.b16 %v841
      %v1178 = vunpack.c.h.b16 %v841
      %v1179 = vunpack.c.l.b16 %v842
      %v1180 = vunpack.c.h.b16 %v842
      %v1181 = vunpack.c.l.b16 %v843
      %v1182 = vunpack.c.h.b16 %v843
      %v1183 = vunpack.c.l.b16 %v844
      %v1184 = vunpack.c.h.b16 %v844
      %v1185 = vunpack.c.l.b16 %v845
      %v1186 = vunpack.c.h.b16 %v845
      %v1187 = vunpack.c.l.b16 %v846
      %v1188 = vunpack.c.h.b16 %v846
      %v1189 = vunpack.c.l.b16 %v847
      %v1190 = vunpack.c.h.b16 %v847
      %v1191 = vunpack.c.l.b16 %v848
      %v1192 = vunpack.c.h.b16 %v848
      %v1193 = vunpack.c.l.b16 %v849
      %v1194 = vunpack.c.h.b16 %v849
      %v1195 = vunpack.c.l.b16 %v850
      %v1196 = vunpack.c.h.b16 %v850
      %v1197 = vunpack.c.l.b16 %v851
      %v1198 = vunpack.c.h.b16 %v851
      %v1199 = vunpack.c.l.b16 %v852
      %v1200 = vunpack.c.h.b16 %v852
      %v1201 = vunpack.c.l.b16 %v853
      %v1202 = vunpack.c.h.b16 %v853
      %v1203 = vunpack.c.l.b16 %v854
      %v1204 = vunpack.c.h.b16 %v854
      %v1205 = vunpack.c.l.b16 %v855
      %v1206 = vunpack.c.h.b16 %v855
      %v1207 = vunpack.c.l.b16 %v856
      %v1208 = vunpack.c.h.b16 %v856
      %v1209 = vunpack.c.l.b16 %v857
      %v1210 = vunpack.c.h.b16 %v857
      %v1211 = vunpack.c.l.b16 %v858
      %v1212 = vunpack.c.h.b16 %v858
      %v1213 = vunpack.c.l.b16 %v859
      %v1214 = vunpack.c.h.b16 %v859
      %v1215 = vunpack.c.l.b16 %v860
      %v1216 = vunpack.c.h.b16 %v860
      %v1217 = vunpack.c.l.b16 %v861
      %v1218 = vunpack.c.h.b16 %v861
      %v1219 = vunpack.c.l.b16 %v862
      %v1220 = vunpack.c.h.b16 %v862
      %v1221 = vunpack.c.l.b16 %v863
      %v1222 = vunpack.c.h.b16 %v863
      %v1223 = vunpack.c.l.b16 %v864
      %v1224 = vunpack.c.h.b16 %v864
      %v1225 = vunpack.c.l.b16 %v865
      %v1226 = vunpack.c.h.b16 %v865
      %v1227 = vunpack.c.l.b16 %v866
      %v1228 = vunpack.c.h.b16 %v866
      %v1229 = vunpack.c.l.b16 %v867
      %v1230 = vunpack.c.h.b16 %v867
      %v1231 = vunpack.c.l.b16 %v868
      %v1232 = vunpack.c.h.b16 %v868
      %v1233 = vunpack.c.l.b16 %v869
      %v1234 = vunpack.c.h.b16 %v869
      %v1235 = vunpack.c.l.b16 %v870
      %v1236 = vunpack.c.h.b16 %v870
      %v1237 = vunpack.c.l.b16 %v871
      %v1238 = vunpack.c.h.b16 %v871
      %v1239 = vunpack.c.l.b16 %v872
      %v1240 = vunpack.c.h.b16 %v872
      %v1241 = vunpack.c.l.b16 %v873
      %v1242 = vunpack.c.h.b16 %v873
      %v1243 = vunpack.c.l.b16 %v874
      %v1244 = vunpack.c.h.b16 %v874
      %v1245 = vunpack.c.l.b16 %v875
      %v1246 = vunpack.c.h.b16 %v875
      %v1247 = vunpack.c.l.b16 %v876
      %v1248 = vunpack.c.h.b16 %v876
      %v1249 = vunpack.c.l.b16 %v877
      %v1250 = vunpack.c.h.b16 %v877
      %v1251 = vunpack.c.l.b16 %v878
      %v1252 = vunpack.c.h.b16 %v878
      %v1253 = vunpack.c.l.b16 %v879
      %v1254 = vunpack.c.h.b16 %v879
      %v1255 = vunpack.c.l.b16 %v880
      %v1256 = vunpack.c.h.b16 %v880
      %v1257 = vunpack.c.l.b16 %v881
      %v1258 = vunpack.c.h.b16 %v881
      %v1259 = vunpack.c.l.b16 %v882
      %v1260 = vunpack.c.h.b16 %v882
      %v1261 = vunpack.c.l.b16 %v883
      %v1262 = vunpack.c.h.b16 %v883
      %v1263 = vunpack.c.l.b16 %v884
      %v1264 = vunpack.c.h.b16 %v884
      %v1265 = vunpack.c.l.b16 %v885
      %v1266 = vunpack.c.h.b16 %v885
      %v1267 = vunpack.c.l.b16 %v886
      %v1268 = vunpack.c.h.b16 %v886
      %v1269 = vunpack.c.l.b16 %v887
      %v1270 = vunpack.c.h.b16 %v887
      %v1271 = vunpack.c.l.b16 %v888
      %v1272 = vunpack.c.h.b16 %v888
      %v1273 = vpack.c.b16 %v1025, %v1017
      %v1274 = vpack.c.b16 %v1026, %v1018
      %v1275 = vpack.c.b16 %v1027, %v1019
      %v1276 = vpack.c.b16 %v1028, %v1020
      %v1277 = vpack.c.b16 %v1029, %v1021
      %v1278 = vpack.c.b16 %v1030, %v1022
      %v1279 = vpack.c.b16 %v1031, %v1023
      %v1280 = vpack.c.b16 %v1032, %v1024
      %v1281 = vpack.c.b16 %v1041, %v1033
      %v1282 = vpack.c.b16 %v1042, %v1034
      %v1283 = vpack.c.b16 %v1043, %v1035
      %v1284 = vpack.c.b16 %v1044, %v1036
      %v1285 = vpack.c.b16 %v1045, %v1037
      %v1286 = vpack.c.b16 %v1046, %v1038
      %v1287 = vpack.c.b16 %v1047, %v1039
      %v1288 = vpack.c.b16 %v1048, %v1040
      %v1289 = vpack.c.b16 %v1057, %v1049
      %v1290 = vpack.c.b16 %v1058, %v1050
      %v1291 = vpack.c.b16 %v1059, %v1051
      %v1292 = vpack.c.b16 %v1060, %v1052
      %v1293 = vpack.c.b16 %v1061, %v1053
      %v1294 = vpack.c.b16 %v1062, %v1054
      %v1295 = vpack.c.b16 %v1063, %v1055
      %v1296 = vpack.c.b16 %v1064, %v1056
      %v1297 = vpack.c.b16 %v1073, %v1065
      %v1298 = vpack.c.b16 %v1074, %v1066
      %v1299 = vpack.c.b16 %v1075, %v1067
      %v1300 = vpack.c.b16 %v1076, %v1068
      %v1301 = vpack.c.b16 %v1077, %v1069
      %v1302 = vpack.c.b16 %v1078, %v1070
      %v1303 = vpack.c.b16 %v1079, %v1071
      %v1304 = vpack.c.b16 %v1080, %v1072
      %v1305 = vpack.c.b16 %v1089, %v1081
      %v1306 = vpack.c.b16 %v1090, %v1082
      %v1307 = vpack.c.b16 %v1091, %v1083
      %v1308 = vpack.c.b16 %v1092, %v1084
      %v1309 = vpack.c.b16 %v1093, %v1085
      %v1310 = vpack.c.b16 %v1094, %v1086
      %v1311 = vpack.c.b16 %v1095, %v1087
      %v1312 = vpack.c.b16 %v1096, %v1088
      %v1313 = vpack.c.b16 %v1105, %v1097
      %v1314 = vpack.c.b16 %v1106, %v1098
      %v1315 = vpack.c.b16 %v1107, %v1099
      %v1316 = vpack.c.b16 %v1108, %v1100
      %v1317 = vpack.c.b16 %v1109, %v1101
      %v1318 = vpack.c.b16 %v1110, %v1102
      %v1319 = vpack.c.b16 %v1111, %v1103
      %v1320 = vpack.c.b16 %v1112, %v1104
      %v1321 = vpack.c.b16 %v1121, %v1113
      %v1322 = vpack.c.b16 %v1122, %v1114
      %v1323 = vpack.c.b16 %v1123, %v1115
      %v1324 = vpack.c.b16 %v1124, %v1116
      %v1325 = vpack.c.b16 %v1125, %v1117
      %v1326 = vpack.c.b16 %v1126, %v1118
      %v1327 = vpack.c.b16 %v1127, %v1119
      %v1328 = vpack.c.b16 %v1128, %v1120
      %v1329 = vpack.c.b16 %v1137, %v1129
      %v1330 = vpack.c.b16 %v1138, %v1130
      %v1331 = vpack.c.b16 %v1139, %v1131
      %v1332 = vpack.c.b16 %v1140, %v1132
      %v1333 = vpack.c.b16 %v1141, %v1133
      %v1334 = vpack.c.b16 %v1142, %v1134
      %v1335 = vpack.c.b16 %v1143, %v1135
      %v1336 = vpack.c.b16 %v1144, %v1136
      %v1337 = vpack.c.b16 %v1153, %v1145
      %v1338 = vpack.c.b16 %v1154, %v1146
      %v1339 = vpack.c.b16 %v1155, %v1147
      %v1340 = vpack.c.b16 %v1156, %v1148
      %v1341 = vpack.c.b16 %v1157, %v1149
      %v1342 = vpack.c.b16 %v1158, %v1150
      %v1343 = vpack.c.b16 %v1159, %v1151
      %v1344 = vpack.c.b16 %v1160, %v1152
      %v1345 = vpack.c.b16 %v1169, %v1161
      %v1346 = vpack.c.b16 %v1170, %v1162
      %v1347 = vpack.c.b16 %v1171, %v1163
      %v1348 = vpack.c.b16 %v1172, %v1164
      %v1349 = vpack.c.b16 %v1173, %v1165
      %v1350 = vpack.c.b16 %v1174, %v1166
      %v1351 = vpack.c.b16 %v1175, %v1167
      %v1352 = vpack.c.b16 %v1176, %v1168
      %v1353 = vpack.c.b16 %v1185, %v1177
      %v1354 = vpack.c.b16 %v1186, %v1178
      %v1355 = vpack.c.b16 %v1187, %v1179
      %v1356 = vpack.c.b16 %v1188, %v1180
      %v1357 = vpack.c.b16 %v1189, %v1181
      %v1358 = vpack.c.b16 %v1190, %v1182
      %v1359 = vpack.c.b16 %v1191, %v1183
      %v1360 = vpack.c.b16 %v1192, %v1184
      %v1361 = vpack.c.b16 %v1201, %v1193
      %v1362 = vpack.c.b16 %v1202, %v1194
      %v1363 = vpack.c.b16 %v1203, %v1195
      %v1364 = vpack.c.b16 %v1204, %v1196
      %v1365 = vpack.c.b16 %v1205, %v1197
      %v1366 = vpack.c.b16 %v1206, %v1198
      %v1367 = vpack.c.b16 %v1207, %v1199
      %v1368 = vpack.c.b16 %v1208, %v1200
      %v1369 = vpack.c.b16 %v1217, %v1209
      %v1370 = vpack.c.b16 %v1218, %v1210
      %v1371 = vpack.c.b16 %v1219, %v1211
      %v1372 = vpack.c.b16 %v1220, %v1212
      %v1373 = vpack.c.b16 %v1221, %v1213
      %v1374 = vpack.c.b16 %v1222, %v1214
      %v1375 = vpack.c.b16 %v1223, %v1215
      %v1376 = vpack.c.b16 %v1224, %v1216
      %v1377 = vpack.c.b16 %v1233, %v1225
      %v1378 = vpack.c.b16 %v1234, %v1226
      %v1379 = vpack.c.b16 %v1235, %v1227
      %v1380 = vpack.c.b16 %v1236, %v1228
      %v1381 = vpack.c.b16 %v1237, %v1229
      %v1382 = vpack.c.b16 %v1238, %v1230
      %v1383 = vpack.c.b16 %v1239, %v1231
      %v1384 = vpack.c.b16 %v1240, %v1232
      %v1385 = vpack.c.b16 %v1249, %v1241
      %v1386 = vpack.c.b16 %v1250, %v1242
      %v1387 = vpack.c.b16 %v1251, %v1243
      %v1388 = vpack.c.b16 %v1252, %v1244
      %v1389 = vpack.c.b16 %v1253, %v1245
      %v1390 = vpack.c.b16 %v1254, %v1246
      %v1391 = vpack.c.b16 %v1255, %v1247
      %v1392 = vpack.c.b16 %v1256, %v1248
      %v1393 = vpack.c.b16 %v1265, %v1257
      %v1394 = vpack.c.b16 %v1266, %v1258
      %v1395 = vpack.c.b16 %v1267, %v1259
      %v1396 = vpack.c.b16 %v1268, %v1260
      %v1397 = vpack.c.b16 %v1269, %v1261
      %v1398 = vpack.c.b16 %v1270, %v1262
      %v1399 = vpack.c.b16 %v1271, %v1263
      %v1400 = vpack.c.b16 %v1272, %v1264
      %1529 = vmatprep.subr.bf16.mxu0 %v1330
      %1530 = vmatpush1.bf16.msra.mxu0 %v1329
      %1531 = vmatprep.subr.bf16.mxu0 %v1322
      %1532 = vmatpush1.bf16.msra.mxu0 %v1321
      %1533 = vmatprep.subr.bf16.mxu0 %v1314
      %1534 = vmatpush1.bf16.msra.mxu0 %v1313
      %1535 = vmatprep.subr.bf16.mxu0 %v1306
      %1536 = vmatpush1.bf16.msra.mxu0 %v1305
      %1537 = vmatprep.subr.bf16.mxu0 %v1298
      %1538 = vmatpush1.bf16.msra.mxu0 %v1297
      %1539 = vmatprep.subr.bf16.mxu0 %v1290
      %1540 = vmatpush1.bf16.msra.mxu0 %v1289
      %1541 = vmatprep.subr.bf16.mxu0 %v1282
      %1542 = vmatpush1.bf16.msra.mxu0 %v1281
      %1543 = vmatprep.subr.bf16.mxu0 %v1274
      %1544 = vmatpush1.bf16.msra.mxu0 %v1273
      %1545 = vmatprep.subr.bf16.mxu0 %v1394
      %1546 = vmatpush2.bf16.msra.mxu0 %v1393
      %1547 = vmatprep.subr.bf16.mxu0 %v1386
      %1548 = vmatpush2.bf16.msra.mxu0 %v1385
      %1549 = vmatprep.subr.bf16.mxu0 %v1378
      %1550 = vmatpush2.bf16.msra.mxu0 %v1377
      %1551 = vmatprep.subr.bf16.mxu0 %v1370
      %1552 = vmatpush2.bf16.msra.mxu0 %v1369
      %1553 = vmatprep.subr.bf16.mxu0 %v1362
      %1554 = vmatpush2.bf16.msra.mxu0 %v1361
      %1555 = vmatprep.subr.bf16.mxu0 %v1354
      %1556 = vmatpush2.bf16.msra.mxu0 %v1353
      %1557 = vmatprep.subr.bf16.mxu0 %v1346
      %1558 = vmatpush2.bf16.msra.mxu0 %v1345
      %1559 = vmatprep.subr.bf16.mxu0 %v1338
      %1560 = vmatpush2.bf16.msra.mxu0 %v1337
      %1561 = vmatprep.mubr.bf16.mxu0 %v760
      %1562 = vmatmul.mubr.bf16.gmra.mxu0 %v759
      %v1563 = vpop.f32.mrf.mxu0
      %v1564 = vadd.f32 0.0, %v1563
      %v1565 = vpop.f32.mrf.mxu0
      %v1566 = vadd.f32 0.0, %v1565
      %v1567 = vpop.f32.mrf.mxu0
      %v1568 = vpop.f32.mrf.mxu0
      %1569 = vdwg.mxu0
      %1570 = vmatprep.subr.bf16.mxu0 %v1332
      %1571 = vmatpush1.bf16.msra.mxu0 %v1331
      %1572 = vmatprep.subr.bf16.mxu0 %v1324
      %1573 = vmatpush1.bf16.msra.mxu0 %v1323
      %1574 = vmatprep.subr.bf16.mxu0 %v1316
      %1575 = vmatpush1.bf16.msra.mxu0 %v1315
      %1576 = vmatprep.subr.bf16.mxu0 %v1308
      %1577 = vmatpush1.bf16.msra.mxu0 %v1307
      %1578 = vmatprep.subr.bf16.mxu0 %v1300
      %1579 = vmatpush1.bf16.msra.mxu0 %v1299
      %1580 = vmatprep.subr.bf16.mxu0 %v1292
      %1581 = vmatpush1.bf16.msra.mxu0 %v1291
      %1582 = vmatprep.subr.bf16.mxu0 %v1284
      %1583 = vmatpush1.bf16.msra.mxu0 %v1283
      %1584 = vmatprep.subr.bf16.mxu0 %v1276
      %1585 = vmatpush1.bf16.msra.mxu0 %v1275
      %1586 = vmatprep.subr.bf16.mxu0 %v1396
      %1587 = vmatpush2.bf16.msra.mxu0 %v1395
      %1588 = vmatprep.subr.bf16.mxu0 %v1388
      %1589 = vmatpush2.bf16.msra.mxu0 %v1387
      %1590 = vmatprep.subr.bf16.mxu0 %v1380
      %1591 = vmatpush2.bf16.msra.mxu0 %v1379
      %1592 = vmatprep.subr.bf16.mxu0 %v1372
      %1593 = vmatpush2.bf16.msra.mxu0 %v1371
      %1594 = vmatprep.subr.bf16.mxu0 %v1364
      %1595 = vmatpush2.bf16.msra.mxu0 %v1363
      %1596 = vmatprep.subr.bf16.mxu0 %v1356
      %1597 = vmatpush2.bf16.msra.mxu0 %v1355
      %1598 = vmatprep.subr.bf16.mxu0 %v1348
      %1599 = vmatpush2.bf16.msra.mxu0 %v1347
      %1600 = vmatprep.subr.bf16.mxu0 %v1340
      %1601 = vmatpush2.bf16.msra.mxu0 %v1339
      %1602 = vmatprep.mubr.bf16.mxu0 %v760
      %1603 = vmatmul.mubr.bf16.gmra.mxu0 %v759
      %v1604 = vpop.f32.mrf.mxu0
      %v1605 = vadd.f32 0.0, %v1604
      %v1606 = vpop.f32.mrf.mxu0
      %v1607 = vadd.f32 0.0, %v1606
      %v1608 = vpop.f32.mrf.mxu0
      %v1609 = vpop.f32.mrf.mxu0
      %1610 = vdwg.mxu0
      %1611 = vmatprep.subr.bf16.mxu0 %v1334
      %1612 = vmatpush1.bf16.msra.mxu0 %v1333
      %1613 = vmatprep.subr.bf16.mxu0 %v1326
      %1614 = vmatpush1.bf16.msra.mxu0 %v1325
      %1615 = vmatprep.subr.bf16.mxu0 %v1318
      %1616 = vmatpush1.bf16.msra.mxu0 %v1317
      %1617 = vmatprep.subr.bf16.mxu0 %v1310
      %1618 = vmatpush1.bf16.msra.mxu0 %v1309
      %1619 = vmatprep.subr.bf16.mxu0 %v1302
      %1620 = vmatpush1.bf16.msra.mxu0 %v1301
      %1621 = vmatprep.subr.bf16.mxu0 %v1294
      %1622 = vmatpush1.bf16.msra.mxu0 %v1293
      %1623 = vmatprep.subr.bf16.mxu0 %v1286
      %1624 = vmatpush1.bf16.msra.mxu0 %v1285
      %1625 = vmatprep.subr.bf16.mxu0 %v1278
      %1626 = vmatpush1.bf16.msra.mxu0 %v1277
      %1627 = vmatprep.subr.bf16.mxu0 %v1398
      %1628 = vmatpush2.bf16.msra.mxu0 %v1397
      %1629 = vmatprep.subr.bf16.mxu0 %v1390
      %1630 = vmatpush2.bf16.msra.mxu0 %v1389
      %1631 = vmatprep.subr.bf16.mxu0 %v1382
      %1632 = vmatpush2.bf16.msra.mxu0 %v1381
      %1633 = vmatprep.subr.bf16.mxu0 %v1374
      %1634 = vmatpush2.bf16.msra.mxu0 %v1373
      %1635 = vmatprep.subr.bf16.mxu0 %v1366
      %1636 = vmatpush2.bf16.msra.mxu0 %v1365
      %1637 = vmatprep.subr.bf16.mxu0 %v1358
      %1638 = vmatpush2.bf16.msra.mxu0 %v1357
      %1639 = vmatprep.subr.bf16.mxu0 %v1350
      %1640 = vmatpush2.bf16.msra.mxu0 %v1349
      %1641 = vmatprep.subr.bf16.mxu0 %v1342
      %1642 = vmatpush2.bf16.msra.mxu0 %v1341
      %1643 = vmatprep.mubr.bf16.mxu0 %v760
      %1644 = vmatmul.mubr.bf16.gmra.mxu0 %v759
      %v1645 = vpop.f32.mrf.mxu0
      %v1646 = vadd.f32 0.0, %v1645
      %v1647 = vpop.f32.mrf.mxu0
      %v1648 = vadd.f32 0.0, %v1647
      %v1649 = vpop.f32.mrf.mxu0
      %v1650 = vpop.f32.mrf.mxu0
      %1651 = vdwg.mxu0
      %1652 = vmatprep.subr.bf16.mxu0 %v1336
      %1653 = vmatpush1.bf16.msra.mxu0 %v1335
      %1654 = vmatprep.subr.bf16.mxu0 %v1328
      %1655 = vmatpush1.bf16.msra.mxu0 %v1327
      %1656 = vmatprep.subr.bf16.mxu0 %v1320
      %1657 = vmatpush1.bf16.msra.mxu0 %v1319
      %1658 = vmatprep.subr.bf16.mxu0 %v1312
      %1659 = vmatpush1.bf16.msra.mxu0 %v1311
      %1660 = vmatprep.subr.bf16.mxu0 %v1304
      %1661 = vmatpush1.bf16.msra.mxu0 %v1303
      %1662 = vmatprep.subr.bf16.mxu0 %v1296
      %1663 = vmatpush1.bf16.msra.mxu0 %v1295
      %1664 = vmatprep.subr.bf16.mxu0 %v1288
      %1665 = vmatpush1.bf16.msra.mxu0 %v1287
      %1666 = vmatprep.subr.bf16.mxu0 %v1280
      %1667 = vmatpush1.bf16.msra.mxu0 %v1279
      %1668 = vmatprep.subr.bf16.mxu0 %v1400
      %1669 = vmatpush2.bf16.msra.mxu0 %v1399
      %1670 = vmatprep.subr.bf16.mxu0 %v1392
      %1671 = vmatpush2.bf16.msra.mxu0 %v1391
      %1672 = vmatprep.subr.bf16.mxu0 %v1384
      %1673 = vmatpush2.bf16.msra.mxu0 %v1383
      %1674 = vmatprep.subr.bf16.mxu0 %v1376
      %1675 = vmatpush2.bf16.msra.mxu0 %v1375
      %1676 = vmatprep.subr.bf16.mxu0 %v1368
      %1677 = vmatpush2.bf16.msra.mxu0 %v1367
      %1678 = vmatprep.subr.bf16.mxu0 %v1360
      %1679 = vmatpush2.bf16.msra.mxu0 %v1359
      %1680 = vmatprep.subr.bf16.mxu0 %v1352
      %1681 = vmatpush2.bf16.msra.mxu0 %v1351
      %1682 = vmatprep.subr.bf16.mxu0 %v1344
      %1683 = vmatpush2.bf16.msra.mxu0 %v1343
      %1684 = vmatprep.mubr.bf16.mxu0 %v760
      %1685 = vmatmul.mubr.bf16.gmra.mxu0 %v759
      %v1686 = vpop.f32.mrf.mxu0
      %v1687 = vadd.f32 0.0, %v1686
      %v1688 = vpop.f32.mrf.mxu0
      %v1689 = vadd.f32 0.0, %v1688
      %v1690 = vpop.f32.mrf.mxu0
      %v1691 = vpop.f32.mrf.mxu0
      %1692 = vdwg.mxu0
      %1693 = vrot.lane.b32.xlu0 %v1564, 33
      %v1694 = vpop.permute.xlu0 %1693
      %1695 = vrot.lane.b32.xlu0 %v1566, 33
      %v1696 = vpop.permute.xlu0 %1695
      %1697 = vrot.lane.b32.xlu0 %v1605, 33
      %v1698 = vpop.permute.xlu0 %1697
      %1699 = vrot.lane.b32.xlu0 %v1607, 33
      %v1700 = vpop.permute.xlu0 %1699
      %1701 = vrot.lane.b32.xlu0 %v1646, 33
      %v1702 = vpop.permute.xlu0 %1701
      %1703 = vrot.lane.b32.xlu0 %v1648, 33
      %v1704 = vpop.permute.xlu0 %1703
      %1705 = vrot.lane.b32.xlu0 %v1687, 33
      %v1706 = vpop.permute.xlu0 %1705
      %1707 = vrot.lane.b32.xlu0 %v1689, 33
      %v1708 = vpop.permute.xlu0 %1707
      %vm1709 = vcmp.lt.s32.totalorder %v412, 33
      %v1710 = vsel %vm1709, %v1706, %v1708
      %v1711 = vsel %vm1709, %v1704, %v1706
      %v1712 = vsel %vm1709, %v1702, %v1704
      %v1713 = vsel %vm1709, %v1700, %v1702
      %v1714 = vsel %vm1709, %v1698, %v1700
      %v1715 = vsel %vm1709, %v1696, %v1698
      %v1716 = vsel %vm1709, %v1694, %v1696
      %v1717 = vsel %vm1709, %v1708, %v1694
      %v1718 = vld [vmem:[%s9] sm:$0xff]
      %v1719 = vld [vmem:[%s9 + $0x8] sm:$0xff]
      %v1720 = vld [vmem:[%s9 + $0x10] sm:$0xff]
      %v1721 = vld [vmem:[%s9 + $0x18] sm:$0xff]
      %v1722 = vld [vmem:[%s9 + $0x20] sm:$0xff]
      %v1723 = vld [vmem:[%s9 + $0x28] sm:$0xff]
      %v1724 = vld [vmem:[%s9 + $0x30] sm:$0xff]
      %v1725 = vld [vmem:[%s9 + $0x38] sm:$0xff]
      %v1726 = vmul.f32 %v1717, %v1718
      %v1727 = vmul.f32 %v1716, %v1719
      %v1728 = vmul.f32 %v1715, %v1720
      %v1729 = vmul.f32 %v1714, %v1721
      %v1730 = vmul.f32 %v1713, %v1722
      %v1731 = vmul.f32 %v1712, %v1723
      %v1732 = vmul.f32 %v1711, %v1724
      %v1733 = vmul.f32 %v1710, %v1725
      %v1734 = vld [vmem:[%s4] sm:$0xf]
      %v1735 = vpack.c.bf16 %v1726, %v1726
      %v1736 = vpack.c.bf16 %v1727, %v1727
      %v1737 = vpack.c.bf16 %v1728, %v1728
      %v1738 = vpack.c.bf16 %v1729, %v1729
      %v1739 = vpack.c.bf16 %v1730, %v1730
      %v1740 = vpack.c.bf16 %v1731, %v1731
      %v1741 = vpack.c.bf16 %v1732, %v1732
      %v1742 = vpack.c.bf16 %v1733, %v1733
      %1743 = vrot.lane.b32.xlu0 %v1564, 32
      %v1744 = vpop.permute.xlu0 %1743
      %1745 = vrot.lane.b32.xlu0 %v1566, 32
      %v1746 = vpop.permute.xlu0 %1745
      %1747 = vrot.lane.b32.xlu0 %v1605, 32
      %v1748 = vpop.permute.xlu0 %1747
      %1749 = vrot.lane.b32.xlu0 %v1607, 32
      %v1750 = vpop.permute.xlu0 %1749
      %1751 = vrot.lane.b32.xlu0 %v1646, 32
      %v1752 = vpop.permute.xlu0 %1751
      %1753 = vrot.lane.b32.xlu0 %v1648, 32
      %v1754 = vpop.permute.xlu0 %1753
      %1755 = vrot.lane.b32.xlu0 %v1687, 32
      %v1756 = vpop.permute.xlu0 %1755
      %1757 = vrot.lane.b32.xlu0 %v1689, 32
      %v1758 = vpop.permute.xlu0 %1757
      %vm1759 = vcmp.lt.s32.totalorder %v412, 32
      %v1760 = vsel %vm1759, %v1756, %v1758
      %v1761 = vsel %vm1759, %v1754, %v1756
      %v1762 = vsel %vm1759, %v1752, %v1754
      %v1763 = vsel %vm1759, %v1750, %v1752
      %v1764 = vsel %vm1759, %v1748, %v1750
      %v1765 = vsel %vm1759, %v1746, %v1748
      %v1766 = vsel %vm1759, %v1744, %v1746
      %v1767 = vsel %vm1759, %v1758, %v1744
      %v1768 = vld [vmem:[%s9 + $0x40] sm:$0xff]
      %v1769 = vld [vmem:[%s9 + $0x48] sm:$0xff]
      %v1770 = vld [vmem:[%s9 + $0x50] sm:$0xff]
      %v1771 = vld [vmem:[%s9 + $0x58] sm:$0xff]
      %v1772 = vld [vmem:[%s9 + $0x60] sm:$0xff]
      %v1773 = vld [vmem:[%s9 + $0x68] sm:$0xff]
      %v1774 = vld [vmem:[%s9 + $0x70] sm:$0xff]
      %v1775 = vld [vmem:[%s9 + $0x78] sm:$0xff]
      %v1776 = vmul.f32 %v1767, %v1768
      %v1777 = vmul.f32 %v1766, %v1769
      %v1778 = vmul.f32 %v1765, %v1770
      %v1779 = vmul.f32 %v1764, %v1771
      %v1780 = vmul.f32 %v1763, %v1772
      %v1781 = vmul.f32 %v1762, %v1773
      %v1782 = vmul.f32 %v1761, %v1774
      %v1783 = vmul.f32 %v1760, %v1775
      %s1784 = scalar_lea.vmem %s4, 4
      %v1785 = vld [vmem:[%s1784] sm:$0xf]
      %v1786 = vpack.c.bf16 %v1776, %v1776
      %v1787 = vpack.c.bf16 %v1777, %v1777
      %v1788 = vpack.c.bf16 %v1778, %v1778
      %v1789 = vpack.c.bf16 %v1779, %v1779
      %v1790 = vpack.c.bf16 %v1780, %v1780
      %v1791 = vpack.c.bf16 %v1781, %v1781
      %v1792 = vpack.c.bf16 %v1782, %v1782
      %v1793 = vpack.c.bf16 %v1783, %v1783
      %vm1794 = vcmask 64512
      %v1796 = vsel %vm1794, %v1785, 0
      %v1799 = vsel %vm516, %v1786, 0
      %v1802 = vsel %vm516, %v1787, 0
      %v1805 = vsel %vm516, %v1788, 0
      %v1808 = vsel %vm516, %v1789, 0
      %v1811 = vsel %vm516, %v1790, 0
      %v1814 = vsel %vm516, %v1791, 0
      %v1817 = vsel %vm516, %v1792, 0
      %v1820 = vsel %vm516, %v1793, 0
      %1822 = vmatprep.subr.bf16.mxu0 0
      %1823 = vmatpush1.bf16.msra.mxu0 0
      %1824 = vmatprep.subr.bf16.mxu0 0
      %1825 = vmatpush1.bf16.msra.mxu0 0
      %1826 = vmatprep.subr.bf16.mxu0 0
      %1827 = vmatpush1.bf16.msra.mxu0 0
      %1828 = vmatprep.subr.bf16.mxu0 0
      %1829 = vmatpush1.bf16.msra.mxu0 0
      %1830 = vmatprep.subr.bf16.mxu0 0
      %1831 = vmatpush1.bf16.msra.mxu0 0
      %1832 = vmatprep.subr.bf16.mxu0 0
      %1833 = vmatpush1.bf16.msra.mxu0 0
      %1834 = vmatprep.subr.bf16.mxu0 0
      %1835 = vmatpush1.bf16.msra.mxu0 0
      %1836 = vmatprep.subr.bf16.mxu0 %v1802
      %1837 = vmatpush1.bf16.msra.mxu0 %v1799
      %1838 = vmatprep.subr.bf16.mxu0 0
      %1839 = vmatpush2.bf16.msra.mxu0 0
      %1840 = vmatprep.subr.bf16.mxu0 0
      %1841 = vmatpush2.bf16.msra.mxu0 0
      %1842 = vmatprep.subr.bf16.mxu0 0
      %1843 = vmatpush2.bf16.msra.mxu0 0
      %1844 = vmatprep.subr.bf16.mxu0 0
      %1845 = vmatpush2.bf16.msra.mxu0 0
      %1846 = vmatprep.subr.bf16.mxu0 0
      %1847 = vmatpush2.bf16.msra.mxu0 0
      %1848 = vmatprep.subr.bf16.mxu0 0
      %1849 = vmatpush2.bf16.msra.mxu0 0
      %1850 = vmatprep.subr.bf16.mxu0 0
      %1851 = vmatpush2.bf16.msra.mxu0 0
      %1852 = vmatprep.subr.bf16.mxu0 0
      %1853 = vmatpush2.bf16.msra.mxu0 0
      %1854 = vmatprep.mubr.bf16.mxu0 0
      %1855 = vmatmul.mubr.bf16.gmra.mxu0 %v1796
      %v1856 = vpop.f32.mrf.mxu0
      %v1857 = vadd.f32 0.0, %v1856
      %v1858 = vpop.f32.mrf.mxu0
      %v1859 = vadd.f32 0.0, %v1858
      %v1860 = vpop.f32.mrf.mxu0
      %v1861 = vpop.f32.mrf.mxu0
      %1862 = vdwg.mxu0
      %1863 = vmatprep.subr.bf16.mxu0 0
      %1864 = vmatpush1.bf16.msra.mxu0 0
      %1865 = vmatprep.subr.bf16.mxu0 0
      %1866 = vmatpush1.bf16.msra.mxu0 0
      %1867 = vmatprep.subr.bf16.mxu0 0
      %1868 = vmatpush1.bf16.msra.mxu0 0
      %1869 = vmatprep.subr.bf16.mxu0 0
      %1870 = vmatpush1.bf16.msra.mxu0 0
      %1871 = vmatprep.subr.bf16.mxu0 0
      %1872 = vmatpush1.bf16.msra.mxu0 0
      %1873 = vmatprep.subr.bf16.mxu0 0
      %1874 = vmatpush1.bf16.msra.mxu0 0
      %1875 = vmatprep.subr.bf16.mxu0 0
      %1876 = vmatpush1.bf16.msra.mxu0 0
      %1877 = vmatprep.subr.bf16.mxu0 %v1808
      %1878 = vmatpush1.bf16.msra.mxu0 %v1805
      %1879 = vmatprep.subr.bf16.mxu0 0
      %1880 = vmatpush2.bf16.msra.mxu0 0
      %1881 = vmatprep.subr.bf16.mxu0 0
      %1882 = vmatpush2.bf16.msra.mxu0 0
      %1883 = vmatprep.subr.bf16.mxu0 0
      %1884 = vmatpush2.bf16.msra.mxu0 0
      %1885 = vmatprep.subr.bf16.mxu0 0
      %1886 = vmatpush2.bf16.msra.mxu0 0
      %1887 = vmatprep.subr.bf16.mxu0 0
      %1888 = vmatpush2.bf16.msra.mxu0 0
      %1889 = vmatprep.subr.bf16.mxu0 0
      %1890 = vmatpush2.bf16.msra.mxu0 0
      %1891 = vmatprep.subr.bf16.mxu0 0
      %1892 = vmatpush2.bf16.msra.mxu0 0
      %1893 = vmatprep.subr.bf16.mxu0 0
      %1894 = vmatpush2.bf16.msra.mxu0 0
      %1895 = vmatprep.mubr.bf16.mxu0 0
      %1896 = vmatmul.mubr.bf16.gmra.mxu0 %v1796
      %v1897 = vpop.f32.mrf.mxu0
      %v1898 = vadd.f32 0.0, %v1897
      %v1899 = vpop.f32.mrf.mxu0
      %v1900 = vadd.f32 0.0, %v1899
      %v1901 = vpop.f32.mrf.mxu0
      %v1902 = vpop.f32.mrf.mxu0
      %1903 = vdwg.mxu0
      %1904 = vmatprep.subr.bf16.mxu0 0
      %1905 = vmatpush1.bf16.msra.mxu0 0
      %1906 = vmatprep.subr.bf16.mxu0 0
      %1907 = vmatpush1.bf16.msra.mxu0 0
      %1908 = vmatprep.subr.bf16.mxu0 0
      %1909 = vmatpush1.bf16.msra.mxu0 0
      %1910 = vmatprep.subr.bf16.mxu0 0
      %1911 = vmatpush1.bf16.msra.mxu0 0
      %1912 = vmatprep.subr.bf16.mxu0 0
      %1913 = vmatpush1.bf16.msra.mxu0 0
      %1914 = vmatprep.subr.bf16.mxu0 0
      %1915 = vmatpush1.bf16.msra.mxu0 0
      %1916 = vmatprep.subr.bf16.mxu0 0
      %1917 = vmatpush1.bf16.msra.mxu0 0
      %1918 = vmatprep.subr.bf16.mxu0 %v1814
      %1919 = vmatpush1.bf16.msra.mxu0 %v1811
      %1920 = vmatprep.subr.bf16.mxu0 0
      %1921 = vmatpush2.bf16.msra.mxu0 0
      %1922 = vmatprep.subr.bf16.mxu0 0
      %1923 = vmatpush2.bf16.msra.mxu0 0
      %1924 = vmatprep.subr.bf16.mxu0 0
      %1925 = vmatpush2.bf16.msra.mxu0 0
      %1926 = vmatprep.subr.bf16.mxu0 0
      %1927 = vmatpush2.bf16.msra.mxu0 0
      %1928 = vmatprep.subr.bf16.mxu0 0
      %1929 = vmatpush2.bf16.msra.mxu0 0
      %1930 = vmatprep.subr.bf16.mxu0 0
      %1931 = vmatpush2.bf16.msra.mxu0 0
      %1932 = vmatprep.subr.bf16.mxu0 0
      %1933 = vmatpush2.bf16.msra.mxu0 0
      %1934 = vmatprep.subr.bf16.mxu0 0
      %1935 = vmatpush2.bf16.msra.mxu0 0
      %1936 = vmatprep.mubr.bf16.mxu0 0
      %1937 = vmatmul.mubr.bf16.gmra.mxu0 %v1796
      %v1938 = vpop.f32.mrf.mxu0
      %v1939 = vadd.f32 0.0, %v1938
      %v1940 = vpop.f32.mrf.mxu0
      %v1941 = vadd.f32 0.0, %v1940
      %v1942 = vpop.f32.mrf.mxu0
      %v1943 = vpop.f32.mrf.mxu0
      %1944 = vdwg.mxu0
      %1945 = vmatprep.subr.bf16.mxu0 0
      %1946 = vmatpush1.bf16.msra.mxu0 0
      %1947 = vmatprep.subr.bf16.mxu0 0
      %1948 = vmatpush1.bf16.msra.mxu0 0
      %1949 = vmatprep.subr.bf16.mxu0 0
      %1950 = vmatpush1.bf16.msra.mxu0 0
      %1951 = vmatprep.subr.bf16.mxu0 0
      %1952 = vmatpush1.bf16.msra.mxu0 0
      %1953 = vmatprep.subr.bf16.mxu0 0
      %1954 = vmatpush1.bf16.msra.mxu0 0
      %1955 = vmatprep.subr.bf16.mxu0 0
      %1956 = vmatpush1.bf16.msra.mxu0 0
      %1957 = vmatprep.subr.bf16.mxu0 0
      %1958 = vmatpush1.bf16.msra.mxu0 0
      %1959 = vmatprep.subr.bf16.mxu0 %v1820
      %1960 = vmatpush1.bf16.msra.mxu0 %v1817
      %1961 = vmatprep.subr.bf16.mxu0 0
      %1962 = vmatpush2.bf16.msra.mxu0 0
      %1963 = vmatprep.subr.bf16.mxu0 0
      %1964 = vmatpush2.bf16.msra.mxu0 0
      %1965 = vmatprep.subr.bf16.mxu0 0
      %1966 = vmatpush2.bf16.msra.mxu0 0
      %1967 = vmatprep.subr.bf16.mxu0 0
      %1968 = vmatpush2.bf16.msra.mxu0 0
      %1969 = vmatprep.subr.bf16.mxu0 0
      %1970 = vmatpush2.bf16.msra.mxu0 0
      %1971 = vmatprep.subr.bf16.mxu0 0
      %1972 = vmatpush2.bf16.msra.mxu0 0
      %1973 = vmatprep.subr.bf16.mxu0 0
      %1974 = vmatpush2.bf16.msra.mxu0 0
      %1975 = vmatprep.subr.bf16.mxu0 0
      %1976 = vmatpush2.bf16.msra.mxu0 0
      %1977 = vmatprep.mubr.bf16.mxu0 0
      %1978 = vmatmul.mubr.bf16.gmra.mxu0 %v1796
      %v1979 = vpop.f32.mrf.mxu0
      %v1980 = vadd.f32 0.0, %v1979
      %v1981 = vpop.f32.mrf.mxu0
      %v1982 = vadd.f32 0.0, %v1981
      %v1983 = vpop.f32.mrf.mxu0
      %v1984 = vpop.f32.mrf.mxu0
      %1985 = vdwg.mxu0
      %v1987 = vsel %vm1794, %v1734, 0
      %v1990 = vsel %vm516, %v1735, 0
      %v1993 = vsel %vm516, %v1736, 0
      %v1996 = vsel %vm516, %v1737, 0
      %v1999 = vsel %vm516, %v1738, 0
      %v2002 = vsel %vm516, %v1739, 0
      %v2005 = vsel %vm516, %v1740, 0
      %v2008 = vsel %vm516, %v1741, 0
      %v2011 = vsel %vm516, %v1742, 0
      %2013 = vmatprep.subr.bf16.mxu0 0
      %2014 = vmatpush1.bf16.msra.mxu0 0
      %2015 = vmatprep.subr.bf16.mxu0 0
      %2016 = vmatpush1.bf16.msra.mxu0 0
      %2017 = vmatprep.subr.bf16.mxu0 0
      %2018 = vmatpush1.bf16.msra.mxu0 0
      %2019 = vmatprep.subr.bf16.mxu0 0
      %2020 = vmatpush1.bf16.msra.mxu0 0
      %2021 = vmatprep.subr.bf16.mxu0 0
      %2022 = vmatpush1.bf16.msra.mxu0 0
      %2023 = vmatprep.subr.bf16.mxu0 0
      %2024 = vmatpush1.bf16.msra.mxu0 0
      %2025 = vmatprep.subr.bf16.mxu0 0
      %2026 = vmatpush1.bf16.msra.mxu0 0
      %2027 = vmatprep.subr.bf16.mxu0 %v1993
      %2028 = vmatpush1.bf16.msra.mxu0 %v1990
      %2029 = vmatprep.subr.bf16.mxu0 0
      %2030 = vmatpush2.bf16.msra.mxu0 0
      %2031 = vmatprep.subr.bf16.mxu0 0
      %2032 = vmatpush2.bf16.msra.mxu0 0
      %2033 = vmatprep.subr.bf16.mxu0 0
      %2034 = vmatpush2.bf16.msra.mxu0 0
      %2035 = vmatprep.subr.bf16.mxu0 0
      %2036 = vmatpush2.bf16.msra.mxu0 0
      %2037 = vmatprep.subr.bf16.mxu0 0
      %2038 = vmatpush2.bf16.msra.mxu0 0
      %2039 = vmatprep.subr.bf16.mxu0 0
      %2040 = vmatpush2.bf16.msra.mxu0 0
      %2041 = vmatprep.subr.bf16.mxu0 0
      %2042 = vmatpush2.bf16.msra.mxu0 0
      %2043 = vmatprep.subr.bf16.mxu0 0
      %2044 = vmatpush2.bf16.msra.mxu0 0
      %2045 = vmatprep.mubr.bf16.mxu0 0
      %2046 = vmatmul.mubr.bf16.gmra.mxu0 %v1987
      %v2047 = vpop.f32.mrf.mxu0
      %v2048 = vadd.f32 %v1857, %v2047
      %v2049 = vpop.f32.mrf.mxu0
      %v2050 = vadd.f32 %v1859, %v2049
      %v2051 = vpop.f32.mrf.mxu0
      %v2052 = vpop.f32.mrf.mxu0
      %2053 = vdwg.mxu0
      %2054 = vmatprep.subr.bf16.mxu0 0
      %2055 = vmatpush1.bf16.msra.mxu0 0
      %2056 = vmatprep.subr.bf16.mxu0 0
      %2057 = vmatpush1.bf16.msra.mxu0 0
      %2058 = vmatprep.subr.bf16.mxu0 0
      %2059 = vmatpush1.bf16.msra.mxu0 0
      %2060 = vmatprep.subr.bf16.mxu0 0
      %2061 = vmatpush1.bf16.msra.mxu0 0
      %2062 = vmatprep.subr.bf16.mxu0 0
      %2063 = vmatpush1.bf16.msra.mxu0 0
      %2064 = vmatprep.subr.bf16.mxu0 0
      %2065 = vmatpush1.bf16.msra.mxu0 0
      %2066 = vmatprep.subr.bf16.mxu0 0
      %2067 = vmatpush1.bf16.msra.mxu0 0
      %2068 = vmatprep.subr.bf16.mxu0 %v1999
      %2069 = vmatpush1.bf16.msra.mxu0 %v1996
      %2070 = vmatprep.subr.bf16.mxu0 0
      %2071 = vmatpush2.bf16.msra.mxu0 0
      %2072 = vmatprep.subr.bf16.mxu0 0
      %2073 = vmatpush2.bf16.msra.mxu0 0
      %2074 = vmatprep.subr.bf16.mxu0 0
      %2075 = vmatpush2.bf16.msra.mxu0 0
      %2076 = vmatprep.subr.bf16.mxu0 0
      %2077 = vmatpush2.bf16.msra.mxu0 0
      %2078 = vmatprep.subr.bf16.mxu0 0
      %2079 = vmatpush2.bf16.msra.mxu0 0
      %2080 = vmatprep.subr.bf16.mxu0 0
      %2081 = vmatpush2.bf16.msra.mxu0 0
      %2082 = vmatprep.subr.bf16.mxu0 0
      %2083 = vmatpush2.bf16.msra.mxu0 0
      %2084 = vmatprep.subr.bf16.mxu0 0
      %2085 = vmatpush2.bf16.msra.mxu0 0
      %2086 = vmatprep.mubr.bf16.mxu0 0
      %2087 = vmatmul.mubr.bf16.gmra.mxu0 %v1987
      %v2088 = vpop.f32.mrf.mxu0
      %v2089 = vadd.f32 %v1898, %v2088
      %v2090 = vpop.f32.mrf.mxu0
      %v2091 = vadd.f32 %v1900, %v2090
      %v2092 = vpop.f32.mrf.mxu0
      %v2093 = vpop.f32.mrf.mxu0
      %2094 = vdwg.mxu0
      %2095 = vmatprep.subr.bf16.mxu0 0
      %2096 = vmatpush1.bf16.msra.mxu0 0
      %2097 = vmatprep.subr.bf16.mxu0 0
      %2098 = vmatpush1.bf16.msra.mxu0 0
      %2099 = vmatprep.subr.bf16.mxu0 0
      %2100 = vmatpush1.bf16.msra.mxu0 0
      %2101 = vmatprep.subr.bf16.mxu0 0
      %2102 = vmatpush1.bf16.msra.mxu0 0
      %2103 = vmatprep.subr.bf16.mxu0 0
      %2104 = vmatpush1.bf16.msra.mxu0 0
      %2105 = vmatprep.subr.bf16.mxu0 0
      %2106 = vmatpush1.bf16.msra.mxu0 0
      %2107 = vmatprep.subr.bf16.mxu0 0
      %2108 = vmatpush1.bf16.msra.mxu0 0
      %2109 = vmatprep.subr.bf16.mxu0 %v2005
      %2110 = vmatpush1.bf16.msra.mxu0 %v2002
      %2111 = vmatprep.subr.bf16.mxu0 0
      %2112 = vmatpush2.bf16.msra.mxu0 0
      %2113 = vmatprep.subr.bf16.mxu0 0
      %2114 = vmatpush2.bf16.msra.mxu0 0
      %2115 = vmatprep.subr.bf16.mxu0 0
      %2116 = vmatpush2.bf16.msra.mxu0 0
      %2117 = vmatprep.subr.bf16.mxu0 0
      %2118 = vmatpush2.bf16.msra.mxu0 0
      %2119 = vmatprep.subr.bf16.mxu0 0
      %2120 = vmatpush2.bf16.msra.mxu0 0
      %2121 = vmatprep.subr.bf16.mxu0 0
      %2122 = vmatpush2.bf16.msra.mxu0 0
      %2123 = vmatprep.subr.bf16.mxu0 0
      %2124 = vmatpush2.bf16.msra.mxu0 0
      %2125 = vmatprep.subr.bf16.mxu0 0
      %2126 = vmatpush2.bf16.msra.mxu0 0
      %2127 = vmatprep.mubr.bf16.mxu0 0
      %2128 = vmatmul.mubr.bf16.gmra.mxu0 %v1987
      %v2129 = vpop.f32.mrf.mxu0
      %v2130 = vadd.f32 %v1939, %v2129
      %v2131 = vpop.f32.mrf.mxu0
      %v2132 = vadd.f32 %v1941, %v2131
      %v2133 = vpop.f32.mrf.mxu0
      %v2134 = vpop.f32.mrf.mxu0
      %2135 = vdwg.mxu0
      %2136 = vmatprep.subr.bf16.mxu0 0
      %2137 = vmatpush1.bf16.msra.mxu0 0
      %2138 = vmatprep.subr.bf16.mxu0 0
      %2139 = vmatpush1.bf16.msra.mxu0 0
      %2140 = vmatprep.subr.bf16.mxu0 0
      %2141 = vmatpush1.bf16.msra.mxu0 0
      %2142 = vmatprep.subr.bf16.mxu0 0
      %2143 = vmatpush1.bf16.msra.mxu0 0
      %2144 = vmatprep.subr.bf16.mxu0 0
      %2145 = vmatpush1.bf16.msra.mxu0 0
      %2146 = vmatprep.subr.bf16.mxu0 0
      %2147 = vmatpush1.bf16.msra.mxu0 0
      %2148 = vmatprep.subr.bf16.mxu0 0
      %2149 = vmatpush1.bf16.msra.mxu0 0
      %2150 = vmatprep.subr.bf16.mxu0 %v2011
      %2151 = vmatpush1.bf16.msra.mxu0 %v2008
      %2152 = vmatprep.subr.bf16.mxu0 0
      %2153 = vmatpush2.bf16.msra.mxu0 0
      %2154 = vmatprep.subr.bf16.mxu0 0
      %2155 = vmatpush2.bf16.msra.mxu0 0
      %2156 = vmatprep.subr.bf16.mxu0 0
      %2157 = vmatpush2.bf16.msra.mxu0 0
      %2158 = vmatprep.subr.bf16.mxu0 0
      %2159 = vmatpush2.bf16.msra.mxu0 0
      %2160 = vmatprep.subr.bf16.mxu0 0
      %2161 = vmatpush2.bf16.msra.mxu0 0
      %2162 = vmatprep.subr.bf16.mxu0 0
      %2163 = vmatpush2.bf16.msra.mxu0 0
      %2164 = vmatprep.subr.bf16.mxu0 0
      %2165 = vmatpush2.bf16.msra.mxu0 0
      %2166 = vmatprep.subr.bf16.mxu0 0
      %2167 = vmatpush2.bf16.msra.mxu0 0
      %2168 = vmatprep.mubr.bf16.mxu0 0
      %2169 = vmatmul.mubr.bf16.gmra.mxu0 %v1987
      %v2170 = vpop.f32.mrf.mxu0
      %v2171 = vadd.f32 %v1980, %v2170
      %v2172 = vpop.f32.mrf.mxu0
      %v2173 = vadd.f32 %v1982, %v2172
      %v2174 = vpop.f32.mrf.mxu0
      %v2175 = vpop.f32.mrf.mxu0
      %2176 = vdwg.mxu0
      %2177 = vrot.lane.b32.xlu0 %v1564, 31
      %v2178 = vpop.permute.xlu0 %2177
      %2179 = vrot.lane.b32.xlu0 %v1566, 31
      %v2180 = vpop.permute.xlu0 %2179
      %2181 = vrot.lane.b32.xlu0 %v1605, 31
      %v2182 = vpop.permute.xlu0 %2181
      %2183 = vrot.lane.b32.xlu0 %v1607, 31
      %v2184 = vpop.permute.xlu0 %2183
      %2185 = vrot.lane.b32.xlu0 %v1646, 31
      %v2186 = vpop.permute.xlu0 %2185
      %2187 = vrot.lane.b32.xlu0 %v1648, 31
      %v2188 = vpop.permute.xlu0 %2187
      %2189 = vrot.lane.b32.xlu0 %v1687, 31
      %v2190 = vpop.permute.xlu0 %2189
      %2191 = vrot.lane.b32.xlu0 %v1689, 31
      %v2192 = vpop.permute.xlu0 %2191
      %vm2193 = vcmp.lt.s32.totalorder %v412, 31
      %v2194 = vsel %vm2193, %v2190, %v2192
      %v2195 = vsel %vm2193, %v2188, %v2190
      %v2196 = vsel %vm2193, %v2186, %v2188
      %v2197 = vsel %vm2193, %v2184, %v2186
      %v2198 = vsel %vm2193, %v2182, %v2184
      %v2199 = vsel %vm2193, %v2180, %v2182
      %v2200 = vsel %vm2193, %v2178, %v2180
      %v2201 = vsel %vm2193, %v2192, %v2178
      %v2202 = vld [vmem:[%s9 + $0x80] sm:$0xff]
      %v2203 = vld [vmem:[%s9 + $0x88] sm:$0xff]
      %v2204 = vld [vmem:[%s9 + $0x90] sm:$0xff]
      %v2205 = vld [vmem:[%s9 + $0x98] sm:$0xff]
      %v2206 = vld [vmem:[%s9 + $0xa0] sm:$0xff]
      %v2207 = vld [vmem:[%s9 + $0xa8] sm:$0xff]
      %v2208 = vld [vmem:[%s9 + $0xb0] sm:$0xff]
      %v2209 = vld [vmem:[%s9 + $0xb8] sm:$0xff]
      %v2210 = vmul.f32 %v2201, %v2202
      %v2211 = vmul.f32 %v2200, %v2203
      %v2212 = vmul.f32 %v2199, %v2204
      %v2213 = vmul.f32 %v2198, %v2205
      %v2214 = vmul.f32 %v2197, %v2206
      %v2215 = vmul.f32 %v2196, %v2207
      %v2216 = vmul.f32 %v2195, %v2208
      %v2217 = vmul.f32 %v2194, %v2209
      %s2218 = scalar_lea.vmem %s4, 8
      %v2219 = vld [vmem:[%s2218] sm:$0xf]
      %v2220 = vpack.c.bf16 %v2210, %v2210
      %v2221 = vpack.c.bf16 %v2211, %v2211
      %v2222 = vpack.c.bf16 %v2212, %v2212
      %v2223 = vpack.c.bf16 %v2213, %v2213
      %v2224 = vpack.c.bf16 %v2214, %v2214
      %v2225 = vpack.c.bf16 %v2215, %v2215
      %v2226 = vpack.c.bf16 %v2216, %v2216
      %v2227 = vpack.c.bf16 %v2217, %v2217
      %v2229 = vsel %vm1794, %v2219, 0
      %v2232 = vsel %vm516, %v2220, 0
      %v2235 = vsel %vm516, %v2221, 0
      %v2238 = vsel %vm516, %v2222, 0
      %v2241 = vsel %vm516, %v2223, 0
      %v2244 = vsel %vm516, %v2224, 0
      %v2247 = vsel %vm516, %v2225, 0
      %v2250 = vsel %vm516, %v2226, 0
      %v2253 = vsel %vm516, %v2227, 0
      %2255 = vmatprep.subr.bf16.mxu0 0
      %2256 = vmatpush1.bf16.msra.mxu0 0
      %2257 = vmatprep.subr.bf16.mxu0 0
      %2258 = vmatpush1.bf16.msra.mxu0 0
      %2259 = vmatprep.subr.bf16.mxu0 0
      %2260 = vmatpush1.bf16.msra.mxu0 0
      %2261 = vmatprep.subr.bf16.mxu0 0
      %2262 = vmatpush1.bf16.msra.mxu0 0
      %2263 = vmatprep.subr.bf16.mxu0 0
      %2264 = vmatpush1.bf16.msra.mxu0 0
      %2265 = vmatprep.subr.bf16.mxu0 0
      %2266 = vmatpush1.bf16.msra.mxu0 0
      %2267 = vmatprep.subr.bf16.mxu0 0
      %2268 = vmatpush1.bf16.msra.mxu0 0
      %2269 = vmatprep.subr.bf16.mxu0 %v2235
      %2270 = vmatpush1.bf16.msra.mxu0 %v2232
      %2271 = vmatprep.subr.bf16.mxu0 0
      %2272 = vmatpush2.bf16.msra.mxu0 0
      %2273 = vmatprep.subr.bf16.mxu0 0
      %2274 = vmatpush2.bf16.msra.mxu0 0
      %2275 = vmatprep.subr.bf16.mxu0 0
      %2276 = vmatpush2.bf16.msra.mxu0 0
      %2277 = vmatprep.subr.bf16.mxu0 0
      %2278 = vmatpush2.bf16.msra.mxu0 0
      %2279 = vmatprep.subr.bf16.mxu0 0
      %2280 = vmatpush2.bf16.msra.mxu0 0
      %2281 = vmatprep.subr.bf16.mxu0 0
      %2282 = vmatpush2.bf16.msra.mxu0 0
      %2283 = vmatprep.subr.bf16.mxu0 0
      %2284 = vmatpush2.bf16.msra.mxu0 0
      %2285 = vmatprep.subr.bf16.mxu0 0
      %2286 = vmatpush2.bf16.msra.mxu0 0
      %2287 = vmatprep.mubr.bf16.mxu0 0
      %2288 = vmatmul.mubr.bf16.gmra.mxu0 %v2229
      %v2289 = vpop.f32.mrf.mxu0
      %v2290 = vadd.f32 0.0, %v2289
      %v2291 = vpop.f32.mrf.mxu0
      %v2292 = vadd.f32 0.0, %v2291
      %v2293 = vpop.f32.mrf.mxu0
      %v2294 = vpop.f32.mrf.mxu0
      %2295 = vdwg.mxu0
      %2296 = vmatprep.subr.bf16.mxu0 0
      %2297 = vmatpush1.bf16.msra.mxu0 0
      %2298 = vmatprep.subr.bf16.mxu0 0
      %2299 = vmatpush1.bf16.msra.mxu0 0
      %2300 = vmatprep.subr.bf16.mxu0 0
      %2301 = vmatpush1.bf16.msra.mxu0 0
      %2302 = vmatprep.subr.bf16.mxu0 0
      %2303 = vmatpush1.bf16.msra.mxu0 0
      %2304 = vmatprep.subr.bf16.mxu0 0
      %2305 = vmatpush1.bf16.msra.mxu0 0
      %2306 = vmatprep.subr.bf16.mxu0 0
      %2307 = vmatpush1.bf16.msra.mxu0 0
      %2308 = vmatprep.subr.bf16.mxu0 0
      %2309 = vmatpush1.bf16.msra.mxu0 0
      %2310 = vmatprep.subr.bf16.mxu0 %v2241
      %2311 = vmatpush1.bf16.msra.mxu0 %v2238
      %2312 = vmatprep.subr.bf16.mxu0 0
      %2313 = vmatpush2.bf16.msra.mxu0 0
      %2314 = vmatprep.subr.bf16.mxu0 0
      %2315 = vmatpush2.bf16.msra.mxu0 0
      %2316 = vmatprep.subr.bf16.mxu0 0
      %2317 = vmatpush2.bf16.msra.mxu0 0
      %2318 = vmatprep.subr.bf16.mxu0 0
      %2319 = vmatpush2.bf16.msra.mxu0 0
      %2320 = vmatprep.subr.bf16.mxu0 0
      %2321 = vmatpush2.bf16.msra.mxu0 0
      %2322 = vmatprep.subr.bf16.mxu0 0
      %2323 = vmatpush2.bf16.msra.mxu0 0
      %2324 = vmatprep.subr.bf16.mxu0 0
      %2325 = vmatpush2.bf16.msra.mxu0 0
      %2326 = vmatprep.subr.bf16.mxu0 0
      %2327 = vmatpush2.bf16.msra.mxu0 0
      %2328 = vmatprep.mubr.bf16.mxu0 0
      %2329 = vmatmul.mubr.bf16.gmra.mxu0 %v2229
      %v2330 = vpop.f32.mrf.mxu0
      %v2331 = vadd.f32 0.0, %v2330
      %v2332 = vpop.f32.mrf.mxu0
      %v2333 = vadd.f32 0.0, %v2332
      %v2334 = vpop.f32.mrf.mxu0
      %v2335 = vpop.f32.mrf.mxu0
      %2336 = vdwg.mxu0
      %2337 = vmatprep.subr.bf16.mxu0 0
      %2338 = vmatpush1.bf16.msra.mxu0 0
      %2339 = vmatprep.subr.bf16.mxu0 0
      %2340 = vmatpush1.bf16.msra.mxu0 0
      %2341 = vmatprep.subr.bf16.mxu0 0
      %2342 = vmatpush1.bf16.msra.mxu0 0
      %2343 = vmatprep.subr.bf16.mxu0 0
      %2344 = vmatpush1.bf16.msra.mxu0 0
      %2345 = vmatprep.subr.bf16.mxu0 0
      %2346 = vmatpush1.bf16.msra.mxu0 0
      %2347 = vmatprep.subr.bf16.mxu0 0
      %2348 = vmatpush1.bf16.msra.mxu0 0
      %2349 = vmatprep.subr.bf16.mxu0 0
      %2350 = vmatpush1.bf16.msra.mxu0 0
      %2351 = vmatprep.subr.bf16.mxu0 %v2247
      %2352 = vmatpush1.bf16.msra.mxu0 %v2244
      %2353 = vmatprep.subr.bf16.mxu0 0
      %2354 = vmatpush2.bf16.msra.mxu0 0
      %2355 = vmatprep.subr.bf16.mxu0 0
      %2356 = vmatpush2.bf16.msra.mxu0 0
      %2357 = vmatprep.subr.bf16.mxu0 0
      %2358 = vmatpush2.bf16.msra.mxu0 0
      %2359 = vmatprep.subr.bf16.mxu0 0
      %2360 = vmatpush2.bf16.msra.mxu0 0
      %2361 = vmatprep.subr.bf16.mxu0 0
      %2362 = vmatpush2.bf16.msra.mxu0 0
      %2363 = vmatprep.subr.bf16.mxu0 0
      %2364 = vmatpush2.bf16.msra.mxu0 0
      %2365 = vmatprep.subr.bf16.mxu0 0
      %2366 = vmatpush2.bf16.msra.mxu0 0
      %2367 = vmatprep.subr.bf16.mxu0 0
      %2368 = vmatpush2.bf16.msra.mxu0 0
      %2369 = vmatprep.mubr.bf16.mxu0 0
      %2370 = vmatmul.mubr.bf16.gmra.mxu0 %v2229
      %v2371 = vpop.f32.mrf.mxu0
      %v2372 = vadd.f32 0.0, %v2371
      %v2373 = vpop.f32.mrf.mxu0
      %v2374 = vadd.f32 0.0, %v2373
      %v2375 = vpop.f32.mrf.mxu0
      %v2376 = vpop.f32.mrf.mxu0
      %2377 = vdwg.mxu0
      %2378 = vmatprep.subr.bf16.mxu0 0
      %2379 = vmatpush1.bf16.msra.mxu0 0
      %2380 = vmatprep.subr.bf16.mxu0 0
      %2381 = vmatpush1.bf16.msra.mxu0 0
      %2382 = vmatprep.subr.bf16.mxu0 0
      %2383 = vmatpush1.bf16.msra.mxu0 0
      %2384 = vmatprep.subr.bf16.mxu0 0
      %2385 = vmatpush1.bf16.msra.mxu0 0
      %2386 = vmatprep.subr.bf16.mxu0 0
      %2387 = vmatpush1.bf16.msra.mxu0 0
      %2388 = vmatprep.subr.bf16.mxu0 0
      %2389 = vmatpush1.bf16.msra.mxu0 0
      %2390 = vmatprep.subr.bf16.mxu0 0
      %2391 = vmatpush1.bf16.msra.mxu0 0
      %2392 = vmatprep.subr.bf16.mxu0 %v2253
      %2393 = vmatpush1.bf16.msra.mxu0 %v2250
      %2394 = vmatprep.subr.bf16.mxu0 0
      %2395 = vmatpush2.bf16.msra.mxu0 0
      %2396 = vmatprep.subr.bf16.mxu0 0
      %2397 = vmatpush2.bf16.msra.mxu0 0
      %2398 = vmatprep.subr.bf16.mxu0 0
      %2399 = vmatpush2.bf16.msra.mxu0 0
      %2400 = vmatprep.subr.bf16.mxu0 0
      %2401 = vmatpush2.bf16.msra.mxu0 0
      %2402 = vmatprep.subr.bf16.mxu0 0
      %2403 = vmatpush2.bf16.msra.mxu0 0
      %2404 = vmatprep.subr.bf16.mxu0 0
      %2405 = vmatpush2.bf16.msra.mxu0 0
      %2406 = vmatprep.subr.bf16.mxu0 0
      %2407 = vmatpush2.bf16.msra.mxu0 0
      %2408 = vmatprep.subr.bf16.mxu0 0
      %2409 = vmatpush2.bf16.msra.mxu0 0
      %2410 = vmatprep.mubr.bf16.mxu0 0
      %2411 = vmatmul.mubr.bf16.gmra.mxu0 %v2229
      %v2412 = vpop.f32.mrf.mxu0
      %v2413 = vadd.f32 0.0, %v2412
      %v2414 = vpop.f32.mrf.mxu0
      %v2415 = vadd.f32 0.0, %v2414
      %v2416 = vpop.f32.mrf.mxu0
      %v2417 = vpop.f32.mrf.mxu0
      %2418 = vdwg.mxu0
      %v2419 = vadd.f32 %v2048, %v2290
      %v2420 = vadd.f32 %v2050, %v2292
      %v2421 = vadd.f32 %v2089, %v2331
      %v2422 = vadd.f32 %v2091, %v2333
      %v2423 = vadd.f32 %v2130, %v2372
      %v2424 = vadd.f32 %v2132, %v2374
      %v2425 = vadd.f32 %v2171, %v2413
      %v2426 = vadd.f32 %v2173, %v2415
      %2427 = vrot.lane.b32.xlu0 %v1564, 1
      %v2428 = vpop.permute.xlu0 %2427
      %2429 = vrot.lane.b32.xlu0 %v1566, 1
      %v2430 = vpop.permute.xlu0 %2429
      %2431 = vrot.lane.b32.xlu0 %v1605, 1
      %v2432 = vpop.permute.xlu0 %2431
      %2433 = vrot.lane.b32.xlu0 %v1607, 1
      %v2434 = vpop.permute.xlu0 %2433
      %2435 = vrot.lane.b32.xlu0 %v1646, 1
      %v2436 = vpop.permute.xlu0 %2435
      %2437 = vrot.lane.b32.xlu0 %v1648, 1
      %v2438 = vpop.permute.xlu0 %2437
      %2439 = vrot.lane.b32.xlu0 %v1687, 1
      %v2440 = vpop.permute.xlu0 %2439
      %2441 = vrot.lane.b32.xlu0 %v1689, 1
      %v2442 = vpop.permute.xlu0 %2441
      %v2443 = vsel %vm434, %v2440, %v2442
      %v2444 = vsel %vm434, %v2438, %v2440
      %v2445 = vsel %vm434, %v2436, %v2438
      %v2446 = vsel %vm434, %v2434, %v2436
      %v2447 = vsel %vm434, %v2432, %v2434
      %v2448 = vsel %vm434, %v2430, %v2432
      %v2449 = vsel %vm434, %v2428, %v2430
      %v2450 = vsel %vm434, %v2442, %v2428
      %v2451 = vld [vmem:[%s9 + $0xc0] sm:$0xff]
      %v2452 = vld [vmem:[%s9 + $0xc8] sm:$0xff]
      %v2453 = vld [vmem:[%s9 + $0xd0] sm:$0xff]
      %v2454 = vld [vmem:[%s9 + $0xd8] sm:$0xff]
      %v2455 = vld [vmem:[%s9 + $0xe0] sm:$0xff]
      %v2456 = vld [vmem:[%s9 + $0xe8] sm:$0xff]
      %v2457 = vld [vmem:[%s9 + $0xf0] sm:$0xff]
      %v2458 = vld [vmem:[%s9 + $0xf8] sm:$0xff]
      %v2459 = vmul.f32 %v2450, %v2451
      %v2460 = vmul.f32 %v2449, %v2452
      %v2461 = vmul.f32 %v2448, %v2453
      %v2462 = vmul.f32 %v2447, %v2454
      %v2463 = vmul.f32 %v2446, %v2455
      %v2464 = vmul.f32 %v2445, %v2456
      %v2465 = vmul.f32 %v2444, %v2457
      %v2466 = vmul.f32 %v2443, %v2458
      %s2467 = scalar_lea.vmem %s4, 12
      %v2468 = vld [vmem:[%s2467] sm:$0xf]
      %v2469 = vpack.c.bf16 %v2459, %v2459
      %v2470 = vpack.c.bf16 %v2460, %v2460
      %v2471 = vpack.c.bf16 %v2461, %v2461
      %v2472 = vpack.c.bf16 %v2462, %v2462
      %v2473 = vpack.c.bf16 %v2463, %v2463
      %v2474 = vpack.c.bf16 %v2464, %v2464
      %v2475 = vpack.c.bf16 %v2465, %v2465
      %v2476 = vpack.c.bf16 %v2466, %v2466
      %v2478 = vsel %vm1794, %v2468, 0
      %v2481 = vsel %vm516, %v2469, 0
      %v2484 = vsel %vm516, %v2470, 0
      %v2487 = vsel %vm516, %v2471, 0
      %v2490 = vsel %vm516, %v2472, 0
      %v2493 = vsel %vm516, %v2473, 0
      %v2496 = vsel %vm516, %v2474, 0
      %v2499 = vsel %vm516, %v2475, 0
      %v2502 = vsel %vm516, %v2476, 0
      %2504 = vmatprep.subr.bf16.mxu0 0
      %2505 = vmatpush1.bf16.msra.mxu0 0
      %2506 = vmatprep.subr.bf16.mxu0 0
      %2507 = vmatpush1.bf16.msra.mxu0 0
      %2508 = vmatprep.subr.bf16.mxu0 0
      %2509 = vmatpush1.bf16.msra.mxu0 0
      %2510 = vmatprep.subr.bf16.mxu0 0
      %2511 = vmatpush1.bf16.msra.mxu0 0
      %2512 = vmatprep.subr.bf16.mxu0 0
      %2513 = vmatpush1.bf16.msra.mxu0 0
      %2514 = vmatprep.subr.bf16.mxu0 0
      %2515 = vmatpush1.bf16.msra.mxu0 0
      %2516 = vmatprep.subr.bf16.mxu0 0
      %2517 = vmatpush1.bf16.msra.mxu0 0
      %2518 = vmatprep.subr.bf16.mxu0 %v2484
      %2519 = vmatpush1.bf16.msra.mxu0 %v2481
      %2520 = vmatprep.subr.bf16.mxu0 0
      %2521 = vmatpush2.bf16.msra.mxu0 0
      %2522 = vmatprep.subr.bf16.mxu0 0
      %2523 = vmatpush2.bf16.msra.mxu0 0
      %2524 = vmatprep.subr.bf16.mxu0 0
      %2525 = vmatpush2.bf16.msra.mxu0 0
      %2526 = vmatprep.subr.bf16.mxu0 0
      %2527 = vmatpush2.bf16.msra.mxu0 0
      %2528 = vmatprep.subr.bf16.mxu0 0
      %2529 = vmatpush2.bf16.msra.mxu0 0
      %2530 = vmatprep.subr.bf16.mxu0 0
      %2531 = vmatpush2.bf16.msra.mxu0 0
      %2532 = vmatprep.subr.bf16.mxu0 0
      %2533 = vmatpush2.bf16.msra.mxu0 0
      %2534 = vmatprep.subr.bf16.mxu0 0
      %2535 = vmatpush2.bf16.msra.mxu0 0
      %2536 = vmatprep.mubr.bf16.mxu0 0
      %2537 = vmatmul.mubr.bf16.gmra.mxu0 %v2478
      %v2538 = vpop.f32.mrf.mxu0
      %v2539 = vadd.f32 0.0, %v2538
      %v2540 = vpop.f32.mrf.mxu0
      %v2541 = vadd.f32 0.0, %v2540
      %v2542 = vpop.f32.mrf.mxu0
      %v2543 = vpop.f32.mrf.mxu0
      %2544 = vdwg.mxu0
      %2545 = vmatprep.subr.bf16.mxu0 0
      %2546 = vmatpush1.bf16.msra.mxu0 0
      %2547 = vmatprep.subr.bf16.mxu0 0
      %2548 = vmatpush1.bf16.msra.mxu0 0
      %2549 = vmatprep.subr.bf16.mxu0 0
      %2550 = vmatpush1.bf16.msra.mxu0 0
      %2551 = vmatprep.subr.bf16.mxu0 0
      %2552 = vmatpush1.bf16.msra.mxu0 0
      %2553 = vmatprep.subr.bf16.mxu0 0
      %2554 = vmatpush1.bf16.msra.mxu0 0
      %2555 = vmatprep.subr.bf16.mxu0 0
      %2556 = vmatpush1.bf16.msra.mxu0 0
      %2557 = vmatprep.subr.bf16.mxu0 0
      %2558 = vmatpush1.bf16.msra.mxu0 0
      %2559 = vmatprep.subr.bf16.mxu0 %v2490
      %2560 = vmatpush1.bf16.msra.mxu0 %v2487
      %2561 = vmatprep.subr.bf16.mxu0 0
      %2562 = vmatpush2.bf16.msra.mxu0 0
      %2563 = vmatprep.subr.bf16.mxu0 0
      %2564 = vmatpush2.bf16.msra.mxu0 0
      %2565 = vmatprep.subr.bf16.mxu0 0
      %2566 = vmatpush2.bf16.msra.mxu0 0
      %2567 = vmatprep.subr.bf16.mxu0 0
      %2568 = vmatpush2.bf16.msra.mxu0 0
      %2569 = vmatprep.subr.bf16.mxu0 0
      %2570 = vmatpush2.bf16.msra.mxu0 0
      %2571 = vmatprep.subr.bf16.mxu0 0
      %2572 = vmatpush2.bf16.msra.mxu0 0
      %2573 = vmatprep.subr.bf16.mxu0 0
      %2574 = vmatpush2.bf16.msra.mxu0 0
      %2575 = vmatprep.subr.bf16.mxu0 0
      %2576 = vmatpush2.bf16.msra.mxu0 0
      %2577 = vmatprep.mubr.bf16.mxu0 0
      %2578 = vmatmul.mubr.bf16.gmra.mxu0 %v2478
      %v2579 = vpop.f32.mrf.mxu0
      %v2580 = vadd.f32 0.0, %v2579
      %v2581 = vpop.f32.mrf.mxu0
      %v2582 = vadd.f32 0.0, %v2581
      %v2583 = vpop.f32.mrf.mxu0
      %v2584 = vpop.f32.mrf.mxu0
      %2585 = vdwg.mxu0
      %2586 = vmatprep.subr.bf16.mxu0 0
      %2587 = vmatpush1.bf16.msra.mxu0 0
      %2588 = vmatprep.subr.bf16.mxu0 0
      %2589 = vmatpush1.bf16.msra.mxu0 0
      %2590 = vmatprep.subr.bf16.mxu0 0
      %2591 = vmatpush1.bf16.msra.mxu0 0
      %2592 = vmatprep.subr.bf16.mxu0 0
      %2593 = vmatpush1.bf16.msra.mxu0 0
      %2594 = vmatprep.subr.bf16.mxu0 0
      %2595 = vmatpush1.bf16.msra.mxu0 0
      %2596 = vmatprep.subr.bf16.mxu0 0
      %2597 = vmatpush1.bf16.msra.mxu0 0
      %2598 = vmatprep.subr.bf16.mxu0 0
      %2599 = vmatpush1.bf16.msra.mxu0 0
      %2600 = vmatprep.subr.bf16.mxu0 %v2496
      %2601 = vmatpush1.bf16.msra.mxu0 %v2493
      %2602 = vmatprep.subr.bf16.mxu0 0
      %2603 = vmatpush2.bf16.msra.mxu0 0
      %2604 = vmatprep.subr.bf16.mxu0 0
      %2605 = vmatpush2.bf16.msra.mxu0 0
      %2606 = vmatprep.subr.bf16.mxu0 0
      %2607 = vmatpush2.bf16.msra.mxu0 0
      %2608 = vmatprep.subr.bf16.mxu0 0
      %2609 = vmatpush2.bf16.msra.mxu0 0
      %2610 = vmatprep.subr.bf16.mxu0 0
      %2611 = vmatpush2.bf16.msra.mxu0 0
      %2612 = vmatprep.subr.bf16.mxu0 0
      %2613 = vmatpush2.bf16.msra.mxu0 0
      %2614 = vmatprep.subr.bf16.mxu0 0
      %2615 = vmatpush2.bf16.msra.mxu0 0
      %2616 = vmatprep.subr.bf16.mxu0 0
      %2617 = vmatpush2.bf16.msra.mxu0 0
      %2618 = vmatprep.mubr.bf16.mxu0 0
      %2619 = vmatmul.mubr.bf16.gmra.mxu0 %v2478
      %v2620 = vpop.f32.mrf.mxu0
      %v2621 = vadd.f32 0.0, %v2620
      %v2622 = vpop.f32.mrf.mxu0
      %v2623 = vadd.f32 0.0, %v2622
      %v2624 = vpop.f32.mrf.mxu0
      %v2625 = vpop.f32.mrf.mxu0
      %2626 = vdwg.mxu0
      %2627 = vmatprep.subr.bf16.mxu0 0
      %2628 = vmatpush1.bf16.msra.mxu0 0
      %2629 = vmatprep.subr.bf16.mxu0 0
      %2630 = vmatpush1.bf16.msra.mxu0 0
      %2631 = vmatprep.subr.bf16.mxu0 0
      %2632 = vmatpush1.bf16.msra.mxu0 0
      %2633 = vmatprep.subr.bf16.mxu0 0
      %2634 = vmatpush1.bf16.msra.mxu0 0
      %2635 = vmatprep.subr.bf16.mxu0 0
      %2636 = vmatpush1.bf16.msra.mxu0 0
      %2637 = vmatprep.subr.bf16.mxu0 0
      %2638 = vmatpush1.bf16.msra.mxu0 0
      %2639 = vmatprep.subr.bf16.mxu0 0
      %2640 = vmatpush1.bf16.msra.mxu0 0
      %2641 = vmatprep.subr.bf16.mxu0 %v2502
      %2642 = vmatpush1.bf16.msra.mxu0 %v2499
      %2643 = vmatprep.subr.bf16.mxu0 0
      %2644 = vmatpush2.bf16.msra.mxu0 0
      %2645 = vmatprep.subr.bf16.mxu0 0
      %2646 = vmatpush2.bf16.msra.mxu0 0
      %2647 = vmatprep.subr.bf16.mxu0 0
      %2648 = vmatpush2.bf16.msra.mxu0 0
      %2649 = vmatprep.subr.bf16.mxu0 0
      %2650 = vmatpush2.bf16.msra.mxu0 0
      %2651 = vmatprep.subr.bf16.mxu0 0
      %2652 = vmatpush2.bf16.msra.mxu0 0
      %2653 = vmatprep.subr.bf16.mxu0 0
      %2654 = vmatpush2.bf16.msra.mxu0 0
      %2655 = vmatprep.subr.bf16.mxu0 0
      %2656 = vmatpush2.bf16.msra.mxu0 0
      %2657 = vmatprep.subr.bf16.mxu0 0
      %2658 = vmatpush2.bf16.msra.mxu0 0
      %2659 = vmatprep.mubr.bf16.mxu0 0
      %2660 = vmatmul.mubr.bf16.gmra.mxu0 %v2478
      %v2661 = vpop.f32.mrf.mxu0
      %v2662 = vadd.f32 0.0, %v2661
      %v2663 = vpop.f32.mrf.mxu0
      %v2664 = vadd.f32 0.0, %v2663
      %v2665 = vpop.f32.mrf.mxu0
      %v2666 = vpop.f32.mrf.mxu0
      %2667 = vdwg.mxu0
      %v2668 = vadd.f32 %v2419, %v2539
      %v2669 = vadd.f32 %v2420, %v2541
      %v2670 = vadd.f32 %v2421, %v2580
      %v2671 = vadd.f32 %v2422, %v2582
      %v2672 = vadd.f32 %v2423, %v2621
      %v2673 = vadd.f32 %v2424, %v2623
      %v2674 = vadd.f32 %v2425, %v2662
      %v2675 = vadd.f32 %v2426, %v2664
      %s2676 = scalar_lea.vmem %s4, 16
      %v2677 = vld [vmem:[%s2676] sm:$0xf]
      %v2678 = vpack.c.bf16 %v1564, %v1564
      %v2679 = vpack.c.bf16 %v1566, %v1566
      %v2680 = vpack.c.bf16 %v1605, %v1605
      %v2681 = vpack.c.bf16 %v1607, %v1607
      %v2682 = vpack.c.bf16 %v1646, %v1646
      %v2683 = vpack.c.bf16 %v1648, %v1648
      %v2684 = vpack.c.bf16 %v1687, %v1687
      %v2685 = vpack.c.bf16 %v1689, %v1689
      %v2687 = vsel %vm1794, %v2677, 0
      %v2690 = vsel %vm516, %v2678, 0
      %v2693 = vsel %vm516, %v2679, 0
      %v2696 = vsel %vm516, %v2680, 0
      %v2699 = vsel %vm516, %v2681, 0
      %v2702 = vsel %vm516, %v2682, 0
      %v2705 = vsel %vm516, %v2683, 0
      %v2708 = vsel %vm516, %v2684, 0
      %v2711 = vsel %vm516, %v2685, 0
      %2713 = vmatprep.subr.bf16.mxu0 0
      %2714 = vmatpush1.bf16.msra.mxu0 0
      %2715 = vmatprep.subr.bf16.mxu0 0
      %2716 = vmatpush1.bf16.msra.mxu0 0
      %2717 = vmatprep.subr.bf16.mxu0 0
      %2718 = vmatpush1.bf16.msra.mxu0 0
      %2719 = vmatprep.subr.bf16.mxu0 0
      %2720 = vmatpush1.bf16.msra.mxu0 0
      %2721 = vmatprep.subr.bf16.mxu0 0
      %2722 = vmatpush1.bf16.msra.mxu0 0
      %2723 = vmatprep.subr.bf16.mxu0 0
      %2724 = vmatpush1.bf16.msra.mxu0 0
      %2725 = vmatprep.subr.bf16.mxu0 0
      %2726 = vmatpush1.bf16.msra.mxu0 0
      %2727 = vmatprep.subr.bf16.mxu0 %v2693
      %2728 = vmatpush1.bf16.msra.mxu0 %v2690
      %2729 = vmatprep.subr.bf16.mxu0 0
      %2730 = vmatpush2.bf16.msra.mxu0 0
      %2731 = vmatprep.subr.bf16.mxu0 0
      %2732 = vmatpush2.bf16.msra.mxu0 0
      %2733 = vmatprep.subr.bf16.mxu0 0
      %2734 = vmatpush2.bf16.msra.mxu0 0
      %2735 = vmatprep.subr.bf16.mxu0 0
      %2736 = vmatpush2.bf16.msra.mxu0 0
      %2737 = vmatprep.subr.bf16.mxu0 0
      %2738 = vmatpush2.bf16.msra.mxu0 0
      %2739 = vmatprep.subr.bf16.mxu0 0
      %2740 = vmatpush2.bf16.msra.mxu0 0
      %2741 = vmatprep.subr.bf16.mxu0 0
      %2742 = vmatpush2.bf16.msra.mxu0 0
      %2743 = vmatprep.subr.bf16.mxu0 0
      %2744 = vmatpush2.bf16.msra.mxu0 0
      %2745 = vmatprep.mubr.bf16.mxu0 0
      %2746 = vmatmul.mubr.bf16.gmra.mxu0 %v2687
      %v2747 = vpop.f32.mrf.mxu0
      %v2748 = vadd.f32 0.0, %v2747
      %v2749 = vpop.f32.mrf.mxu0
      %v2750 = vadd.f32 0.0, %v2749
      %v2751 = vpop.f32.mrf.mxu0
      %v2752 = vpop.f32.mrf.mxu0
      %2753 = vdwg.mxu0
      %2754 = vmatprep.subr.bf16.mxu0 0
      %2755 = vmatpush1.bf16.msra.mxu0 0
      %2756 = vmatprep.subr.bf16.mxu0 0
      %2757 = vmatpush1.bf16.msra.mxu0 0
      %2758 = vmatprep.subr.bf16.mxu0 0
      %2759 = vmatpush1.bf16.msra.mxu0 0
      %2760 = vmatprep.subr.bf16.mxu0 0
      %2761 = vmatpush1.bf16.msra.mxu0 0
      %2762 = vmatprep.subr.bf16.mxu0 0
      %2763 = vmatpush1.bf16.msra.mxu0 0
      %2764 = vmatprep.subr.bf16.mxu0 0
      %2765 = vmatpush1.bf16.msra.mxu0 0
      %2766 = vmatprep.subr.bf16.mxu0 0
      %2767 = vmatpush1.bf16.msra.mxu0 0
      %2768 = vmatprep.subr.bf16.mxu0 %v2699
      %2769 = vmatpush1.bf16.msra.mxu0 %v2696
      %2770 = vmatprep.subr.bf16.mxu0 0
      %2771 = vmatpush2.bf16.msra.mxu0 0
      %2772 = vmatprep.subr.bf16.mxu0 0
      %2773 = vmatpush2.bf16.msra.mxu0 0
      %2774 = vmatprep.subr.bf16.mxu0 0
      %2775 = vmatpush2.bf16.msra.mxu0 0
      %2776 = vmatprep.subr.bf16.mxu0 0
      %2777 = vmatpush2.bf16.msra.mxu0 0
      %2778 = vmatprep.subr.bf16.mxu0 0
      %2779 = vmatpush2.bf16.msra.mxu0 0
      %2780 = vmatprep.subr.bf16.mxu0 0
      %2781 = vmatpush2.bf16.msra.mxu0 0
      %2782 = vmatprep.subr.bf16.mxu0 0
      %2783 = vmatpush2.bf16.msra.mxu0 0
      %2784 = vmatprep.subr.bf16.mxu0 0
      %2785 = vmatpush2.bf16.msra.mxu0 0
      %2786 = vmatprep.mubr.bf16.mxu0 0
      %2787 = vmatmul.mubr.bf16.gmra.mxu0 %v2687
      %v2788 = vpop.f32.mrf.mxu0
      %v2789 = vadd.f32 0.0, %v2788
      %v2790 = vpop.f32.mrf.mxu0
      %v2791 = vadd.f32 0.0, %v2790
      %v2792 = vpop.f32.mrf.mxu0
      %v2793 = vpop.f32.mrf.mxu0
      %2794 = vdwg.mxu0
      %2795 = vmatprep.subr.bf16.mxu0 0
      %2796 = vmatpush1.bf16.msra.mxu0 0
      %2797 = vmatprep.subr.bf16.mxu0 0
      %2798 = vmatpush1.bf16.msra.mxu0 0
      %2799 = vmatprep.subr.bf16.mxu0 0
      %2800 = vmatpush1.bf16.msra.mxu0 0
      %2801 = vmatprep.subr.bf16.mxu0 0
      %2802 = vmatpush1.bf16.msra.mxu0 0
      %2803 = vmatprep.subr.bf16.mxu0 0
      %2804 = vmatpush1.bf16.msra.mxu0 0
      %2805 = vmatprep.subr.bf16.mxu0 0
      %2806 = vmatpush1.bf16.msra.mxu0 0
      %2807 = vmatprep.subr.bf16.mxu0 0
      %2808 = vmatpush1.bf16.msra.mxu0 0
      %2809 = vmatprep.subr.bf16.mxu0 %v2705
      %2810 = vmatpush1.bf16.msra.mxu0 %v2702
      %2811 = vmatprep.subr.bf16.mxu0 0
      %2812 = vmatpush2.bf16.msra.mxu0 0
      %2813 = vmatprep.subr.bf16.mxu0 0
      %2814 = vmatpush2.bf16.msra.mxu0 0
      %2815 = vmatprep.subr.bf16.mxu0 0
      %2816 = vmatpush2.bf16.msra.mxu0 0
      %2817 = vmatprep.subr.bf16.mxu0 0
      %2818 = vmatpush2.bf16.msra.mxu0 0
      %2819 = vmatprep.subr.bf16.mxu0 0
      %2820 = vmatpush2.bf16.msra.mxu0 0
      %2821 = vmatprep.subr.bf16.mxu0 0
      %2822 = vmatpush2.bf16.msra.mxu0 0
      %2823 = vmatprep.subr.bf16.mxu0 0
      %2824 = vmatpush2.bf16.msra.mxu0 0
      %2825 = vmatprep.subr.bf16.mxu0 0
      %2826 = vmatpush2.bf16.msra.mxu0 0
      %2827 = vmatprep.mubr.bf16.mxu0 0
      %2828 = vmatmul.mubr.bf16.gmra.mxu0 %v2687
      %v2829 = vpop.f32.mrf.mxu0
      %v2830 = vadd.f32 0.0, %v2829
      %v2831 = vpop.f32.mrf.mxu0
      %v2832 = vadd.f32 0.0, %v2831
      %v2833 = vpop.f32.mrf.mxu0
      %v2834 = vpop.f32.mrf.mxu0
      %2835 = vdwg.mxu0
      %2836 = vmatprep.subr.bf16.mxu0 0
      %2837 = vmatpush1.bf16.msra.mxu0 0
      %2838 = vmatprep.subr.bf16.mxu0 0
      %2839 = vmatpush1.bf16.msra.mxu0 0
      %2840 = vmatprep.subr.bf16.mxu0 0
      %2841 = vmatpush1.bf16.msra.mxu0 0
      %2842 = vmatprep.subr.bf16.mxu0 0
      %2843 = vmatpush1.bf16.msra.mxu0 0
      %2844 = vmatprep.subr.bf16.mxu0 0
      %2845 = vmatpush1.bf16.msra.mxu0 0
      %2846 = vmatprep.subr.bf16.mxu0 0
      %2847 = vmatpush1.bf16.msra.mxu0 0
      %2848 = vmatprep.subr.bf16.mxu0 0
      %2849 = vmatpush1.bf16.msra.mxu0 0
      %2850 = vmatprep.subr.bf16.mxu0 %v2711
      %2851 = vmatpush1.bf16.msra.mxu0 %v2708
      %2852 = vmatprep.subr.bf16.mxu0 0
      %2853 = vmatpush2.bf16.msra.mxu0 0
      %2854 = vmatprep.subr.bf16.mxu0 0
      %2855 = vmatpush2.bf16.msra.mxu0 0
      %2856 = vmatprep.subr.bf16.mxu0 0
      %2857 = vmatpush2.bf16.msra.mxu0 0
      %2858 = vmatprep.subr.bf16.mxu0 0
      %2859 = vmatpush2.bf16.msra.mxu0 0
      %2860 = vmatprep.subr.bf16.mxu0 0
      %2861 = vmatpush2.bf16.msra.mxu0 0
      %2862 = vmatprep.subr.bf16.mxu0 0
      %2863 = vmatpush2.bf16.msra.mxu0 0
      %2864 = vmatprep.subr.bf16.mxu0 0
      %2865 = vmatpush2.bf16.msra.mxu0 0
      %2866 = vmatprep.subr.bf16.mxu0 0
      %2867 = vmatpush2.bf16.msra.mxu0 0
      %2868 = vmatprep.mubr.bf16.mxu0 0
      %2869 = vmatmul.mubr.bf16.gmra.mxu0 %v2687
      %v2870 = vpop.f32.mrf.mxu0
      %v2871 = vadd.f32 0.0, %v2870
      %v2872 = vpop.f32.mrf.mxu0
      %v2873 = vadd.f32 0.0, %v2872
      %v2874 = vpop.f32.mrf.mxu0
      %v2875 = vpop.f32.mrf.mxu0
      %2876 = vdwg.mxu0
      %v2877 = vadd.f32 %v2668, %v2748
      %v2878 = vadd.f32 %v2669, %v2750
      %v2879 = vadd.f32 %v2670, %v2789
      %v2880 = vadd.f32 %v2671, %v2791
      %v2881 = vadd.f32 %v2672, %v2830
      %v2882 = vadd.f32 %v2673, %v2832
      %v2883 = vadd.f32 %v2674, %v2871
      %v2884 = vadd.f32 %v2675, %v2873
      %2885 = vrot.lane.b32.xlu0 %v1564, 127
      %v2886 = vpop.permute.xlu0 %2885
      %2887 = vrot.lane.b32.xlu0 %v1566, 127
      %v2888 = vpop.permute.xlu0 %2887
      %2889 = vrot.lane.b32.xlu0 %v1605, 127
      %v2890 = vpop.permute.xlu0 %2889
      %2891 = vrot.lane.b32.xlu0 %v1607, 127
      %v2892 = vpop.permute.xlu0 %2891
      %2893 = vrot.lane.b32.xlu0 %v1646, 127
      %v2894 = vpop.permute.xlu0 %2893
      %2895 = vrot.lane.b32.xlu0 %v1648, 127
      %v2896 = vpop.permute.xlu0 %2895
      %2897 = vrot.lane.b32.xlu0 %v1687, 127
      %v2898 = vpop.permute.xlu0 %2897
      %2899 = vrot.lane.b32.xlu0 %v1689, 127
      %v2900 = vpop.permute.xlu0 %2899
      %v2901 = vsel %vm441, %v2898, %v2900
      %v2902 = vsel %vm441, %v2896, %v2898
      %v2903 = vsel %vm441, %v2894, %v2896
      %v2904 = vsel %vm441, %v2892, %v2894
      %v2905 = vsel %vm441, %v2890, %v2892
      %v2906 = vsel %vm441, %v2888, %v2890
      %v2907 = vsel %vm441, %v2886, %v2888
      %v2908 = vsel %vm441, %v2900, %v2886
      %v2909 = vld [vmem:[%s9 + $0x140] sm:$0xff]
      %v2910 = vld [vmem:[%s9 + $0x148] sm:$0xff]
      %v2911 = vld [vmem:[%s9 + $0x150] sm:$0xff]
      %v2912 = vld [vmem:[%s9 + $0x158] sm:$0xff]
      %v2913 = vld [vmem:[%s9 + $0x160] sm:$0xff]
      %v2914 = vld [vmem:[%s9 + $0x168] sm:$0xff]
      %v2915 = vld [vmem:[%s9 + $0x170] sm:$0xff]
      %v2916 = vld [vmem:[%s9 + $0x178] sm:$0xff]
      %v2917 = vmul.f32 %v2907, %v2909
      %v2918 = vmul.f32 %v2906, %v2910
      %v2919 = vmul.f32 %v2905, %v2911
      %v2920 = vmul.f32 %v2904, %v2912
      %v2921 = vmul.f32 %v2903, %v2913
      %v2922 = vmul.f32 %v2902, %v2914
      %v2923 = vmul.f32 %v2901, %v2915
      %v2924 = vmul.f32 %v2908, %v2916
      %s2925 = scalar_lea.vmem %s4, 20
      %v2926 = vld [vmem:[%s2925] sm:$0xf]
      %v2927 = vpack.c.bf16 %v2917, %v2917
      %v2928 = vpack.c.bf16 %v2918, %v2918
      %v2929 = vpack.c.bf16 %v2919, %v2919
      %v2930 = vpack.c.bf16 %v2920, %v2920
      %v2931 = vpack.c.bf16 %v2921, %v2921
      %v2932 = vpack.c.bf16 %v2922, %v2922
      %v2933 = vpack.c.bf16 %v2923, %v2923
      %v2934 = vpack.c.bf16 %v2924, %v2924
      %v2936 = vsel %vm1794, %v2926, 0
      %v2939 = vsel %vm516, %v2927, 0
      %v2942 = vsel %vm516, %v2928, 0
      %v2945 = vsel %vm516, %v2929, 0
      %v2948 = vsel %vm516, %v2930, 0
      %v2951 = vsel %vm516, %v2931, 0
      %v2954 = vsel %vm516, %v2932, 0
      %v2957 = vsel %vm516, %v2933, 0
      %v2960 = vsel %vm516, %v2934, 0
      %2962 = vmatprep.subr.bf16.mxu0 0
      %2963 = vmatpush1.bf16.msra.mxu0 0
      %2964 = vmatprep.subr.bf16.mxu0 0
      %2965 = vmatpush1.bf16.msra.mxu0 0
      %2966 = vmatprep.subr.bf16.mxu0 0
      %2967 = vmatpush1.bf16.msra.mxu0 0
      %2968 = vmatprep.subr.bf16.mxu0 0
      %2969 = vmatpush1.bf16.msra.mxu0 0
      %2970 = vmatprep.subr.bf16.mxu0 0
      %2971 = vmatpush1.bf16.msra.mxu0 0
      %2972 = vmatprep.subr.bf16.mxu0 0
      %2973 = vmatpush1.bf16.msra.mxu0 0
      %2974 = vmatprep.subr.bf16.mxu0 0
      %2975 = vmatpush1.bf16.msra.mxu0 0
      %2976 = vmatprep.subr.bf16.mxu0 %v2942
      %2977 = vmatpush1.bf16.msra.mxu0 %v2939
      %2978 = vmatprep.subr.bf16.mxu0 0
      %2979 = vmatpush2.bf16.msra.mxu0 0
      %2980 = vmatprep.subr.bf16.mxu0 0
      %2981 = vmatpush2.bf16.msra.mxu0 0
      %2982 = vmatprep.subr.bf16.mxu0 0
      %2983 = vmatpush2.bf16.msra.mxu0 0
      %2984 = vmatprep.subr.bf16.mxu0 0
      %2985 = vmatpush2.bf16.msra.mxu0 0
      %2986 = vmatprep.subr.bf16.mxu0 0
      %2987 = vmatpush2.bf16.msra.mxu0 0
      %2988 = vmatprep.subr.bf16.mxu0 0
      %2989 = vmatpush2.bf16.msra.mxu0 0
      %2990 = vmatprep.subr.bf16.mxu0 0
      %2991 = vmatpush2.bf16.msra.mxu0 0
      %2992 = vmatprep.subr.bf16.mxu0 0
      %2993 = vmatpush2.bf16.msra.mxu0 0
      %2994 = vmatprep.mubr.bf16.mxu0 0
      %2995 = vmatmul.mubr.bf16.gmra.mxu0 %v2936
      %v2996 = vpop.f32.mrf.mxu0
      %v2997 = vadd.f32 0.0, %v2996
      %v2998 = vpop.f32.mrf.mxu0
      %v2999 = vadd.f32 0.0, %v2998
      %v3000 = vpop.f32.mrf.mxu0
      %v3001 = vpop.f32.mrf.mxu0
      %3002 = vdwg.mxu0
      %3003 = vmatprep.subr.bf16.mxu0 0
      %3004 = vmatpush1.bf16.msra.mxu0 0
      %3005 = vmatprep.subr.bf16.mxu0 0
      %3006 = vmatpush1.bf16.msra.mxu0 0
      %3007 = vmatprep.subr.bf16.mxu0 0
      %3008 = vmatpush1.bf16.msra.mxu0 0
      %3009 = vmatprep.subr.bf16.mxu0 0
      %3010 = vmatpush1.bf16.msra.mxu0 0
      %3011 = vmatprep.subr.bf16.mxu0 0
      %3012 = vmatpush1.bf16.msra.mxu0 0
      %3013 = vmatprep.subr.bf16.mxu0 0
      %3014 = vmatpush1.bf16.msra.mxu0 0
      %3015 = vmatprep.subr.bf16.mxu0 0
      %3016 = vmatpush1.bf16.msra.mxu0 0
      %3017 = vmatprep.subr.bf16.mxu0 %v2948
      %3018 = vmatpush1.bf16.msra.mxu0 %v2945
      %3019 = vmatprep.subr.bf16.mxu0 0
      %3020 = vmatpush2.bf16.msra.mxu0 0
      %3021 = vmatprep.subr.bf16.mxu0 0
      %3022 = vmatpush2.bf16.msra.mxu0 0
      %3023 = vmatprep.subr.bf16.mxu0 0
      %3024 = vmatpush2.bf16.msra.mxu0 0
      %3025 = vmatprep.subr.bf16.mxu0 0
      %3026 = vmatpush2.bf16.msra.mxu0 0
      %3027 = vmatprep.subr.bf16.mxu0 0
      %3028 = vmatpush2.bf16.msra.mxu0 0
      %3029 = vmatprep.subr.bf16.mxu0 0
      %3030 = vmatpush2.bf16.msra.mxu0 0
      %3031 = vmatprep.subr.bf16.mxu0 0
      %3032 = vmatpush2.bf16.msra.mxu0 0
      %3033 = vmatprep.subr.bf16.mxu0 0
      %3034 = vmatpush2.bf16.msra.mxu0 0
      %3035 = vmatprep.mubr.bf16.mxu0 0
      %3036 = vmatmul.mubr.bf16.gmra.mxu0 %v2936
      %v3037 = vpop.f32.mrf.mxu0
      %v3038 = vadd.f32 0.0, %v3037
      %v3039 = vpop.f32.mrf.mxu0
      %v3040 = vadd.f32 0.0, %v3039
      %v3041 = vpop.f32.mrf.mxu0
      %v3042 = vpop.f32.mrf.mxu0
      %3043 = vdwg.mxu0
      %3044 = vmatprep.subr.bf16.mxu0 0
      %3045 = vmatpush1.bf16.msra.mxu0 0
      %3046 = vmatprep.subr.bf16.mxu0 0
      %3047 = vmatpush1.bf16.msra.mxu0 0
      %3048 = vmatprep.subr.bf16.mxu0 0
      %3049 = vmatpush1.bf16.msra.mxu0 0
      %3050 = vmatprep.subr.bf16.mxu0 0
      %3051 = vmatpush1.bf16.msra.mxu0 0
      %3052 = vmatprep.subr.bf16.mxu0 0
      %3053 = vmatpush1.bf16.msra.mxu0 0
      %3054 = vmatprep.subr.bf16.mxu0 0
      %3055 = vmatpush1.bf16.msra.mxu0 0
      %3056 = vmatprep.subr.bf16.mxu0 0
      %3057 = vmatpush1.bf16.msra.mxu0 0
      %3058 = vmatprep.subr.bf16.mxu0 %v2954
      %3059 = vmatpush1.bf16.msra.mxu0 %v2951
      %3060 = vmatprep.subr.bf16.mxu0 0
      %3061 = vmatpush2.bf16.msra.mxu0 0
      %3062 = vmatprep.subr.bf16.mxu0 0
      %3063 = vmatpush2.bf16.msra.mxu0 0
      %3064 = vmatprep.subr.bf16.mxu0 0
      %3065 = vmatpush2.bf16.msra.mxu0 0
      %3066 = vmatprep.subr.bf16.mxu0 0
      %3067 = vmatpush2.bf16.msra.mxu0 0
      %3068 = vmatprep.subr.bf16.mxu0 0
      %3069 = vmatpush2.bf16.msra.mxu0 0
      %3070 = vmatprep.subr.bf16.mxu0 0
      %3071 = vmatpush2.bf16.msra.mxu0 0
      %3072 = vmatprep.subr.bf16.mxu0 0
      %3073 = vmatpush2.bf16.msra.mxu0 0
      %3074 = vmatprep.subr.bf16.mxu0 0
      %3075 = vmatpush2.bf16.msra.mxu0 0
      %3076 = vmatprep.mubr.bf16.mxu0 0
      %3077 = vmatmul.mubr.bf16.gmra.mxu0 %v2936
      %v3078 = vpop.f32.mrf.mxu0
      %v3079 = vadd.f32 0.0, %v3078
      %v3080 = vpop.f32.mrf.mxu0
      %v3081 = vadd.f32 0.0, %v3080
      %v3082 = vpop.f32.mrf.mxu0
      %v3083 = vpop.f32.mrf.mxu0
      %3084 = vdwg.mxu0
      %3085 = vmatprep.subr.bf16.mxu0 0
      %3086 = vmatpush1.bf16.msra.mxu0 0
      %3087 = vmatprep.subr.bf16.mxu0 0
      %3088 = vmatpush1.bf16.msra.mxu0 0
      %3089 = vmatprep.subr.bf16.mxu0 0
      %3090 = vmatpush1.bf16.msra.mxu0 0
      %3091 = vmatprep.subr.bf16.mxu0 0
      %3092 = vmatpush1.bf16.msra.mxu0 0
      %3093 = vmatprep.subr.bf16.mxu0 0
      %3094 = vmatpush1.bf16.msra.mxu0 0
      %3095 = vmatprep.subr.bf16.mxu0 0
      %3096 = vmatpush1.bf16.msra.mxu0 0
      %3097 = vmatprep.subr.bf16.mxu0 0
      %3098 = vmatpush1.bf16.msra.mxu0 0
      %3099 = vmatprep.subr.bf16.mxu0 %v2960
      %3100 = vmatpush1.bf16.msra.mxu0 %v2957
      %3101 = vmatprep.subr.bf16.mxu0 0
      %3102 = vmatpush2.bf16.msra.mxu0 0
      %3103 = vmatprep.subr.bf16.mxu0 0
      %3104 = vmatpush2.bf16.msra.mxu0 0
      %3105 = vmatprep.subr.bf16.mxu0 0
      %3106 = vmatpush2.bf16.msra.mxu0 0
      %3107 = vmatprep.subr.bf16.mxu0 0
      %3108 = vmatpush2.bf16.msra.mxu0 0
      %3109 = vmatprep.subr.bf16.mxu0 0
      %3110 = vmatpush2.bf16.msra.mxu0 0
      %3111 = vmatprep.subr.bf16.mxu0 0
      %3112 = vmatpush2.bf16.msra.mxu0 0
      %3113 = vmatprep.subr.bf16.mxu0 0
      %3114 = vmatpush2.bf16.msra.mxu0 0
      %3115 = vmatprep.subr.bf16.mxu0 0
      %3116 = vmatpush2.bf16.msra.mxu0 0
      %3117 = vmatprep.mubr.bf16.mxu0 0
      %3118 = vmatmul.mubr.bf16.gmra.mxu0 %v2936
      %v3119 = vpop.f32.mrf.mxu0
      %v3120 = vadd.f32 0.0, %v3119
      %v3121 = vpop.f32.mrf.mxu0
      %v3122 = vadd.f32 0.0, %v3121
      %v3123 = vpop.f32.mrf.mxu0
      %v3124 = vpop.f32.mrf.mxu0
      %3125 = vdwg.mxu0
      %v3126 = vadd.f32 %v2877, %v2997
      %v3127 = vadd.f32 %v2878, %v2999
      %v3128 = vadd.f32 %v2879, %v3038
      %v3129 = vadd.f32 %v2880, %v3040
      %v3130 = vadd.f32 %v2881, %v3079
      %v3131 = vadd.f32 %v2882, %v3081
      %v3132 = vadd.f32 %v2883, %v3120
      %v3133 = vadd.f32 %v2884, %v3122
      %3134 = vrot.lane.b32.xlu0 %v1564, 97
      %v3135 = vpop.permute.xlu0 %3134
      %3136 = vrot.lane.b32.xlu0 %v1566, 97
      %v3137 = vpop.permute.xlu0 %3136
      %3138 = vrot.lane.b32.xlu0 %v1605, 97
      %v3139 = vpop.permute.xlu0 %3138
      %3140 = vrot.lane.b32.xlu0 %v1607, 97
      %v3141 = vpop.permute.xlu0 %3140
      %3142 = vrot.lane.b32.xlu0 %v1646, 97
      %v3143 = vpop.permute.xlu0 %3142
      %3144 = vrot.lane.b32.xlu0 %v1648, 97
      %v3145 = vpop.permute.xlu0 %3144
      %3146 = vrot.lane.b32.xlu0 %v1687, 97
      %v3147 = vpop.permute.xlu0 %3146
      %3148 = vrot.lane.b32.xlu0 %v1689, 97
      %v3149 = vpop.permute.xlu0 %3148
      %vm3150 = vcmp.lt.s32.totalorder %v412, 97
      %v3151 = vsel %vm3150, %v3147, %v3149
      %v3152 = vsel %vm3150, %v3145, %v3147
      %v3153 = vsel %vm3150, %v3143, %v3145
      %v3154 = vsel %vm3150, %v3141, %v3143
      %v3155 = vsel %vm3150, %v3139, %v3141
      %v3156 = vsel %vm3150, %v3137, %v3139
      %v3157 = vsel %vm3150, %v3135, %v3137
      %v3158 = vsel %vm3150, %v3149, %v3135
      %v3159 = vld [vmem:[%s9 + $0x180] sm:$0xff]
      %v3160 = vld [vmem:[%s9 + $0x188] sm:$0xff]
      %v3161 = vld [vmem:[%s9 + $0x190] sm:$0xff]
      %v3162 = vld [vmem:[%s9 + $0x198] sm:$0xff]
      %v3163 = vld [vmem:[%s9 + $0x1a0] sm:$0xff]
      %v3164 = vld [vmem:[%s9 + $0x1a8] sm:$0xff]
      %v3165 = vld [vmem:[%s9 + $0x1b0] sm:$0xff]
      %v3166 = vld [vmem:[%s9 + $0x1b8] sm:$0xff]
      %v3167 = vmul.f32 %v3157, %v3159
      %v3168 = vmul.f32 %v3156, %v3160
      %v3169 = vmul.f32 %v3155, %v3161
      %v3170 = vmul.f32 %v3154, %v3162
      %v3171 = vmul.f32 %v3153, %v3163
      %v3172 = vmul.f32 %v3152, %v3164
      %v3173 = vmul.f32 %v3151, %v3165
      %v3174 = vmul.f32 %v3158, %v3166
      %s3175 = scalar_lea.vmem %s4, 24
      %v3176 = vld [vmem:[%s3175] sm:$0xf]
      %v3177 = vpack.c.bf16 %v3167, %v3167
      %v3178 = vpack.c.bf16 %v3168, %v3168
      %v3179 = vpack.c.bf16 %v3169, %v3169
      %v3180 = vpack.c.bf16 %v3170, %v3170
      %v3181 = vpack.c.bf16 %v3171, %v3171
      %v3182 = vpack.c.bf16 %v3172, %v3172
      %v3183 = vpack.c.bf16 %v3173, %v3173
      %v3184 = vpack.c.bf16 %v3174, %v3174
      %v3186 = vsel %vm1794, %v3176, 0
      %v3189 = vsel %vm516, %v3177, 0
      %v3192 = vsel %vm516, %v3178, 0
      %v3195 = vsel %vm516, %v3179, 0
      %v3198 = vsel %vm516, %v3180, 0
      %v3201 = vsel %vm516, %v3181, 0
      %v3204 = vsel %vm516, %v3182, 0
      %v3207 = vsel %vm516, %v3183, 0
      %v3210 = vsel %vm516, %v3184, 0
      %3212 = vmatprep.subr.bf16.mxu0 0
      %3213 = vmatpush1.bf16.msra.mxu0 0
      %3214 = vmatprep.subr.bf16.mxu0 0
      %3215 = vmatpush1.bf16.msra.mxu0 0
      %3216 = vmatprep.subr.bf16.mxu0 0
      %3217 = vmatpush1.bf16.msra.mxu0 0
      %3218 = vmatprep.subr.bf16.mxu0 0
      %3219 = vmatpush1.bf16.msra.mxu0 0
      %3220 = vmatprep.subr.bf16.mxu0 0
      %3221 = vmatpush1.bf16.msra.mxu0 0
      %3222 = vmatprep.subr.bf16.mxu0 0
      %3223 = vmatpush1.bf16.msra.mxu0 0
      %3224 = vmatprep.subr.bf16.mxu0 0
      %3225 = vmatpush1.bf16.msra.mxu0 0
      %3226 = vmatprep.subr.bf16.mxu0 %v3192
      %3227 = vmatpush1.bf16.msra.mxu0 %v3189
      %3228 = vmatprep.subr.bf16.mxu0 0
      %3229 = vmatpush2.bf16.msra.mxu0 0
      %3230 = vmatprep.subr.bf16.mxu0 0
      %3231 = vmatpush2.bf16.msra.mxu0 0
      %3232 = vmatprep.subr.bf16.mxu0 0
      %3233 = vmatpush2.bf16.msra.mxu0 0
      %3234 = vmatprep.subr.bf16.mxu0 0
      %3235 = vmatpush2.bf16.msra.mxu0 0
      %3236 = vmatprep.subr.bf16.mxu0 0
      %3237 = vmatpush2.bf16.msra.mxu0 0
      %3238 = vmatprep.subr.bf16.mxu0 0
      %3239 = vmatpush2.bf16.msra.mxu0 0
      %3240 = vmatprep.subr.bf16.mxu0 0
      %3241 = vmatpush2.bf16.msra.mxu0 0
      %3242 = vmatprep.subr.bf16.mxu0 0
      %3243 = vmatpush2.bf16.msra.mxu0 0
      %3244 = vmatprep.mubr.bf16.mxu0 0
      %3245 = vmatmul.mubr.bf16.gmra.mxu0 %v3186
      %v3246 = vpop.f32.mrf.mxu0
      %v3247 = vadd.f32 0.0, %v3246
      %v3248 = vpop.f32.mrf.mxu0
      %v3249 = vadd.f32 0.0, %v3248
      %v3250 = vpop.f32.mrf.mxu0
      %v3251 = vpop.f32.mrf.mxu0
      %3252 = vdwg.mxu0
      %3253 = vmatprep.subr.bf16.mxu0 0
      %3254 = vmatpush1.bf16.msra.mxu0 0
      %3255 = vmatprep.subr.bf16.mxu0 0
      %3256 = vmatpush1.bf16.msra.mxu0 0
      %3257 = vmatprep.subr.bf16.mxu0 0
      %3258 = vmatpush1.bf16.msra.mxu0 0
      %3259 = vmatprep.subr.bf16.mxu0 0
      %3260 = vmatpush1.bf16.msra.mxu0 0
      %3261 = vmatprep.subr.bf16.mxu0 0
      %3262 = vmatpush1.bf16.msra.mxu0 0
      %3263 = vmatprep.subr.bf16.mxu0 0
      %3264 = vmatpush1.bf16.msra.mxu0 0
      %3265 = vmatprep.subr.bf16.mxu0 0
      %3266 = vmatpush1.bf16.msra.mxu0 0
      %3267 = vmatprep.subr.bf16.mxu0 %v3198
      %3268 = vmatpush1.bf16.msra.mxu0 %v3195
      %3269 = vmatprep.subr.bf16.mxu0 0
      %3270 = vmatpush2.bf16.msra.mxu0 0
      %3271 = vmatprep.subr.bf16.mxu0 0
      %3272 = vmatpush2.bf16.msra.mxu0 0
      %3273 = vmatprep.subr.bf16.mxu0 0
      %3274 = vmatpush2.bf16.msra.mxu0 0
      %3275 = vmatprep.subr.bf16.mxu0 0
      %3276 = vmatpush2.bf16.msra.mxu0 0
      %3277 = vmatprep.subr.bf16.mxu0 0
      %3278 = vmatpush2.bf16.msra.mxu0 0
      %3279 = vmatprep.subr.bf16.mxu0 0
      %3280 = vmatpush2.bf16.msra.mxu0 0
      %3281 = vmatprep.subr.bf16.mxu0 0
      %3282 = vmatpush2.bf16.msra.mxu0 0
      %3283 = vmatprep.subr.bf16.mxu0 0
      %3284 = vmatpush2.bf16.msra.mxu0 0
      %3285 = vmatprep.mubr.bf16.mxu0 0
      %3286 = vmatmul.mubr.bf16.gmra.mxu0 %v3186
      %v3287 = vpop.f32.mrf.mxu0
      %v3288 = vadd.f32 0.0, %v3287
      %v3289 = vpop.f32.mrf.mxu0
      %v3290 = vadd.f32 0.0, %v3289
      %v3291 = vpop.f32.mrf.mxu0
      %v3292 = vpop.f32.mrf.mxu0
      %3293 = vdwg.mxu0
      %3294 = vmatprep.subr.bf16.mxu0 0
      %3295 = vmatpush1.bf16.msra.mxu0 0
      %3296 = vmatprep.subr.bf16.mxu0 0
      %3297 = vmatpush1.bf16.msra.mxu0 0
      %3298 = vmatprep.subr.bf16.mxu0 0
      %3299 = vmatpush1.bf16.msra.mxu0 0
      %3300 = vmatprep.subr.bf16.mxu0 0
      %3301 = vmatpush1.bf16.msra.mxu0 0
      %3302 = vmatprep.subr.bf16.mxu0 0
      %3303 = vmatpush1.bf16.msra.mxu0 0
      %3304 = vmatprep.subr.bf16.mxu0 0
      %3305 = vmatpush1.bf16.msra.mxu0 0
      %3306 = vmatprep.subr.bf16.mxu0 0
      %3307 = vmatpush1.bf16.msra.mxu0 0
      %3308 = vmatprep.subr.bf16.mxu0 %v3204
      %3309 = vmatpush1.bf16.msra.mxu0 %v3201
      %3310 = vmatprep.subr.bf16.mxu0 0
      %3311 = vmatpush2.bf16.msra.mxu0 0
      %3312 = vmatprep.subr.bf16.mxu0 0
      %3313 = vmatpush2.bf16.msra.mxu0 0
      %3314 = vmatprep.subr.bf16.mxu0 0
      %3315 = vmatpush2.bf16.msra.mxu0 0
      %3316 = vmatprep.subr.bf16.mxu0 0
      %3317 = vmatpush2.bf16.msra.mxu0 0
      %3318 = vmatprep.subr.bf16.mxu0 0
      %3319 = vmatpush2.bf16.msra.mxu0 0
      %3320 = vmatprep.subr.bf16.mxu0 0
      %3321 = vmatpush2.bf16.msra.mxu0 0
      %3322 = vmatprep.subr.bf16.mxu0 0
      %3323 = vmatpush2.bf16.msra.mxu0 0
      %3324 = vmatprep.subr.bf16.mxu0 0
      %3325 = vmatpush2.bf16.msra.mxu0 0
      %3326 = vmatprep.mubr.bf16.mxu0 0
      %3327 = vmatmul.mubr.bf16.gmra.mxu0 %v3186
      %v3328 = vpop.f32.mrf.mxu0
      %v3329 = vadd.f32 0.0, %v3328
      %v3330 = vpop.f32.mrf.mxu0
      %v3331 = vadd.f32 0.0, %v3330
      %v3332 = vpop.f32.mrf.mxu0
      %v3333 = vpop.f32.mrf.mxu0
      %3334 = vdwg.mxu0
      %3335 = vmatprep.subr.bf16.mxu0 0
      %3336 = vmatpush1.bf16.msra.mxu0 0
      %3337 = vmatprep.subr.bf16.mxu0 0
      %3338 = vmatpush1.bf16.msra.mxu0 0
      %3339 = vmatprep.subr.bf16.mxu0 0
      %3340 = vmatpush1.bf16.msra.mxu0 0
      %3341 = vmatprep.subr.bf16.mxu0 0
      %3342 = vmatpush1.bf16.msra.mxu0 0
      %3343 = vmatprep.subr.bf16.mxu0 0
      %3344 = vmatpush1.bf16.msra.mxu0 0
      %3345 = vmatprep.subr.bf16.mxu0 0
      %3346 = vmatpush1.bf16.msra.mxu0 0
      %3347 = vmatprep.subr.bf16.mxu0 0
      %3348 = vmatpush1.bf16.msra.mxu0 0
      %3349 = vmatprep.subr.bf16.mxu0 %v3210
      %3350 = vmatpush1.bf16.msra.mxu0 %v3207
      %3351 = vmatprep.subr.bf16.mxu0 0
      %3352 = vmatpush2.bf16.msra.mxu0 0
      %3353 = vmatprep.subr.bf16.mxu0 0
      %3354 = vmatpush2.bf16.msra.mxu0 0
      %3355 = vmatprep.subr.bf16.mxu0 0
      %3356 = vmatpush2.bf16.msra.mxu0 0
      %3357 = vmatprep.subr.bf16.mxu0 0
      %3358 = vmatpush2.bf16.msra.mxu0 0
      %3359 = vmatprep.subr.bf16.mxu0 0
      %3360 = vmatpush2.bf16.msra.mxu0 0
      %3361 = vmatprep.subr.bf16.mxu0 0
      %3362 = vmatpush2.bf16.msra.mxu0 0
      %3363 = vmatprep.subr.bf16.mxu0 0
      %3364 = vmatpush2.bf16.msra.mxu0 0
      %3365 = vmatprep.subr.bf16.mxu0 0
      %3366 = vmatpush2.bf16.msra.mxu0 0
      %3367 = vmatprep.mubr.bf16.mxu0 0
      %3368 = vmatmul.mubr.bf16.gmra.mxu0 %v3186
      %v3369 = vpop.f32.mrf.mxu0
      %v3370 = vadd.f32 0.0, %v3369
      %v3371 = vpop.f32.mrf.mxu0
      %v3372 = vadd.f32 0.0, %v3371
      %v3373 = vpop.f32.mrf.mxu0
      %v3374 = vpop.f32.mrf.mxu0
      %3375 = vdwg.mxu0
      %v3376 = vadd.f32 %v3126, %v3247
      %v3377 = vadd.f32 %v3127, %v3249
      %v3378 = vadd.f32 %v3128, %v3288
      %v3379 = vadd.f32 %v3129, %v3290
      %v3380 = vadd.f32 %v3130, %v3329
      %v3381 = vadd.f32 %v3131, %v3331
      %v3382 = vadd.f32 %v3132, %v3370
      %v3383 = vadd.f32 %v3133, %v3372
      %3384 = vrot.lane.b32.xlu0 %v1564, 96
      %v3385 = vpop.permute.xlu0 %3384
      %3386 = vrot.lane.b32.xlu0 %v1566, 96
      %v3387 = vpop.permute.xlu0 %3386
      %3388 = vrot.lane.b32.xlu0 %v1605, 96
      %v3389 = vpop.permute.xlu0 %3388
      %3390 = vrot.lane.b32.xlu0 %v1607, 96
      %v3391 = vpop.permute.xlu0 %3390
      %3392 = vrot.lane.b32.xlu0 %v1646, 96
      %v3393 = vpop.permute.xlu0 %3392
      %3394 = vrot.lane.b32.xlu0 %v1648, 96
      %v3395 = vpop.permute.xlu0 %3394
      %3396 = vrot.lane.b32.xlu0 %v1687, 96
      %v3397 = vpop.permute.xlu0 %3396
      %3398 = vrot.lane.b32.xlu0 %v1689, 96
      %v3399 = vpop.permute.xlu0 %3398
      %vm3400 = vcmp.lt.s32.totalorder %v412, 96
      %v3401 = vsel %vm3400, %v3397, %v3399
      %v3402 = vsel %vm3400, %v3395, %v3397
      %v3403 = vsel %vm3400, %v3393, %v3395
      %v3404 = vsel %vm3400, %v3391, %v3393
      %v3405 = vsel %vm3400, %v3389, %v3391
      %v3406 = vsel %vm3400, %v3387, %v3389
      %v3407 = vsel %vm3400, %v3385, %v3387
      %v3408 = vsel %vm3400, %v3399, %v3385
      %v3409 = vld [vmem:[%s9 + $0x1c0] sm:$0xff]
      %v3410 = vld [vmem:[%s9 + $0x1c8] sm:$0xff]
      %v3411 = vld [vmem:[%s9 + $0x1d0] sm:$0xff]
      %v3412 = vld [vmem:[%s9 + $0x1d8] sm:$0xff]
      %v3413 = vld [vmem:[%s9 + $0x1e0] sm:$0xff]
      %v3414 = vld [vmem:[%s9 + $0x1e8] sm:$0xff]
      %v3415 = vld [vmem:[%s9 + $0x1f0] sm:$0xff]
      %v3416 = vld [vmem:[%s9 + $0x1f8] sm:$0xff]
      %v3417 = vmul.f32 %v3407, %v3409
      %v3418 = vmul.f32 %v3406, %v3410
      %v3419 = vmul.f32 %v3405, %v3411
      %v3420 = vmul.f32 %v3404, %v3412
      %v3421 = vmul.f32 %v3403, %v3413
      %v3422 = vmul.f32 %v3402, %v3414
      %v3423 = vmul.f32 %v3401, %v3415
      %v3424 = vmul.f32 %v3408, %v3416
      %s3425 = scalar_lea.vmem %s4, 28
      %v3426 = vld [vmem:[%s3425] sm:$0xf]
      %v3427 = vpack.c.bf16 %v3417, %v3417
      %v3428 = vpack.c.bf16 %v3418, %v3418
      %v3429 = vpack.c.bf16 %v3419, %v3419
      %v3430 = vpack.c.bf16 %v3420, %v3420
      %v3431 = vpack.c.bf16 %v3421, %v3421
      %v3432 = vpack.c.bf16 %v3422, %v3422
      %v3433 = vpack.c.bf16 %v3423, %v3423
      %v3434 = vpack.c.bf16 %v3424, %v3424
      %v3436 = vsel %vm1794, %v3426, 0
      %v3439 = vsel %vm516, %v3427, 0
      %v3442 = vsel %vm516, %v3428, 0
      %v3445 = vsel %vm516, %v3429, 0
      %v3448 = vsel %vm516, %v3430, 0
      %v3451 = vsel %vm516, %v3431, 0
      %v3454 = vsel %vm516, %v3432, 0
      %v3457 = vsel %vm516, %v3433, 0
      %v3460 = vsel %vm516, %v3434, 0
      %3462 = vmatprep.subr.bf16.mxu0 0
      %3463 = vmatpush1.bf16.msra.mxu0 0
      %3464 = vmatprep.subr.bf16.mxu0 0
      %3465 = vmatpush1.bf16.msra.mxu0 0
      %3466 = vmatprep.subr.bf16.mxu0 0
      %3467 = vmatpush1.bf16.msra.mxu0 0
      %3468 = vmatprep.subr.bf16.mxu0 0
      %3469 = vmatpush1.bf16.msra.mxu0 0
      %3470 = vmatprep.subr.bf16.mxu0 0
      %3471 = vmatpush1.bf16.msra.mxu0 0
      %3472 = vmatprep.subr.bf16.mxu0 0
      %3473 = vmatpush1.bf16.msra.mxu0 0
      %3474 = vmatprep.subr.bf16.mxu0 0
      %3475 = vmatpush1.bf16.msra.mxu0 0
      %3476 = vmatprep.subr.bf16.mxu0 %v3442
      %3477 = vmatpush1.bf16.msra.mxu0 %v3439
      %3478 = vmatprep.subr.bf16.mxu0 0
      %3479 = vmatpush2.bf16.msra.mxu0 0
      %3480 = vmatprep.subr.bf16.mxu0 0
      %3481 = vmatpush2.bf16.msra.mxu0 0
      %3482 = vmatprep.subr.bf16.mxu0 0
      %3483 = vmatpush2.bf16.msra.mxu0 0
      %3484 = vmatprep.subr.bf16.mxu0 0
      %3485 = vmatpush2.bf16.msra.mxu0 0
      %3486 = vmatprep.subr.bf16.mxu0 0
      %3487 = vmatpush2.bf16.msra.mxu0 0
      %3488 = vmatprep.subr.bf16.mxu0 0
      %3489 = vmatpush2.bf16.msra.mxu0 0
      %3490 = vmatprep.subr.bf16.mxu0 0
      %3491 = vmatpush2.bf16.msra.mxu0 0
      %3492 = vmatprep.subr.bf16.mxu0 0
      %3493 = vmatpush2.bf16.msra.mxu0 0
      %3494 = vmatprep.mubr.bf16.mxu0 0
      %3495 = vmatmul.mubr.bf16.gmra.mxu0 %v3436
      %v3496 = vpop.f32.mrf.mxu0
      %v3497 = vadd.f32 0.0, %v3496
      %v3498 = vpop.f32.mrf.mxu0
      %v3499 = vadd.f32 0.0, %v3498
      %v3500 = vpop.f32.mrf.mxu0
      %v3501 = vpop.f32.mrf.mxu0
      %3502 = vdwg.mxu0
      %3503 = vmatprep.subr.bf16.mxu0 0
      %3504 = vmatpush1.bf16.msra.mxu0 0
      %3505 = vmatprep.subr.bf16.mxu0 0
      %3506 = vmatpush1.bf16.msra.mxu0 0
      %3507 = vmatprep.subr.bf16.mxu0 0
      %3508 = vmatpush1.bf16.msra.mxu0 0
      %3509 = vmatprep.subr.bf16.mxu0 0
      %3510 = vmatpush1.bf16.msra.mxu0 0
      %3511 = vmatprep.subr.bf16.mxu0 0
      %3512 = vmatpush1.bf16.msra.mxu0 0
      %3513 = vmatprep.subr.bf16.mxu0 0
      %3514 = vmatpush1.bf16.msra.mxu0 0
      %3515 = vmatprep.subr.bf16.mxu0 0
      %3516 = vmatpush1.bf16.msra.mxu0 0
      %3517 = vmatprep.subr.bf16.mxu0 %v3448
      %3518 = vmatpush1.bf16.msra.mxu0 %v3445
      %3519 = vmatprep.subr.bf16.mxu0 0
      %3520 = vmatpush2.bf16.msra.mxu0 0
      %3521 = vmatprep.subr.bf16.mxu0 0
      %3522 = vmatpush2.bf16.msra.mxu0 0
      %3523 = vmatprep.subr.bf16.mxu0 0
      %3524 = vmatpush2.bf16.msra.mxu0 0
      %3525 = vmatprep.subr.bf16.mxu0 0
      %3526 = vmatpush2.bf16.msra.mxu0 0
      %3527 = vmatprep.subr.bf16.mxu0 0
      %3528 = vmatpush2.bf16.msra.mxu0 0
      %3529 = vmatprep.subr.bf16.mxu0 0
      %3530 = vmatpush2.bf16.msra.mxu0 0
      %3531 = vmatprep.subr.bf16.mxu0 0
      %3532 = vmatpush2.bf16.msra.mxu0 0
      %3533 = vmatprep.subr.bf16.mxu0 0
      %3534 = vmatpush2.bf16.msra.mxu0 0
      %3535 = vmatprep.mubr.bf16.mxu0 0
      %3536 = vmatmul.mubr.bf16.gmra.mxu0 %v3436
      %v3537 = vpop.f32.mrf.mxu0
      %v3538 = vadd.f32 0.0, %v3537
      %v3539 = vpop.f32.mrf.mxu0
      %v3540 = vadd.f32 0.0, %v3539
      %v3541 = vpop.f32.mrf.mxu0
      %v3542 = vpop.f32.mrf.mxu0
      %3543 = vdwg.mxu0
      %3544 = vmatprep.subr.bf16.mxu0 0
      %3545 = vmatpush1.bf16.msra.mxu0 0
      %3546 = vmatprep.subr.bf16.mxu0 0
      %3547 = vmatpush1.bf16.msra.mxu0 0
      %3548 = vmatprep.subr.bf16.mxu0 0
      %3549 = vmatpush1.bf16.msra.mxu0 0
      %3550 = vmatprep.subr.bf16.mxu0 0
      %3551 = vmatpush1.bf16.msra.mxu0 0
      %3552 = vmatprep.subr.bf16.mxu0 0
      %3553 = vmatpush1.bf16.msra.mxu0 0
      %3554 = vmatprep.subr.bf16.mxu0 0
      %3555 = vmatpush1.bf16.msra.mxu0 0
      %3556 = vmatprep.subr.bf16.mxu0 0
      %3557 = vmatpush1.bf16.msra.mxu0 0
      %3558 = vmatprep.subr.bf16.mxu0 %v3454
      %3559 = vmatpush1.bf16.msra.mxu0 %v3451
      %3560 = vmatprep.subr.bf16.mxu0 0
      %3561 = vmatpush2.bf16.msra.mxu0 0
      %3562 = vmatprep.subr.bf16.mxu0 0
      %3563 = vmatpush2.bf16.msra.mxu0 0
      %3564 = vmatprep.subr.bf16.mxu0 0
      %3565 = vmatpush2.bf16.msra.mxu0 0
      %3566 = vmatprep.subr.bf16.mxu0 0
      %3567 = vmatpush2.bf16.msra.mxu0 0
      %3568 = vmatprep.subr.bf16.mxu0 0
      %3569 = vmatpush2.bf16.msra.mxu0 0
      %3570 = vmatprep.subr.bf16.mxu0 0
      %3571 = vmatpush2.bf16.msra.mxu0 0
      %3572 = vmatprep.subr.bf16.mxu0 0
      %3573 = vmatpush2.bf16.msra.mxu0 0
      %3574 = vmatprep.subr.bf16.mxu0 0
      %3575 = vmatpush2.bf16.msra.mxu0 0
      %3576 = vmatprep.mubr.bf16.mxu0 0
      %3577 = vmatmul.mubr.bf16.gmra.mxu0 %v3436
      %v3578 = vpop.f32.mrf.mxu0
      %v3579 = vadd.f32 0.0, %v3578
      %v3580 = vpop.f32.mrf.mxu0
      %v3581 = vadd.f32 0.0, %v3580
      %v3582 = vpop.f32.mrf.mxu0
      %v3583 = vpop.f32.mrf.mxu0
      %3584 = vdwg.mxu0
      %3585 = vmatprep.subr.bf16.mxu0 0
      %3586 = vmatpush1.bf16.msra.mxu0 0
      %3587 = vmatprep.subr.bf16.mxu0 0
      %3588 = vmatpush1.bf16.msra.mxu0 0
      %3589 = vmatprep.subr.bf16.mxu0 0
      %3590 = vmatpush1.bf16.msra.mxu0 0
      %3591 = vmatprep.subr.bf16.mxu0 0
      %3592 = vmatpush1.bf16.msra.mxu0 0
      %3593 = vmatprep.subr.bf16.mxu0 0
      %3594 = vmatpush1.bf16.msra.mxu0 0
      %3595 = vmatprep.subr.bf16.mxu0 0
      %3596 = vmatpush1.bf16.msra.mxu0 0
      %3597 = vmatprep.subr.bf16.mxu0 0
      %3598 = vmatpush1.bf16.msra.mxu0 0
      %3599 = vmatprep.subr.bf16.mxu0 %v3460
      %3600 = vmatpush1.bf16.msra.mxu0 %v3457
      %3601 = vmatprep.subr.bf16.mxu0 0
      %3602 = vmatpush2.bf16.msra.mxu0 0
      %3603 = vmatprep.subr.bf16.mxu0 0
      %3604 = vmatpush2.bf16.msra.mxu0 0
      %3605 = vmatprep.subr.bf16.mxu0 0
      %3606 = vmatpush2.bf16.msra.mxu0 0
      %3607 = vmatprep.subr.bf16.mxu0 0
      %3608 = vmatpush2.bf16.msra.mxu0 0
      %3609 = vmatprep.subr.bf16.mxu0 0
      %3610 = vmatpush2.bf16.msra.mxu0 0
      %3611 = vmatprep.subr.bf16.mxu0 0
      %3612 = vmatpush2.bf16.msra.mxu0 0
      %3613 = vmatprep.subr.bf16.mxu0 0
      %3614 = vmatpush2.bf16.msra.mxu0 0
      %3615 = vmatprep.subr.bf16.mxu0 0
      %3616 = vmatpush2.bf16.msra.mxu0 0
      %3617 = vmatprep.mubr.bf16.mxu0 0
      %3618 = vmatmul.mubr.bf16.gmra.mxu0 %v3436
      %v3619 = vpop.f32.mrf.mxu0
      %v3620 = vadd.f32 0.0, %v3619
      %v3621 = vpop.f32.mrf.mxu0
      %v3622 = vadd.f32 0.0, %v3621
      %v3623 = vpop.f32.mrf.mxu0
      %v3624 = vpop.f32.mrf.mxu0
      %3625 = vdwg.mxu0
      %v3626 = vadd.f32 %v3376, %v3497
      %v3627 = vadd.f32 %v3377, %v3499
      %v3628 = vadd.f32 %v3378, %v3538
      %v3629 = vadd.f32 %v3379, %v3540
      %v3630 = vadd.f32 %v3380, %v3579
      %v3631 = vadd.f32 %v3381, %v3581
      %v3632 = vadd.f32 %v3382, %v3620
      %v3633 = vadd.f32 %v3383, %v3622
      %3634 = vrot.lane.b32.xlu0 %v1564, 95
      %v3635 = vpop.permute.xlu0 %3634
      %3636 = vrot.lane.b32.xlu0 %v1566, 95
      %v3637 = vpop.permute.xlu0 %3636
      %3638 = vrot.lane.b32.xlu0 %v1605, 95
      %v3639 = vpop.permute.xlu0 %3638
      %3640 = vrot.lane.b32.xlu0 %v1607, 95
      %v3641 = vpop.permute.xlu0 %3640
      %3642 = vrot.lane.b32.xlu0 %v1646, 95
      %v3643 = vpop.permute.xlu0 %3642
      %3644 = vrot.lane.b32.xlu0 %v1648, 95
      %v3645 = vpop.permute.xlu0 %3644
      %3646 = vrot.lane.b32.xlu0 %v1687, 95
      %v3647 = vpop.permute.xlu0 %3646
      %3648 = vrot.lane.b32.xlu0 %v1689, 95
      %v3649 = vpop.permute.xlu0 %3648
      %vm3650 = vcmp.lt.s32.totalorder %v412, 95
      %v3651 = vsel %vm3650, %v3647, %v3649
      %v3652 = vsel %vm3650, %v3645, %v3647
      %v3653 = vsel %vm3650, %v3643, %v3645
      %v3654 = vsel %vm3650, %v3641, %v3643
      %v3655 = vsel %vm3650, %v3639, %v3641
      %v3656 = vsel %vm3650, %v3637, %v3639
      %v3657 = vsel %vm3650, %v3635, %v3637
      %v3658 = vsel %vm3650, %v3649, %v3635
      %v3659 = vld [vmem:[%s9 + $0x200] sm:$0xff]
      %v3660 = vld [vmem:[%s9 + $0x208] sm:$0xff]
      %v3661 = vld [vmem:[%s9 + $0x210] sm:$0xff]
      %v3662 = vld [vmem:[%s9 + $0x218] sm:$0xff]
      %v3663 = vld [vmem:[%s9 + $0x220] sm:$0xff]
      %v3664 = vld [vmem:[%s9 + $0x228] sm:$0xff]
      %v3665 = vld [vmem:[%s9 + $0x230] sm:$0xff]
      %v3666 = vld [vmem:[%s9 + $0x238] sm:$0xff]
      %v3667 = vmul.f32 %v3657, %v3659
      %v3668 = vmul.f32 %v3656, %v3660
      %v3669 = vmul.f32 %v3655, %v3661
      %v3670 = vmul.f32 %v3654, %v3662
      %v3671 = vmul.f32 %v3653, %v3663
      %v3672 = vmul.f32 %v3652, %v3664
      %v3673 = vmul.f32 %v3651, %v3665
      %v3674 = vmul.f32 %v3658, %v3666
      %s3675 = scalar_lea.vmem %s4, 32
      %v3676 = vld [vmem:[%s3675] sm:$0xf]
      %v3677 = vpack.c.bf16 %v3667, %v3667
      %v3678 = vpack.c.bf16 %v3668, %v3668
      %v3679 = vpack.c.bf16 %v3669, %v3669
      %v3680 = vpack.c.bf16 %v3670, %v3670
      %v3681 = vpack.c.bf16 %v3671, %v3671
      %v3682 = vpack.c.bf16 %v3672, %v3672
      %v3683 = vpack.c.bf16 %v3673, %v3673
      %v3684 = vpack.c.bf16 %v3674, %v3674
      %v3686 = vsel %vm1794, %v3676, 0
      %v3689 = vsel %vm516, %v3677, 0
      %v3692 = vsel %vm516, %v3678, 0
      %v3695 = vsel %vm516, %v3679, 0
      %v3698 = vsel %vm516, %v3680, 0
      %v3701 = vsel %vm516, %v3681, 0
      %v3704 = vsel %vm516, %v3682, 0
      %v3707 = vsel %vm516, %v3683, 0
      %v3710 = vsel %vm516, %v3684, 0
      %3712 = vmatprep.subr.bf16.mxu0 0
      %3713 = vmatpush1.bf16.msra.mxu0 0
      %3714 = vmatprep.subr.bf16.mxu0 0
      %3715 = vmatpush1.bf16.msra.mxu0 0
      %3716 = vmatprep.subr.bf16.mxu0 0
      %3717 = vmatpush1.bf16.msra.mxu0 0
      %3718 = vmatprep.subr.bf16.mxu0 0
      %3719 = vmatpush1.bf16.msra.mxu0 0
      %3720 = vmatprep.subr.bf16.mxu0 0
      %3721 = vmatpush1.bf16.msra.mxu0 0
      %3722 = vmatprep.subr.bf16.mxu0 0
      %3723 = vmatpush1.bf16.msra.mxu0 0
      %3724 = vmatprep.subr.bf16.mxu0 0
      %3725 = vmatpush1.bf16.msra.mxu0 0
      %3726 = vmatprep.subr.bf16.mxu0 %v3692
      %3727 = vmatpush1.bf16.msra.mxu0 %v3689
      %3728 = vmatprep.subr.bf16.mxu0 0
      %3729 = vmatpush2.bf16.msra.mxu0 0
      %3730 = vmatprep.subr.bf16.mxu0 0
      %3731 = vmatpush2.bf16.msra.mxu0 0
      %3732 = vmatprep.subr.bf16.mxu0 0
      %3733 = vmatpush2.bf16.msra.mxu0 0
      %3734 = vmatprep.subr.bf16.mxu0 0
      %3735 = vmatpush2.bf16.msra.mxu0 0
      %3736 = vmatprep.subr.bf16.mxu0 0
      %3737 = vmatpush2.bf16.msra.mxu0 0
      %3738 = vmatprep.subr.bf16.mxu0 0
      %3739 = vmatpush2.bf16.msra.mxu0 0
      %3740 = vmatprep.subr.bf16.mxu0 0
      %3741 = vmatpush2.bf16.msra.mxu0 0
      %3742 = vmatprep.subr.bf16.mxu0 0
      %3743 = vmatpush2.bf16.msra.mxu0 0
      %3744 = vmatprep.mubr.bf16.mxu0 0
      %3745 = vmatmul.mubr.bf16.gmra.mxu0 %v3686
      %v3746 = vpop.f32.mrf.mxu0
      %v3747 = vadd.f32 0.0, %v3746
      %v3748 = vpop.f32.mrf.mxu0
      %v3749 = vadd.f32 0.0, %v3748
      %v3750 = vpop.f32.mrf.mxu0
      %v3751 = vpop.f32.mrf.mxu0
      %3752 = vdwg.mxu0
      %3753 = vmatprep.subr.bf16.mxu0 0
      %3754 = vmatpush1.bf16.msra.mxu0 0
      %3755 = vmatprep.subr.bf16.mxu0 0
      %3756 = vmatpush1.bf16.msra.mxu0 0
      %3757 = vmatprep.subr.bf16.mxu0 0
      %3758 = vmatpush1.bf16.msra.mxu0 0
      %3759 = vmatprep.subr.bf16.mxu0 0
      %3760 = vmatpush1.bf16.msra.mxu0 0
      %3761 = vmatprep.subr.bf16.mxu0 0
      %3762 = vmatpush1.bf16.msra.mxu0 0
      %3763 = vmatprep.subr.bf16.mxu0 0
      %3764 = vmatpush1.bf16.msra.mxu0 0
      %3765 = vmatprep.subr.bf16.mxu0 0
      %3766 = vmatpush1.bf16.msra.mxu0 0
      %3767 = vmatprep.subr.bf16.mxu0 %v3698
      %3768 = vmatpush1.bf16.msra.mxu0 %v3695
      %3769 = vmatprep.subr.bf16.mxu0 0
      %3770 = vmatpush2.bf16.msra.mxu0 0
      %3771 = vmatprep.subr.bf16.mxu0 0
      %3772 = vmatpush2.bf16.msra.mxu0 0
      %3773 = vmatprep.subr.bf16.mxu0 0
      %3774 = vmatpush2.bf16.msra.mxu0 0
      %3775 = vmatprep.subr.bf16.mxu0 0
      %3776 = vmatpush2.bf16.msra.mxu0 0
      %3777 = vmatprep.subr.bf16.mxu0 0
      %3778 = vmatpush2.bf16.msra.mxu0 0
      %3779 = vmatprep.subr.bf16.mxu0 0
      %3780 = vmatpush2.bf16.msra.mxu0 0
      %3781 = vmatprep.subr.bf16.mxu0 0
      %3782 = vmatpush2.bf16.msra.mxu0 0
      %3783 = vmatprep.subr.bf16.mxu0 0
      %3784 = vmatpush2.bf16.msra.mxu0 0
      %3785 = vmatprep.mubr.bf16.mxu0 0
      %3786 = vmatmul.mubr.bf16.gmra.mxu0 %v3686
      %v3787 = vpop.f32.mrf.mxu0
      %v3788 = vadd.f32 0.0, %v3787
      %v3789 = vpop.f32.mrf.mxu0
      %v3790 = vadd.f32 0.0, %v3789
      %v3791 = vpop.f32.mrf.mxu0
      %v3792 = vpop.f32.mrf.mxu0
      %3793 = vdwg.mxu0
      %3794 = vmatprep.subr.bf16.mxu0 0
      %3795 = vmatpush1.bf16.msra.mxu0 0
      %3796 = vmatprep.subr.bf16.mxu0 0
      %3797 = vmatpush1.bf16.msra.mxu0 0
      %3798 = vmatprep.subr.bf16.mxu0 0
      %3799 = vmatpush1.bf16.msra.mxu0 0
      %3800 = vmatprep.subr.bf16.mxu0 0
      %3801 = vmatpush1.bf16.msra.mxu0 0
      %3802 = vmatprep.subr.bf16.mxu0 0
      %3803 = vmatpush1.bf16.msra.mxu0 0
      %3804 = vmatprep.subr.bf16.mxu0 0
      %3805 = vmatpush1.bf16.msra.mxu0 0
      %3806 = vmatprep.subr.bf16.mxu0 0
      %3807 = vmatpush1.bf16.msra.mxu0 0
      %3808 = vmatprep.subr.bf16.mxu0 %v3704
      %3809 = vmatpush1.bf16.msra.mxu0 %v3701
      %3810 = vmatprep.subr.bf16.mxu0 0
      %3811 = vmatpush2.bf16.msra.mxu0 0
      %3812 = vmatprep.subr.bf16.mxu0 0
      %3813 = vmatpush2.bf16.msra.mxu0 0
      %3814 = vmatprep.subr.bf16.mxu0 0
      %3815 = vmatpush2.bf16.msra.mxu0 0
      %3816 = vmatprep.subr.bf16.mxu0 0
      %3817 = vmatpush2.bf16.msra.mxu0 0
      %3818 = vmatprep.subr.bf16.mxu0 0
      %3819 = vmatpush2.bf16.msra.mxu0 0
      %3820 = vmatprep.subr.bf16.mxu0 0
      %3821 = vmatpush2.bf16.msra.mxu0 0
      %3822 = vmatprep.subr.bf16.mxu0 0
      %3823 = vmatpush2.bf16.msra.mxu0 0
      %3824 = vmatprep.subr.bf16.mxu0 0
      %3825 = vmatpush2.bf16.msra.mxu0 0
      %3826 = vmatprep.mubr.bf16.mxu0 0
      %3827 = vmatmul.mubr.bf16.gmra.mxu0 %v3686
      %v3828 = vpop.f32.mrf.mxu0
      %v3829 = vadd.f32 0.0, %v3828
      %v3830 = vpop.f32.mrf.mxu0
      %v3831 = vadd.f32 0.0, %v3830
      %v3832 = vpop.f32.mrf.mxu0
      %v3833 = vpop.f32.mrf.mxu0
      %3834 = vdwg.mxu0
      %3835 = vmatprep.subr.bf16.mxu0 0
      %3836 = vmatpush1.bf16.msra.mxu0 0
      %3837 = vmatprep.subr.bf16.mxu0 0
      %3838 = vmatpush1.bf16.msra.mxu0 0
      %3839 = vmatprep.subr.bf16.mxu0 0
      %3840 = vmatpush1.bf16.msra.mxu0 0
      %3841 = vmatprep.subr.bf16.mxu0 0
      %3842 = vmatpush1.bf16.msra.mxu0 0
      %3843 = vmatprep.subr.bf16.mxu0 0
      %3844 = vmatpush1.bf16.msra.mxu0 0
      %3845 = vmatprep.subr.bf16.mxu0 0
      %3846 = vmatpush1.bf16.msra.mxu0 0
      %3847 = vmatprep.subr.bf16.mxu0 0
      %3848 = vmatpush1.bf16.msra.mxu0 0
      %3849 = vmatprep.subr.bf16.mxu0 %v3710
      %3850 = vmatpush1.bf16.msra.mxu0 %v3707
      %3851 = vmatprep.subr.bf16.mxu0 0
      %3852 = vmatpush2.bf16.msra.mxu0 0
      %3853 = vmatprep.subr.bf16.mxu0 0
      %3854 = vmatpush2.bf16.msra.mxu0 0
      %3855 = vmatprep.subr.bf16.mxu0 0
      %3856 = vmatpush2.bf16.msra.mxu0 0
      %3857 = vmatprep.subr.bf16.mxu0 0
      %3858 = vmatpush2.bf16.msra.mxu0 0
      %3859 = vmatprep.subr.bf16.mxu0 0
      %3860 = vmatpush2.bf16.msra.mxu0 0
      %3861 = vmatprep.subr.bf16.mxu0 0
      %3862 = vmatpush2.bf16.msra.mxu0 0
      %3863 = vmatprep.subr.bf16.mxu0 0
      %3864 = vmatpush2.bf16.msra.mxu0 0
      %3865 = vmatprep.subr.bf16.mxu0 0
      %3866 = vmatpush2.bf16.msra.mxu0 0
      %3867 = vmatprep.mubr.bf16.mxu0 0
      %3868 = vmatmul.mubr.bf16.gmra.mxu0 %v3686
      %v3869 = vpop.f32.mrf.mxu0
      %v3870 = vadd.f32 0.0, %v3869
      %v3871 = vpop.f32.mrf.mxu0
      %v3872 = vadd.f32 0.0, %v3871
      %v3873 = vpop.f32.mrf.mxu0
      %v3874 = vpop.f32.mrf.mxu0
      %3875 = vdwg.mxu0
      %v3876 = vadd.f32 %v3626, %v3747
      %v3877 = vadd.f32 %v3627, %v3749
      %v3878 = vadd.f32 %v3628, %v3788
      %v3879 = vadd.f32 %v3629, %v3790
      %v3880 = vadd.f32 %v3630, %v3829
      %v3881 = vadd.f32 %v3631, %v3831
      %v3882 = vadd.f32 %v3632, %v3870
      %v3883 = vadd.f32 %v3633, %v3872
      %v3884 = vld [vmem:[%s5] sm:$0xff]
      %3886 = vset.pattern.permute.xlu0 0
      %3887 = vperm.xlu0 %3886, %v3884
      %v3888 = vpop.permute.xlu0 %3887
      %v3890 = vadd.f32 %v3876, %v3888
      %v3891 = vadd.f32 %v3877, %v3888
      %v3892 = vadd.f32 %v3878, %v3888
      %v3893 = vadd.f32 %v3879, %v3888
      %v3894 = vadd.f32 %v3880, %v3888
      %v3895 = vadd.f32 %v3881, %v3888
      %v3896 = vadd.f32 %v3882, %v3888
      %v3897 = vadd.f32 %v3883, %v3888
      %v3906 = vrot.slane %v3890, 4
      %v3907 = vrot.slane %v3891, 4
      %v3908 = vrot.slane %v3892, 4
      %v3909 = vrot.slane %v3893, 4
      %v3910 = vrot.slane %v3894, 4
      %v3911 = vrot.slane %v3895, 4
      %v3912 = vrot.slane %v3896, 4
      %v3913 = vrot.slane %v3897, 4
      %3922 = vst [vmem:[%s379] sm:$0xf0] %v3906
      %3923 = vst [vmem:[%s379 + $0x8] sm:$0xf0] %v3907
      %3924 = vst [vmem:[%s379 + $0x10] sm:$0xf0] %v3908
      %3925 = vst [vmem:[%s379 + $0x18] sm:$0xf0] %v3909
      %3926 = vst [vmem:[%s379 + $0x20] sm:$0xf0] %v3910
      %3927 = vst [vmem:[%s379 + $0x28] sm:$0xf0] %v3911
      %3928 = vst [vmem:[%s379 + $0x30] sm:$0xf0] %v3912
      %3929 = vst [vmem:[%s379 + $0x38] sm:$0xf0] %v3913
      %3930 = vst [vmem:[%s379 + $0x40] sm:$0xf] %v3906
      %3931 = vst [vmem:[%s379 + $0x48] sm:$0xf] %v3907
      %3932 = vst [vmem:[%s379 + $0x50] sm:$0xf] %v3908
      %3933 = vst [vmem:[%s379 + $0x58] sm:$0xf] %v3909
      %3934 = vst [vmem:[%s379 + $0x60] sm:$0xf] %v3910
      %3935 = vst [vmem:[%s379 + $0x68] sm:$0xf] %v3911
      %3936 = vst [vmem:[%s379 + $0x70] sm:$0xf] %v3912
      %3937 = vst [vmem:[%s379 + $0x78] sm:$0xf] %v3913
      %p3938 = scmp.lt.s32.totalorder %s21, 1
      %s3939 = scalar_select %p3938, %s21, 1
      %s3940 = smul.addr %s3939, 16
      %s3941 = smul.addr %s3940, 8
      %s3942 = scalar_lea.vmem %s10, %s3941
      // Predicated region
      $region61: #{up_forward.1} parent=59 // pred_check
        %p3943 = pneg %p259
      $region62: #{up_forward.1} parent=59 // pred_check_branch
        %3945 = sbr.rel (%p3943) target = $region64
      $region63: #{up_forward.1} parent=59 // pred_region
        _
      $region64: #{up_forward.1} parent=59 // pred_fallthru
        _
    $region60: #{up_forward.1} parent=5 // pred_fallthru
      _
    %p3946 = scmp.le.s32.totalorder 2, %s16
    // Predicated region
    $region65: #{up_forward.1} parent=5 // pred_check
      %p3947 = pneg %p3946
    $region66: #{up_forward.1} parent=5 // pred_check_branch
      %3949 = sbr.rel (%p3947) target = $region68
    $region67: #{up_forward.1} parent=5 // pred_region
      %s3950 = ssub.s32 %s16, 2
      // Predicated region
      $region69: #{up_forward.1} parent=67 // pred_check
        %p3951 = pneg %p265
      $region70: #{up_forward.1} parent=67 // pred_check_branch
        %3953 = sbr.rel (%p3951) target = $region72
      $region71: #{up_forward.1} parent=67 // pred_region
        %p3954 = scmp.lt.s32.totalorder %s22, 1
        %s3955 = scalar_select %p3954, %s22, 1
        %s3956 = smul.addr %s3955, 16
        %s3957 = smul.addr %s3956, 8
        %s3958 = scalar_lea.vmem %s10, %s3957
      $region72: #{up_forward.1} parent=67 // pred_fallthru
        _
    $region68: #{up_forward.1} parent=5 // pred_fallthru
      _
  $region6: #{up_forward.1} parent=0 // loop_footer
    %s20 = sadd.s32 1, %s16
  $region7: #{up_forward.1} parent=0 // loop_footer_branch
    %15 = sbr.rel target = $region3
  $region8: #{up_forward.1} parent=0 // loop_exit
    _

</llo_original>
